<compile_context>
chip_gen: v6e
topology: v6e:2x2x1
jax: 0.10.0
libtpu: 0.0.40
codegen_flags: <defaults>
</compile_context>

<pallas_src>
import jax
import jax.numpy as jnp
import numpy as np
from jax.experimental import pallas as pl
from jax.experimental.pallas import tpu as pltpu

BN_EPS = 1e-5

# Interior of the conv1-activation scratch starts at this W-column, so the big
# (H, W, Cp) bf16 interior store is aligned to the bf16 (16, 128) tile.
# Column Y1_LEFT-1 is the left zero halo, column Y1_LEFT+W the right zero halo.
Y1_LEFT = 16


def _round_up(x, m):
    return (x + m - 1) // m * m


def conv_block_kernel(xp_ref, w1_ref, s1_ref, b1_ref, w2_ref, s2_ref, b2_ref,
                      out_ref, y1s_ref):
    """One batch image per grid step (grid=(N,), 'parallel').

    xp_ref : (1, H+2, W+2, Cin)       bf16  zero-padded input (halo == padding=1)
    w1_ref : (9*Cin, Cp)              bf16  conv1 weight, taps packed along K
    w2_ref : (9*Cp,  Cp)              bf16  conv2 weight, taps packed along K
    s*/b*  : (1, Cp)                  f32   conv-bias + BN(eval) folded affine
    out_ref: (1, H, W, Cp)            bf16  lane-dense (Cp multiple of 128) output
    y1s_ref: (H+2, W+2*Y1_LEFT, Cp)   bf16  scratch: conv1 activation + zero halo
    """
    H, W, Cp = out_ref.shape[1], out_ref.shape[2], out_ref.shape[3]
    Cin = xp_ref.shape[3]
    L = Y1_LEFT

    # ---------------- conv1 -> BN -> ReLU ----------------
    # Tap-packed im2col built in VMEM (never HBM): ONE MXU dot with K = 9*Cin
    # instead of 9 tiny-K dots + VPU accumulation.
    taps1 = [xp_ref[0, kh:kh + H, kw:kw + W, :]
             for kh in range(3) for kw in range(3)]
    lhs1 = jnp.concatenate(taps1, axis=-1).reshape(H * W, 9 * Cin)
    y1 = jnp.dot(lhs1, w1_ref[...], preferred_element_type=jnp.float32)
    y1 = jnp.maximum(y1 * s1_ref[...] + b1_ref[...], 0.0)

    # Stage the activation in VMEM as bf16 (single cast here; conv2 reads bf16).
    # Zero only the halo (O(H+W)); re-done every step so it is valid under
    # megacore sharding of the parallel batch axis.  Interior store starts at
    # column L=16 -> aligned, unmasked write.
    zrow = jnp.zeros((1,) + y1s_ref.shape[1:], y1s_ref.dtype)
    zcol = jnp.zeros((y1s_ref.shape[0], 1, Cp), y1s_ref.dtype)
    y1s_ref[0:1] = zrow                      # top halo row
    y1s_ref[H + 1:H + 2] = zrow              # bottom halo row
    y1s_ref[:, L - 1:L, :] = zcol            # left halo column
    y1s_ref[:, L + W:L + W + 1, :] = zcol    # right halo column
    y1s_ref[1:H + 1, L:L + W, :] = y1.reshape(H, W, Cp).astype(y1s_ref.dtype)

    # ---------------- conv2 -> BN -> ReLU ----------------
    # Same tap packing: K = 9*Cp -> one deep MXU contraction (fills the 256-deep
    # K tile of v6e/v7x), lane-aligned concat, no per-tap dots/adds/casts.
    taps2 = [y1s_ref[kh:kh + H, L - 1 + kw:L - 1 + kw + W, :]
             for kh in range(3) for kw in range(3)]
    lhs2 = jnp.concatenate(taps2, axis=-1).reshape(H * W, 9 * Cp)
    y2 = jnp.dot(lhs2, w2_ref[...], preferred_element_type=jnp.float32)
    y2 = jnp.maximum(y2 * s2_ref[...] + b2_ref[...], 0.0)
    out_ref[0] = y2.reshape(H, W, Cp).astype(out_ref.dtype)


def _fold_bn(conv_bias, gamma, beta, mean, var):
    scale = gamma / jnp.sqrt(var + BN_EPS)
    bias = (conv_bias - mean) * scale + beta
    return scale, bias


def conv_block_forward(x_nchw, params):
    """ConvBlock forward (eval-mode BN).  x_nchw: (N, Cin, H, W) -> (N, Cout, H, W)."""
    w1, cb1, g1, be1, m1, v1 = params["conv1"]
    w2, cb2, g2, be2, m2, v2 = params["conv2"]
    Cin, Cout = w1.shape[2], w1.shape[3]

    # NCHW -> NHWC, cast to bf16 (MXU operands are bf16 anyway; halves input
    # DMA), then add the conv halo.  XLA fuses these into one HBM pass.
    x = jnp.transpose(x_nchw, (0, 2, 3, 1)).astype(jnp.bfloat16)
    N, H, W, _ = x.shape
    xp = jnp.pad(x, ((0, 0), (1, 1), (1, 1), (0, 0)))

    # Lane-dense channel layout: pad Cout to a multiple of 128 so every MXU
    # column / store is unmasked; padded channels carry exact zeros end-to-end.
    Cp = _round_up(Cout, 128)
    pc = Cp - Cout

    # Tap-packed weights: (3,3,ci,co) -> (9*ci, Cp); row order (kh, kw, ci)
    # matches the in-kernel im2col concat order.
    w1m = (jnp.pad(w1, ((0, 0), (0, 0), (0, 0), (0, pc)))
              .reshape(9 * Cin, Cp).astype(jnp.bfloat16))
    w2m = (jnp.pad(w2, ((0, 0), (0, 0), (0, pc), (0, pc)))
              .reshape(9 * Cp, Cp).astype(jnp.bfloat16))

    s1, b1 = _fold_bn(cb1, g1, be1, m1, v1)
    s2, b2 = _fold_bn(cb2, g2, be2, m2, v2)
    s1p = jnp.pad(s1, (0, pc), constant_values=1.0).reshape(1, Cp).astype(jnp.float32)
    b1p = jnp.pad(b1, (0, pc)).reshape(1, Cp).astype(jnp.float32)
    s2p = jnp.pad(s2, (0, pc), constant_values=1.0).reshape(1, Cp).astype(jnp.float32)
    b2p = jnp.pad(b2, (0, pc)).reshape(1, Cp).astype(jnp.float32)

    out = pl.pallas_call(
        conv_block_kernel,
        out_shape=jax.ShapeDtypeStruct((N, H, W, Cp), jnp.bfloat16),
        grid_spec=pltpu.PrefetchScalarGridSpec(
            num_scalar_prefetch=0,
            grid=(N,),
            in_specs=[
                pl.BlockSpec((1, H + 2, W + 2, Cin), lambda n: (n, 0, 0, 0)),
                pl.BlockSpec((9 * Cin, Cp), lambda n: (0, 0)),
                pl.BlockSpec((1, Cp), lambda n: (0, 0)),
                pl.BlockSpec((1, Cp), lambda n: (0, 0)),
                pl.BlockSpec((9 * Cp, Cp), lambda n: (0, 0)),
                pl.BlockSpec((1, Cp), lambda n: (0, 0)),
                pl.BlockSpec((1, Cp), lambda n: (0, 0)),
            ],
            out_specs=pl.BlockSpec((1, H, W, Cp), lambda n: (n, 0, 0, 0)),
            scratch_shapes=[pltpu.VMEM((H + 2, W + 2 * Y1_LEFT, Cp), jnp.bfloat16)],
        ),
        compiler_params=pltpu.CompilerParams(dimension_semantics=("parallel",)),
    )(xp, w1m, s1p, b1p, w2m, s2p, b2p)

    # Strip channel padding; keep the module's NCHW/f32 interface.  Consumers
    # that can take NHWC/bf16 should skip this extra HBM pass.
    out = out[..., :Cout].astype(jnp.float32)
    return jnp.transpose(out, (0, 3, 1, 2))


# --------------------------------------------------------------------------
# Synthetic parameters + pure-JAX reference (same eval-mode semantics).
# --------------------------------------------------------------------------
def init_params(key, in_c, out_c):
    ks = jax.random.split(key, 12)

    def bf16_vals(a):   # keep weights exactly bf16-representable (f32 storage)
        return a.astype(jnp.bfloat16).astype(jnp.float32)

    def conv_bn(kw, kb, kg, kbe, km, kv, ci, co):
        w = bf16_vals(jax.random.normal(kw, (3, 3, ci, co), jnp.float32) * 0.1)
        b = jax.random.normal(kb, (co,), jnp.float32) * 0.1
        gamma = jax.random.uniform(kg, (co,), minval=0.5, maxval=1.5)
        beta = jax.random.normal(kbe, (co,), jnp.float32) * 0.1
        mean = jax.random.normal(km, (co,), jnp.float32) * 0.1
        var = jax.random.uniform(kv, (co,), minval=0.5, maxval=1.5)
        return (w, b, gamma, beta, mean, var)

    return {"conv1": conv_bn(*ks[0:6], in_c, out_c),
            "conv2": conv_bn(*ks[6:12], out_c, out_c)}


def reference_forward(x_nchw, params):
    x = jnp.transpose(x_nchw, (0, 2, 3, 1)).astype(jnp.float32)
    for name in ("conv1", "conv2"):
        w, cb, g, be, m, v = params[name]
        y = jax.lax.conv_general_dilated(
            x, w, window_strides=(1, 1), padding="SAME",
            dimension_numbers=("NHWC", "HWIO", "NHWC")) + cb
        y = (y - m) / jnp.sqrt(v + BN_EPS) * g + be
        x = jnp.maximum(y, 0.0)
    return jnp.transpose(x, (0, 3, 1, 2))


if __name__ == "__main__":
    in_c, out_c, img_dim, batch = 4, 8, 16, 2

    key = jax.random.PRNGKey(0)
    kx, kp = jax.random.split(key)
    x = jax.random.normal(kx, (batch, in_c, img_dim, img_dim), jnp.float32)
    x = x.astype(jnp.bfloat16).astype(jnp.float32)   # bf16-representable test input
    params = init_params(kp, in_c, out_c)

    out = jax.block_until_ready(conv_block_forward(x, params))
    assert out.shape == (batch, out_c, img_dim, img_dim)

    ref = jax.block_until_ready(reference_forward(x, params))
    np.testing.assert_allclose(np.asarray(out), np.asarray(ref), rtol=3e-2, atol=3e-2)

    print("KERNEL_OK")
</pallas_src>

<mosaic_0001>
module attributes {stable_mosaic.version = 11 : i64} {
  func.func @conv_block_kernel(%arg0: i32, %arg1: memref<1x18x18x4xbf16, #tpu.memory_space<vmem>>, %arg2: memref<36x128xbf16, #tpu.memory_space<vmem>>, %arg3: memref<1x128xf32, #tpu.memory_space<vmem>>, %arg4: memref<1x128xf32, #tpu.memory_space<vmem>>, %arg5: memref<1152x128xbf16, #tpu.memory_space<vmem>>, %arg6: memref<1x128xf32, #tpu.memory_space<vmem>>, %arg7: memref<1x128xf32, #tpu.memory_space<vmem>>, %arg8: memref<1x16x16x128xbf16, #tpu.memory_space<vmem>>, %arg9: memref<18x48x128xbf16, #tpu.memory_space<vmem>>) attributes {dimension_semantics = [#tpu.dimension_semantics<parallel>], iteration_bounds = array<i64: 2>, scalar_prefetch = 0 : i64, scratch_operands = 1 : i64, tpu.core_type = #tpu.core_type<tc>, window_params = [{transform_indices = @transform_0, window_bounds = array<i64: 1, 18, 18, 4>}, {pipeline_mode = #tpu.pipeline_mode<synchronous>, transform_indices = @transform_1, window_bounds = array<i64: 36, 128>}, {pipeline_mode = #tpu.pipeline_mode<synchronous>, transform_indices = @transform_2, window_bounds = array<i64: 1, 128>}, {pipeline_mode = #tpu.pipeline_mode<synchronous>, transform_indices = @transform_3, window_bounds = array<i64: 1, 128>}, {pipeline_mode = #tpu.pipeline_mode<synchronous>, transform_indices = @transform_4, window_bounds = array<i64: 1152, 128>}, {pipeline_mode = #tpu.pipeline_mode<synchronous>, transform_indices = @transform_5, window_bounds = array<i64: 1, 128>}, {pipeline_mode = #tpu.pipeline_mode<synchronous>, transform_indices = @transform_6, window_bounds = array<i64: 1, 128>}, {transform_indices = @transform_7, window_bounds = array<i64: 1, 16, 16, 128>}]} {
    %c0 = arith.constant 0 : index
    %c0_0 = arith.constant 0 : index
    %c0_1 = arith.constant 0 : index
    %c0_2 = arith.constant 0 : index
    %0 = vector.load %arg1[%c0, %c0_0, %c0_1, %c0_2] : memref<1x18x18x4xbf16, #tpu.memory_space<vmem>>, vector<1x16x16x4xbf16>
    %1 = vector.shape_cast %0 : vector<1x16x16x4xbf16> to vector<16x16x4xbf16>
    %c0_3 = arith.constant 0 : index
    %c0_4 = arith.constant 0 : index
    %c1 = arith.constant 1 : index
    %c0_5 = arith.constant 0 : index
    %2 = vector.load %arg1[%c0_3, %c0_4, %c1, %c0_5] : memref<1x18x18x4xbf16, #tpu.memory_space<vmem>>, vector<1x16x16x4xbf16>
    %3 = vector.shape_cast %2 : vector<1x16x16x4xbf16> to vector<16x16x4xbf16>
    %c0_6 = arith.constant 0 : index
    %c0_7 = arith.constant 0 : index
    %c2 = arith.constant 2 : index
    %c0_8 = arith.constant 0 : index
    %4 = vector.load %arg1[%c0_6, %c0_7, %c2, %c0_8] : memref<1x18x18x4xbf16, #tpu.memory_space<vmem>>, vector<1x16x16x4xbf16>
    %5 = vector.shape_cast %4 : vector<1x16x16x4xbf16> to vector<16x16x4xbf16>
    %c0_9 = arith.constant 0 : index
    %c1_10 = arith.constant 1 : index
    %c0_11 = arith.constant 0 : index
    %c0_12 = arith.constant 0 : index
    %6 = vector.load %arg1[%c0_9, %c1_10, %c0_11, %c0_12] : memref<1x18x18x4xbf16, #tpu.memory_space<vmem>>, vector<1x16x16x4xbf16>
    %7 = vector.shape_cast %6 : vector<1x16x16x4xbf16> to vector<16x16x4xbf16>
    %c0_13 = arith.constant 0 : index
    %c1_14 = arith.constant 1 : index
    %c1_15 = arith.constant 1 : index
    %c0_16 = arith.constant 0 : index
    %8 = vector.load %arg1[%c0_13, %c1_14, %c1_15, %c0_16] : memref<1x18x18x4xbf16, #tpu.memory_space<vmem>>, vector<1x16x16x4xbf16>
    %9 = vector.shape_cast %8 : vector<1x16x16x4xbf16> to vector<16x16x4xbf16>
    %c0_17 = arith.constant 0 : index
    %c1_18 = arith.constant 1 : index
    %c2_19 = arith.constant 2 : index
    %c0_20 = arith.constant 0 : index
    %10 = vector.load %arg1[%c0_17, %c1_18, %c2_19, %c0_20] : memref<1x18x18x4xbf16, #tpu.memory_space<vmem>>, vector<1x16x16x4xbf16>
    %11 = vector.shape_cast %10 : vector<1x16x16x4xbf16> to vector<16x16x4xbf16>
    %c0_21 = arith.constant 0 : index
    %c2_22 = arith.constant 2 : index
    %c0_23 = arith.constant 0 : index
    %c0_24 = arith.constant 0 : index
    %12 = vector.load %arg1[%c0_21, %c2_22, %c0_23, %c0_24] : memref<1x18x18x4xbf16, #tpu.memory_space<vmem>>, vector<1x16x16x4xbf16>
    %13 = vector.shape_cast %12 : vector<1x16x16x4xbf16> to vector<16x16x4xbf16>
    %c0_25 = arith.constant 0 : index
    %c2_26 = arith.constant 2 : index
    %c1_27 = arith.constant 1 : index
    %c0_28 = arith.constant 0 : index
    %14 = vector.load %arg1[%c0_25, %c2_26, %c1_27, %c0_28] : memref<1x18x18x4xbf16, #tpu.memory_space<vmem>>, vector<1x16x16x4xbf16>
    %15 = vector.shape_cast %14 : vector<1x16x16x4xbf16> to vector<16x16x4xbf16>
    %c0_29 = arith.constant 0 : index
    %c2_30 = arith.constant 2 : index
    %c2_31 = arith.constant 2 : index
    %c0_32 = arith.constant 0 : index
    %16 = vector.load %arg1[%c0_29, %c2_30, %c2_31, %c0_32] : memref<1x18x18x4xbf16, #tpu.memory_space<vmem>>, vector<1x16x16x4xbf16>
    %17 = vector.shape_cast %16 : vector<1x16x16x4xbf16> to vector<16x16x4xbf16>
    %18 = tpu.concatenate %1, %3, %5, %7, %9, %11, %13, %15, %17 in 2 : vector<16x16x4xbf16>, vector<16x16x4xbf16>, vector<16x16x4xbf16>, vector<16x16x4xbf16>, vector<16x16x4xbf16>, vector<16x16x4xbf16>, vector<16x16x4xbf16>, vector<16x16x4xbf16>, vector<16x16x4xbf16> -> vector<16x16x36xbf16>
    %19 = vector.shape_cast %18 : vector<16x16x36xbf16> to vector<256x36xbf16>
    %c0_33 = arith.constant 0 : index
    %c0_34 = arith.constant 0 : index
    %20 = vector.load %arg2[%c0_33, %c0_34] : memref<36x128xbf16, #tpu.memory_space<vmem>>, vector<36x128xbf16>
    %cst = arith.constant dense<0.000000e+00> : vector<256x128xf32>
    %21 = tpu.matmul %19, %20, %cst {dimension_numbers = #tpu.dot_dimension_numbers<[1], [0], [0], [1], [0, 0, 1, 1], [], []>} : vector<256x36xbf16>, vector<36x128xbf16>, vector<256x128xf32> -> vector<256x128xf32>
    %c0_35 = arith.constant 0 : index
    %c0_36 = arith.constant 0 : index
    %22 = vector.load %arg3[%c0_35, %c0_36] : memref<1x128xf32, #tpu.memory_space<vmem>>, vector<1x128xf32>
    %23 = vector.broadcast %22 : vector<1x128xf32> to vector<256x128xf32>
    %24 = arith.mulf %21, %23 : vector<256x128xf32>
    %c0_37 = arith.constant 0 : index
    %c0_38 = arith.constant 0 : index
    %25 = vector.load %arg4[%c0_37, %c0_38] : memref<1x128xf32, #tpu.memory_space<vmem>>, vector<1x128xf32>
    %26 = vector.broadcast %25 : vector<1x128xf32> to vector<256x128xf32>
    %27 = arith.addf %24, %26 : vector<256x128xf32>
    %cst_39 = arith.constant 0.000000e+00 : f32
    %28 = vector.broadcast %cst_39 : f32 to vector<256x128xf32>
    %29 = arith.maximumf %27, %28 : vector<256x128xf32>
    %cst_40 = arith.constant 0.000000e+00 : bf16
    %30 = vector.broadcast %cst_40 : bf16 to vector<1x48x128xbf16>
    %cst_41 = arith.constant 0.000000e+00 : bf16
    %31 = vector.broadcast %cst_41 : bf16 to vector<18x1x128xbf16>
    %c0_42 = arith.constant 0 : index
    %c0_43 = arith.constant 0 : index
    %c0_44 = arith.constant 0 : index
    %32 = vector.load %arg9[%c0_42, %c0_43, %c0_44] : memref<18x48x128xbf16, #tpu.memory_space<vmem>>, vector<1x48x128xbf16>
    tpu.vector_store %arg9[%c0_42, %c0_43, %c0_44], %30 {strides = array<i32>} : memref<18x48x128xbf16, #tpu.memory_space<vmem>>, vector<1x48x128xbf16>,
    %c17 = arith.constant 17 : index
    %c0_45 = arith.constant 0 : index
    %c0_46 = arith.constant 0 : index
    %33 = vector.load %arg9[%c17, %c0_45, %c0_46] : memref<18x48x128xbf16, #tpu.memory_space<vmem>>, vector<1x48x128xbf16>
    tpu.vector_store %arg9[%c17, %c0_45, %c0_46], %30 {strides = array<i32>} : memref<18x48x128xbf16, #tpu.memory_space<vmem>>, vector<1x48x128xbf16>,
    %c0_47 = arith.constant 0 : index
    %c15 = arith.constant 15 : index
    %c0_48 = arith.constant 0 : index
    %34 = vector.load %arg9[%c0_47, %c15, %c0_48] : memref<18x48x128xbf16, #tpu.memory_space<vmem>>, vector<18x1x128xbf16>
    tpu.vector_store %arg9[%c0_47, %c15, %c0_48], %31 {strides = array<i32>} : memref<18x48x128xbf16, #tpu.memory_space<vmem>>, vector<18x1x128xbf16>,
    %c0_49 = arith.constant 0 : index
    %c32 = arith.constant 32 : index
    %c0_50 = arith.constant 0 : index
    %35 = vector.load %arg9[%c0_49, %c32, %c0_50] : memref<18x48x128xbf16, #tpu.memory_space<vmem>>, vector<18x1x128xbf16>
    tpu.vector_store %arg9[%c0_49, %c32, %c0_50], %31 {strides = array<i32>} : memref<18x48x128xbf16, #tpu.memory_space<vmem>>, vector<18x1x128xbf16>,
    %36 = vector.shape_cast %29 : vector<256x128xf32> to vector<16x16x128xf32>
    %37 = arith.truncf %36 : vector<16x16x128xf32> to vector<16x16x128xbf16>
    %c1_51 = arith.constant 1 : index
    %c16 = arith.constant 16 : index
    %c0_52 = arith.constant 0 : index
    %38 = vector.load %arg9[%c1_51, %c16, %c0_52] : memref<18x48x128xbf16, #tpu.memory_space<vmem>>, vector<16x16x128xbf16>
    tpu.vector_store %arg9[%c1_51, %c16, %c0_52], %37 {strides = array<i32>} : memref<18x48x128xbf16, #tpu.memory_space<vmem>>, vector<16x16x128xbf16>,
    %c0_53 = arith.constant 0 : index
    %c15_54 = arith.constant 15 : index
    %c0_55 = arith.constant 0 : index
    %39 = vector.load %arg9[%c0_53, %c15_54, %c0_55] : memref<18x48x128xbf16, #tpu.memory_space<vmem>>, vector<16x16x128xbf16>
    %c0_56 = arith.constant 0 : index
    %c16_57 = arith.constant 16 : index
    %c0_58 = arith.constant 0 : index
    %40 = vector.load %arg9[%c0_56, %c16_57, %c0_58] : memref<18x48x128xbf16, #tpu.memory_space<vmem>>, vector<16x16x128xbf16>
    %c0_59 = arith.constant 0 : index
    %c17_60 = arith.constant 17 : index
    %c0_61 = arith.constant 0 : index
    %41 = vector.load %arg9[%c0_59, %c17_60, %c0_61] : memref<18x48x128xbf16, #tpu.memory_space<vmem>>, vector<16x16x128xbf16>
    %c1_62 = arith.constant 1 : index
    %c15_63 = arith.constant 15 : index
    %c0_64 = arith.constant 0 : index
    %42 = vector.load %arg9[%c1_62, %c15_63, %c0_64] : memref<18x48x128xbf16, #tpu.memory_space<vmem>>, vector<16x16x128xbf16>
    %c1_65 = arith.constant 1 : index
    %c16_66 = arith.constant 16 : index
    %c0_67 = arith.constant 0 : index
    %43 = vector.load %arg9[%c1_65, %c16_66, %c0_67] : memref<18x48x128xbf16, #tpu.memory_space<vmem>>, vector<16x16x128xbf16>
    %c1_68 = arith.constant 1 : index
    %c17_69 = arith.constant 17 : index
    %c0_70 = arith.constant 0 : index
    %44 = vector.load %arg9[%c1_68, %c17_69, %c0_70] : memref<18x48x128xbf16, #tpu.memory_space<vmem>>, vector<16x16x128xbf16>
    %c2_71 = arith.constant 2 : index
    %c15_72 = arith.constant 15 : index
    %c0_73 = arith.constant 0 : index
    %45 = vector.load %arg9[%c2_71, %c15_72, %c0_73] : memref<18x48x128xbf16, #tpu.memory_space<vmem>>, vector<16x16x128xbf16>
    %c2_74 = arith.constant 2 : index
    %c16_75 = arith.constant 16 : index
    %c0_76 = arith.constant 0 : index
    %46 = vector.load %arg9[%c2_74, %c16_75, %c0_76] : memref<18x48x128xbf16, #tpu.memory_space<vmem>>, vector<16x16x128xbf16>
    %c2_77 = arith.constant 2 : index
    %c17_78 = arith.constant 17 : index
    %c0_79 = arith.constant 0 : index
    %47 = vector.load %arg9[%c2_77, %c17_78, %c0_79] : memref<18x48x128xbf16, #tpu.memory_space<vmem>>, vector<16x16x128xbf16>
    %48 = tpu.concatenate %39, %40, %41, %42, %43, %44, %45, %46, %47 in 2 : vector<16x16x128xbf16>, vector<16x16x128xbf16>, vector<16x16x128xbf16>, vector<16x16x128xbf16>, vector<16x16x128xbf16>, vector<16x16x128xbf16>, vector<16x16x128xbf16>, vector<16x16x128xbf16>, vector<16x16x128xbf16> -> vector<16x16x1152xbf16>
    %49 = vector.shape_cast %48 : vector<16x16x1152xbf16> to vector<256x1152xbf16>
    %c0_80 = arith.constant 0 : index
    %c0_81 = arith.constant 0 : index
    %50 = vector.load %arg5[%c0_80, %c0_81] : memref<1152x128xbf16, #tpu.memory_space<vmem>>, vector<1152x128xbf16>
    %cst_82 = arith.constant dense<0.000000e+00> : vector<256x128xf32>
    %51 = tpu.matmul %49, %50, %cst_82 {dimension_numbers = #tpu.dot_dimension_numbers<[1], [0], [0], [1], [0, 0, 1, 1], [], []>} : vector<256x1152xbf16>, vector<1152x128xbf16>, vector<256x128xf32> -> vector<256x128xf32>
    %c0_83 = arith.constant 0 : index
    %c0_84 = arith.constant 0 : index
    %52 = vector.load %arg6[%c0_83, %c0_84] : memref<1x128xf32, #tpu.memory_space<vmem>>, vector<1x128xf32>
    %53 = vector.broadcast %52 : vector<1x128xf32> to vector<256x128xf32>
    %54 = arith.mulf %51, %53 : vector<256x128xf32>
    %c0_85 = arith.constant 0 : index
    %c0_86 = arith.constant 0 : index
    %55 = vector.load %arg7[%c0_85, %c0_86] : memref<1x128xf32, #tpu.memory_space<vmem>>, vector<1x128xf32>
    %56 = vector.broadcast %55 : vector<1x128xf32> to vector<256x128xf32>
    %57 = arith.addf %54, %56 : vector<256x128xf32>
    %cst_87 = arith.constant 0.000000e+00 : f32
    %58 = vector.broadcast %cst_87 : f32 to vector<256x128xf32>
    %59 = arith.maximumf %57, %58 : vector<256x128xf32>
    %60 = vector.shape_cast %59 : vector<256x128xf32> to vector<16x16x128xf32>
    %61 = arith.truncf %60 : vector<16x16x128xf32> to vector<16x16x128xbf16>
    %c0_88 = arith.constant 0 : index
    %c0_89 = arith.constant 0 : index
    %c0_90 = arith.constant 0 : index
    %c0_91 = arith.constant 0 : index
    %62 = vector.load %arg8[%c0_88, %c0_89, %c0_90, %c0_91] : memref<1x16x16x128xbf16, #tpu.memory_space<vmem>>, vector<1x16x16x128xbf16>
    %63 = vector.shape_cast %62 : vector<1x16x16x128xbf16> to vector<16x16x128xbf16>
    %64 = vector.shape_cast %61 : vector<16x16x128xbf16> to vector<1x16x16x128xbf16>
    tpu.vector_store %arg8[%c0_88, %c0_89, %c0_90, %c0_91], %64 {strides = array<i32>} : memref<1x16x16x128xbf16, #tpu.memory_space<vmem>>, vector<1x16x16x128xbf16>,
    return
  }
  func.func @transform_0(%arg0: i32) -> (i32, i32, i32, i32) {
    %c0_i32 = arith.constant 0 : i32
    %c0_i32_0 = arith.constant 0 : i32
    %c0_i32_1 = arith.constant 0 : i32
    %c0_i32_2 = arith.constant 0 : i32
    return %arg0, %c0_i32, %c0_i32_0, %c0_i32_1 : i32, i32, i32, i32
  }
  func.func @transform_1(%arg0: i32) -> (i32, i32) {
    %c0_i32 = arith.constant 0 : i32
    %c0_i32_0 = arith.constant 0 : i32
    %c0_i32_1 = arith.constant 0 : i32
    return %c0_i32, %c0_i32_0 : i32, i32
  }
  func.func @transform_2(%arg0: i32) -> (i32, i32) {
    %c0_i32 = arith.constant 0 : i32
    %c0_i32_0 = arith.constant 0 : i32
    %c0_i32_1 = arith.constant 0 : i32
    return %c0_i32, %c0_i32_0 : i32, i32
  }
  func.func @transform_3(%arg0: i32) -> (i32, i32) {
    %c0_i32 = arith.constant 0 : i32
    %c0_i32_0 = arith.constant 0 : i32
    %c0_i32_1 = arith.constant 0 : i32
    return %c0_i32, %c0_i32_0 : i32, i32
  }
  func.func @transform_4(%arg0: i32) -> (i32, i32) {
    %c0_i32 = arith.constant 0 : i32
    %c0_i32_0 = arith.constant 0 : i32
    %c0_i32_1 = arith.constant 0 : i32
    return %c0_i32, %c0_i32_0 : i32, i32
  }
  func.func @transform_5(%arg0: i32) -> (i32, i32) {
    %c0_i32 = arith.constant 0 : i32
    %c0_i32_0 = arith.constant 0 : i32
    %c0_i32_1 = arith.constant 0 : i32
    return %c0_i32, %c0_i32_0 : i32, i32
  }
  func.func @transform_6(%arg0: i32) -> (i32, i32) {
    %c0_i32 = arith.constant 0 : i32
    %c0_i32_0 = arith.constant 0 : i32
    %c0_i32_1 = arith.constant 0 : i32
    return %c0_i32, %c0_i32_0 : i32, i32
  }
  func.func @transform_7(%arg0: i32) -> (i32, i32, i32, i32) {
    %c0_i32 = arith.constant 0 : i32
    %c0_i32_0 = arith.constant 0 : i32
    %c0_i32_1 = arith.constant 0 : i32
    %c0_i32_2 = arith.constant 0 : i32
    return %arg0, %c0_i32, %c0_i32_0, %c0_i32_1 : i32, i32, i32, i32
  }
}

</mosaic_0001>

<llo_original>
// kernel: tpu_custom_call.1
$region0: #{tpu_custom_call.1}
  #allocation0 [shape = 'u32[]', space=smem, size = 0x4, offset = 0x4, fixed_abs, tag = 'smem constant byte address 0x4 - core index']
  #allocation1 [shape = 'u32[144,128]{1,0:T(1,128)}', space=vmem, size = 0x12000, scoped, tag = 'internal scratch']
  #allocation2 [shape = 'bf16[18,48,128]{2,1,0:T(8,128)(2,1)}', space=vmem, size = 0x36000, scoped, tag = 'scratch operand']
  %s0 = inlined_call_operand.vmem [shape: bf16[2,18,18,4], index: 0, kind: input, shape index: {}]
  %s1 = inlined_call_operand.vmem [shape: bf16[36,128], index: 1, kind: input, shape index: {}]
  %s2 = inlined_call_operand.vmem [shape: f32[1,128], index: 2, kind: input, shape index: {}]
  %s3 = inlined_call_operand.vmem [shape: f32[1,128], index: 3, kind: input, shape index: {}]
  %s4 = inlined_call_operand.hbm [shape: bf16[1152,128], index: 4, kind: input, shape index: {}]
  %s5 = inlined_call_operand.vmem [shape: f32[1,128], index: 5, kind: input, shape index: {}]
  %s6 = inlined_call_operand.vmem [shape: f32[1,128], index: 6, kind: input, shape index: {}]
  %s7 = inlined_call_operand.hbm [shape: bf16[2,16,16,128], index: 7, kind: output, shape index: {}]
  %s8 = sld [smem:[#allocation0]]
  $region65: #{tpu_custom_call.1} parent=0
    _
  %s10 = ssub.s32 1, %s8
  %s11 = scalar_select 0, %s10, %s8
  $region1: #{tpu_custom_call.1} parent=0
    #allocation3 [shape = 'u8[294912]{0}', space=vmem, size = 0x48000, scoped, tag = 'input window, operand 4, single buffered']
    #allocation4 [shape = 's32[2]{0}', space=sflag, size = 0x8, scoped, tag = 'scoped memory for tpu_custom_call.1']
    #allocation5 [shape = 's32[2]{0}', space=sflag, size = 0x8, scoped, tag = 'scoped memory for tpu_custom_call.1']
    #allocation6 [shape = 'u8[131072]{0}', space=vmem, size = 0x20000, scoped, tag = 'output window, operand 0']
    %12 = vsyncpa [#allocation4], 0
    %13 = vsyncpa [#allocation5], 0
    %s14 = scalar_lea.sflag [#allocation5], 1
    %15 = vsyncpa %s14, 0
    loop: start=0, step=1, limit=4
    $region2: #{tpu_custom_call.1} parent=1 // loop_pre_header
      _
    $region3: #{tpu_custom_call.1} parent=1 // loop_header
      %s17 = sphi 0, %s21
      %p18 = scmp.ge.s32.totalorder %s17, 4
      %s27 = sphi 0, %s29
      %s30 = sphi 0, %s27
      %s31 = sphi 0, %s30
      %s47 = sphi 0, %s31
      %s51 = sphi 0, %s51
      %s53 = sphi 0, %s51
      %s54 = sphi 0, %s53
      %s68 = sphi 0, %s54
      %s72 = sphi 0, %s72
      %s74 = sphi 0, %s72
      %s75 = sphi 0, %s74
      %s89 = sphi 0, %s75
      %s93 = sphi 0, %s93
      %s95 = sphi 0, %s93
      %s96 = sphi 0, %s95
      %s110 = sphi 0, %s96
      %s114 = sphi 0, %s114
      %s116 = sphi 0, %s114
      %s117 = sphi 0, %s116
      %s131 = sphi 0, %s117
      %s135 = sphi 0, %s135
      %s137 = sphi 0, %s135
      %s138 = sphi 0, %s137
      %s152 = sphi 0, %s138
      %s156 = sphi 0, %s156
      %s158 = sphi 0, %s156
      %s159 = sphi 0, %s158
      %s173 = sphi 0, %s159
      %s179 = sphi 0, %s181
      %s182 = sphi 0, %s179
      %s183 = sphi 0, %s182
      %s199 = sphi 0, %s183
    $region4: #{tpu_custom_call.1} parent=1 // loop_header_branch
      %20 = sbr.rel (%p18) target = $region8
    $region5: #{tpu_custom_call.1} parent=1 // loop_body
      %s22 = ssub.s32 %s17, 1
      %s23 = ssub.s32 %s17, 2
      %s24 = sadd.s32 %s17, 1
      %s25 = ssub.s32 %s17, %s24
      %p26 = scmp.eq.s32.totalorder %s25, 0
      %s28 = sadd.s32 %s27, 1
      %s29 = scalar_select %p26, %s27, %s28
      %p32 = pneg %p26
      %p33 = scmp.eq.s32.totalorder %s17, 1
      %p34 = por %p32, %p33
      %p35 = scmp.ne.s32.totalorder %s27, %s30
      %p36 = scmp.eq.s32.totalorder %s17, 0
      %p37 = por %p35, %p36
      %p38 = scmp.ne.s32.totalorder %s27, %s30
      %p39 = scmp.eq.s32.totalorder %s22, 1
      %p40 = por %p38, %p39
      %p41 = scmp.ne.s32.totalorder %s30, %s31
      %p42 = scmp.eq.s32.totalorder %s22, 0
      %p43 = por %p41, %p42
      %p44 = scmp.ne.s32.totalorder %s30, %s31
      %p45 = scmp.eq.s32.totalorder %s23, 1
      %p46 = por %p44, %p45
      %p48 = scmp.ne.s32.totalorder %s31, %s47
      %p49 = scmp.eq.s32.totalorder %s23, 0
      %p50 = por %p48, %p49
      %s52 = sadd.s32 %s51, 1
      %p55 = scmp.eq.s32.totalorder %s17, 1
      %p56 = scmp.ne.s32.totalorder %s51, %s53
      %p57 = scmp.eq.s32.totalorder %s17, 0
      %p58 = por %p56, %p57
      %p59 = scmp.ne.s32.totalorder %s51, %s53
      %p60 = scmp.eq.s32.totalorder %s22, 1
      %p61 = por %p59, %p60
      %p62 = scmp.ne.s32.totalorder %s53, %s54
      %p63 = scmp.eq.s32.totalorder %s22, 0
      %p64 = por %p62, %p63
      %p65 = scmp.ne.s32.totalorder %s53, %s54
      %p66 = scmp.eq.s32.totalorder %s23, 1
      %p67 = por %p65, %p66
      %p69 = scmp.ne.s32.totalorder %s54, %s68
      %p70 = scmp.eq.s32.totalorder %s23, 0
      %p71 = por %p69, %p70
      %s73 = sadd.s32 %s72, 1
      %p76 = scmp.eq.s32.totalorder %s17, 1
      %p77 = scmp.ne.s32.totalorder %s72, %s74
      %p78 = scmp.eq.s32.totalorder %s17, 0
      %p79 = por %p77, %p78
      %p80 = scmp.ne.s32.totalorder %s72, %s74
      %p81 = scmp.eq.s32.totalorder %s22, 1
      %p82 = por %p80, %p81
      %p83 = scmp.ne.s32.totalorder %s74, %s75
      %p84 = scmp.eq.s32.totalorder %s22, 0
      %p85 = por %p83, %p84
      %p86 = scmp.ne.s32.totalorder %s74, %s75
      %p87 = scmp.eq.s32.totalorder %s23, 1
      %p88 = por %p86, %p87
      %p90 = scmp.ne.s32.totalorder %s75, %s89
      %p91 = scmp.eq.s32.totalorder %s23, 0
      %p92 = por %p90, %p91
      %s94 = sadd.s32 %s93, 1
      %p97 = scmp.eq.s32.totalorder %s17, 1
      %p98 = scmp.ne.s32.totalorder %s93, %s95
      %p99 = scmp.eq.s32.totalorder %s17, 0
      %p100 = por %p98, %p99
      %p101 = scmp.ne.s32.totalorder %s93, %s95
      %p102 = scmp.eq.s32.totalorder %s22, 1
      %p103 = por %p101, %p102
      %p104 = scmp.ne.s32.totalorder %s95, %s96
      %p105 = scmp.eq.s32.totalorder %s22, 0
      %p106 = por %p104, %p105
      %p107 = scmp.ne.s32.totalorder %s95, %s96
      %p108 = scmp.eq.s32.totalorder %s23, 1
      %p109 = por %p107, %p108
      %p111 = scmp.ne.s32.totalorder %s96, %s110
      %p112 = scmp.eq.s32.totalorder %s23, 0
      %p113 = por %p111, %p112
      %s115 = sadd.s32 %s114, 1
      %p118 = scmp.eq.s32.totalorder %s17, 1
      %p119 = scmp.ne.s32.totalorder %s114, %s116
      %p120 = scmp.eq.s32.totalorder %s17, 0
      %p121 = por %p119, %p120
      %p122 = scmp.ne.s32.totalorder %s114, %s116
      %p123 = scmp.eq.s32.totalorder %s22, 1
      %p124 = por %p122, %p123
      %p125 = scmp.ne.s32.totalorder %s116, %s117
      %p126 = scmp.eq.s32.totalorder %s22, 0
      %p127 = por %p125, %p126
      %p128 = scmp.ne.s32.totalorder %s116, %s117
      %p129 = scmp.eq.s32.totalorder %s23, 1
      %p130 = por %p128, %p129
      %p132 = scmp.ne.s32.totalorder %s117, %s131
      %p133 = scmp.eq.s32.totalorder %s23, 0
      %p134 = por %p132, %p133
      %s136 = sadd.s32 %s135, 1
      %p139 = scmp.eq.s32.totalorder %s17, 1
      %p140 = scmp.ne.s32.totalorder %s135, %s137
      %p141 = scmp.eq.s32.totalorder %s17, 0
      %p142 = por %p140, %p141
      %p143 = scmp.ne.s32.totalorder %s135, %s137
      %p144 = scmp.eq.s32.totalorder %s22, 1
      %p145 = por %p143, %p144
      %p146 = scmp.ne.s32.totalorder %s137, %s138
      %p147 = scmp.eq.s32.totalorder %s22, 0
      %p148 = por %p146, %p147
      %p149 = scmp.ne.s32.totalorder %s137, %s138
      %p150 = scmp.eq.s32.totalorder %s23, 1
      %p151 = por %p149, %p150
      %p153 = scmp.ne.s32.totalorder %s138, %s152
      %p154 = scmp.eq.s32.totalorder %s23, 0
      %p155 = por %p153, %p154
      %s157 = sadd.s32 %s156, 1
      %p160 = scmp.eq.s32.totalorder %s17, 1
      %p161 = scmp.ne.s32.totalorder %s156, %s158
      %p162 = scmp.eq.s32.totalorder %s17, 0
      %p163 = por %p161, %p162
      %p164 = scmp.ne.s32.totalorder %s156, %s158
      %p165 = scmp.eq.s32.totalorder %s22, 1
      %p166 = por %p164, %p165
      %p167 = scmp.ne.s32.totalorder %s158, %s159
      %p168 = scmp.eq.s32.totalorder %s22, 0
      %p169 = por %p167, %p168
      %p170 = scmp.ne.s32.totalorder %s158, %s159
      %p171 = scmp.eq.s32.totalorder %s23, 1
      %p172 = por %p170, %p171
      %p174 = scmp.ne.s32.totalorder %s159, %s173
      %p175 = scmp.eq.s32.totalorder %s23, 0
      %p176 = por %p174, %p175
      %s177 = ssub.s32 %s17, %s24
      %p178 = scmp.eq.s32.totalorder %s177, 0
      %s180 = sadd.s32 %s179, 1
      %s181 = scalar_select %p178, %s179, %s180
      %p184 = pneg %p178
      %p185 = scmp.eq.s32.totalorder %s17, 1
      %p186 = por %p184, %p185
      %p187 = scmp.ne.s32.totalorder %s179, %s182
      %p188 = scmp.eq.s32.totalorder %s17, 0
      %p189 = por %p187, %p188
      %p190 = scmp.ne.s32.totalorder %s179, %s182
      %p191 = scmp.eq.s32.totalorder %s22, 1
      %p192 = por %p190, %p191
      %p193 = scmp.ne.s32.totalorder %s182, %s183
      %p194 = scmp.eq.s32.totalorder %s22, 0
      %p195 = por %p193, %p194
      %p196 = scmp.ne.s32.totalorder %s182, %s183
      %p197 = scmp.eq.s32.totalorder %s23, 1
      %p198 = por %p196, %p197
      %p200 = scmp.ne.s32.totalorder %s183, %s199
      %p201 = scmp.eq.s32.totalorder %s23, 0
      %p202 = por %p200, %p201
      %p203 = scmp.le.s32.totalorder 1, %s17
      %p204 = scmp.lt.s32.totalorder %s17, 3
      %p205 = pnand %p203, %p204
      %p206 = pneg %p205
      // Predicated region
      $region9: #{tpu_custom_call.1} parent=5 // pred_check
        _
      $region10: #{tpu_custom_call.1} parent=5 // pred_check_branch
        %208 = sbr.rel (%p205) target = $region12
      $region11: #{tpu_custom_call.1} parent=5 // pred_region
        %s209 = ssub.s32 %s17, 1
        // Predicated region
        $region13: #{tpu_custom_call.1} parent=11 // pred_check
          %p210 = pneg %p64
        $region14: #{tpu_custom_call.1} parent=11 // pred_check_branch
          %212 = sbr.rel (%p210) target = $region16
        $region15: #{tpu_custom_call.1} parent=11 // pred_region
          _
        $region16: #{tpu_custom_call.1} parent=11 // pred_fallthru
          _
        // Predicated region
        $region17: #{tpu_custom_call.1} parent=11 // pred_check
          %p213 = pneg %p85
        $region18: #{tpu_custom_call.1} parent=11 // pred_check_branch
          %215 = sbr.rel (%p213) target = $region20
        $region19: #{tpu_custom_call.1} parent=11 // pred_region
          _
        $region20: #{tpu_custom_call.1} parent=11 // pred_fallthru
          _
        // Predicated region
        $region21: #{tpu_custom_call.1} parent=11 // pred_check
          %p216 = pneg %p106
        $region22: #{tpu_custom_call.1} parent=11 // pred_check_branch
          %218 = sbr.rel (%p216) target = $region24
        $region23: #{tpu_custom_call.1} parent=11 // pred_region
          _
        $region24: #{tpu_custom_call.1} parent=11 // pred_fallthru
          _
        // Predicated region
        $region25: #{tpu_custom_call.1} parent=11 // pred_check
          %p219 = pneg %p127
        $region26: #{tpu_custom_call.1} parent=11 // pred_check_branch
          %221 = sbr.rel (%p219) target = $region28
        $region27: #{tpu_custom_call.1} parent=11 // pred_region
          %s223 = ssub.s32 9216, 9216
          %224 = vsyncadd [#allocation4], %s223
          %s225 = sshll.u32 [#allocation3], 4
          %s226 = int_to_ptr.vmem [resolvable:$true] %s225
          %231 = dma.hbm_to_vmem [thread:$0]  %s4, 9216, %s226, [#allocation4], 64, 64, 4
        $region28: #{tpu_custom_call.1} parent=11 // pred_fallthru
          _
        // Predicated region
        $region29: #{tpu_custom_call.1} parent=11 // pred_check
          %p232 = pneg %p148
        $region30: #{tpu_custom_call.1} parent=11 // pred_check_branch
          %234 = sbr.rel (%p232) target = $region32
        $region31: #{tpu_custom_call.1} parent=11 // pred_region
          _
        $region32: #{tpu_custom_call.1} parent=11 // pred_fallthru
          _
        // Predicated region
        $region33: #{tpu_custom_call.1} parent=11 // pred_check
          %p235 = pneg %p169
        $region34: #{tpu_custom_call.1} parent=11 // pred_check_branch
          %237 = sbr.rel (%p235) target = $region36
        $region35: #{tpu_custom_call.1} parent=11 // pred_region
          _
        $region36: #{tpu_custom_call.1} parent=11 // pred_fallthru
          _
      $region12: #{tpu_custom_call.1} parent=5 // pred_fallthru
        _
      %p238 = scmp.lt.s32.totalorder %s17, 2
      // Predicated region
      $region37: #{tpu_custom_call.1} parent=5 // pred_check
        %p239 = pneg %p238
      $region38: #{tpu_custom_call.1} parent=5 // pred_check_branch
        %241 = sbr.rel (%p239) target = $region40
      $region39: #{tpu_custom_call.1} parent=5 // pred_region
        // Predicated region
        $region41: #{tpu_custom_call.1} parent=39 // pred_check
          %p242 = pneg %p37
        $region42: #{tpu_custom_call.1} parent=39 // pred_check_branch
          %244 = sbr.rel (%p242) target = $region44
        $region43: #{tpu_custom_call.1} parent=39 // pred_region
          %p245 = scmp.lt.s32.totalorder %s17, 1
          %s246 = scalar_select %p245, %s17, 1
          %s247 = smul.addr %s246, 54
          %s248 = smul.addr %s247, 4
          %s249 = scalar_lea.vmem %s0, %s248
        $region44: #{tpu_custom_call.1} parent=39 // pred_fallthru
          _
      $region40: #{tpu_custom_call.1} parent=5 // pred_fallthru
        _
      %p250 = scmp.le.s32.totalorder 1, %s17
      %p251 = scmp.lt.s32.totalorder %s17, 3
      %p252 = pnand %p250, %p251
      %p253 = pneg %p252
      // Predicated region
      $region45: #{tpu_custom_call.1} parent=5 // pred_check
        _
      $region46: #{tpu_custom_call.1} parent=5 // pred_check_branch
        %255 = sbr.rel (%p252) target = $region48
      $region47: #{tpu_custom_call.1} parent=5 // pred_region
        %s256 = ssub.s32 %s17, 1
        // Predicated region
        $region49: #{tpu_custom_call.1} parent=47 // pred_check
          %p257 = pneg %p127
        $region50: #{tpu_custom_call.1} parent=47 // pred_check_branch
          %259 = sbr.rel (%p257) target = $region52
        $region51: #{tpu_custom_call.1} parent=47 // pred_region
          %260 = dma.done [#allocation4], 9216
        $region52: #{tpu_custom_call.1} parent=47 // pred_fallthru
          _
        %p261 = scmp.lt.s32.totalorder %s22, 1
        %s262 = scalar_select %p261, %s22, 1
        %s263 = smul.addr %s262, 54
        %s264 = smul.addr %s263, 4
        %s265 = scalar_lea.vmem %s0, %s264
        %p266 = pneg %p43
        %p267 = pneg %p40
        %p268 = pneg %p64
        %p269 = pneg %p61
        %p270 = pneg %p85
        %p271 = pneg %p82
        %p272 = pneg %p106
        %p273 = pneg %p103
        %p274 = pneg %p127
        %p275 = pneg %p124
        %p276 = pneg %p148
        %p277 = pneg %p145
        %p278 = pneg %p169
        %p279 = pneg %p166
        %p280 = pneg %p195
        %p281 = pneg %p192
        %s282 = sand.u32 %s182, 1
        %s283 = scalar_lea.sflag [#allocation5], %s282
        %s284 = sand.u32 %s182, 1
        %s285 = smul.addr %s284, 128
        %s286 = scalar_lea.vmem [#allocation6], %s285
        %p287 = scmp.lt.s32.totalorder %s22, 1
        %s288 = scalar_select %p287, %s22, 1
        %s289 = smul.addr %s288, 54
        %s290 = smul.addr %s289, 4
        %s291 = scalar_lea.vmem %s0, %s290
        %v293 = vld [vmem:[%s291] sm:$0xf]
        %v294 = vld [vmem:[%s291 + $0x4] sm:$0xf]
        %v295 = vld [vmem:[%s291 + $0xc] sm:$0xf]
        %v296 = vld [vmem:[%s291 + $0x10] sm:$0xf]
        %v297 = vld [vmem:[%s291 + $0x18] sm:$0xf]
        %v298 = vld [vmem:[%s291 + $0x1c] sm:$0xf]
        %v299 = vld [vmem:[%s291 + $0x24] sm:$0xf]
        %v300 = vld [vmem:[%s291 + $0x28] sm:$0xf]
        %v301 = vld [vmem:[%s291 + $0x30] sm:$0xf]
        %v302 = vld [vmem:[%s291 + $0x34] sm:$0xf]
        %v303 = vld [vmem:[%s291 + $0x3c] sm:$0xf]
        %v304 = vld [vmem:[%s291 + $0x40] sm:$0xf]
        %v305 = vld [vmem:[%s291 + $0x48] sm:$0xf]
        %v306 = vld [vmem:[%s291 + $0x4c] sm:$0xf]
        %v307 = vld [vmem:[%s291 + $0x54] sm:$0xf]
        %v308 = vld [vmem:[%s291 + $0x58] sm:$0xf]
        %v309 = vld [vmem:[%s291 + $0x60] sm:$0xf]
        %v310 = vld [vmem:[%s291 + $0x64] sm:$0xf]
        %v311 = vld [vmem:[%s291 + $0x6c] sm:$0xf]
        %v312 = vld [vmem:[%s291 + $0x70] sm:$0xf]
        %v313 = vld [vmem:[%s291 + $0x78] sm:$0xf]
        %v314 = vld [vmem:[%s291 + $0x7c] sm:$0xf]
        %v315 = vld [vmem:[%s291 + $0x84] sm:$0xf]
        %v316 = vld [vmem:[%s291 + $0x88] sm:$0xf]
        %v317 = vld [vmem:[%s291 + $0x90] sm:$0xf]
        %v318 = vld [vmem:[%s291 + $0x94] sm:$0xf]
        %v319 = vld [vmem:[%s291 + $0x9c] sm:$0xf]
        %v320 = vld [vmem:[%s291 + $0xa0] sm:$0xf]
        %v321 = vld [vmem:[%s291 + $0xa8] sm:$0xf]
        %v322 = vld [vmem:[%s291 + $0xac] sm:$0xf]
        %v323 = vld [vmem:[%s291 + $0xb4] sm:$0xf]
        %v324 = vld [vmem:[%s291 + $0xb8] sm:$0xf]
        %v325 = vld [vmem:[%s291 + $0x8] sm:$0x1]
        %v326 = vld [vmem:[%s291 + $0x14] sm:$0x1]
        %v327 = vld [vmem:[%s291 + $0x20] sm:$0x1]
        %v328 = vld [vmem:[%s291 + $0x2c] sm:$0x1]
        %v329 = vld [vmem:[%s291 + $0x38] sm:$0x1]
        %v330 = vld [vmem:[%s291 + $0x44] sm:$0x1]
        %v331 = vld [vmem:[%s291 + $0x50] sm:$0x1]
        %v332 = vld [vmem:[%s291 + $0x5c] sm:$0x1]
        %v333 = vld [vmem:[%s291 + $0x68] sm:$0x1]
        %v334 = vld [vmem:[%s291 + $0x74] sm:$0x1]
        %v335 = vld [vmem:[%s291 + $0x80] sm:$0x1]
        %v336 = vld [vmem:[%s291 + $0x8c] sm:$0x1]
        %v337 = vld [vmem:[%s291 + $0x98] sm:$0x1]
        %v338 = vld [vmem:[%s291 + $0xa4] sm:$0x1]
        %v339 = vld [vmem:[%s291 + $0xb0] sm:$0x1]
        %v340 = vld [vmem:[%s291 + $0xbc] sm:$0x1]
        %v341 = vld [vmem:[%s291] sm:$0xe]
        %v342 = vld [vmem:[%s291 + $0xc] sm:$0xe]
        %v343 = vld [vmem:[%s291 + $0x18] sm:$0xe]
        %v344 = vld [vmem:[%s291 + $0x24] sm:$0xe]
        %v345 = vld [vmem:[%s291 + $0x30] sm:$0xe]
        %v346 = vld [vmem:[%s291 + $0x3c] sm:$0xe]
        %v347 = vld [vmem:[%s291 + $0x48] sm:$0xe]
        %v348 = vld [vmem:[%s291 + $0x54] sm:$0xe]
        %v349 = vld [vmem:[%s291 + $0x60] sm:$0xe]
        %v350 = vld [vmem:[%s291 + $0x6c] sm:$0xe]
        %v351 = vld [vmem:[%s291 + $0x78] sm:$0xe]
        %v352 = vld [vmem:[%s291 + $0x84] sm:$0xe]
        %v353 = vld [vmem:[%s291 + $0x90] sm:$0xe]
        %v354 = vld [vmem:[%s291 + $0x9c] sm:$0xe]
        %v355 = vld [vmem:[%s291 + $0xa8] sm:$0xe]
        %v356 = vld [vmem:[%s291 + $0xb4] sm:$0xe]
        %s357 = scalar_lea.vmem %s291, 12
        %v358 = vld [vmem:[%s357] sm:$0xf]
        %v359 = vld [vmem:[%s357 + $0x4] sm:$0xf]
        %v360 = vld [vmem:[%s357 + $0xc] sm:$0xf]
        %v361 = vld [vmem:[%s357 + $0x10] sm:$0xf]
        %v362 = vld [vmem:[%s357 + $0x18] sm:$0xf]
        %v363 = vld [vmem:[%s357 + $0x1c] sm:$0xf]
        %v364 = vld [vmem:[%s357 + $0x24] sm:$0xf]
        %v365 = vld [vmem:[%s357 + $0x28] sm:$0xf]
        %v366 = vld [vmem:[%s357 + $0x30] sm:$0xf]
        %v367 = vld [vmem:[%s357 + $0x34] sm:$0xf]
        %v368 = vld [vmem:[%s357 + $0x3c] sm:$0xf]
        %v369 = vld [vmem:[%s357 + $0x40] sm:$0xf]
        %v370 = vld [vmem:[%s357 + $0x48] sm:$0xf]
        %v371 = vld [vmem:[%s357 + $0x4c] sm:$0xf]
        %v372 = vld [vmem:[%s357 + $0x54] sm:$0xf]
        %v373 = vld [vmem:[%s357 + $0x58] sm:$0xf]
        %v374 = vld [vmem:[%s357 + $0x60] sm:$0xf]
        %v375 = vld [vmem:[%s357 + $0x64] sm:$0xf]
        %v376 = vld [vmem:[%s357 + $0x6c] sm:$0xf]
        %v377 = vld [vmem:[%s357 + $0x70] sm:$0xf]
        %v378 = vld [vmem:[%s357 + $0x78] sm:$0xf]
        %v379 = vld [vmem:[%s357 + $0x7c] sm:$0xf]
        %v380 = vld [vmem:[%s357 + $0x84] sm:$0xf]
        %v381 = vld [vmem:[%s357 + $0x88] sm:$0xf]
        %v382 = vld [vmem:[%s357 + $0x90] sm:$0xf]
        %v383 = vld [vmem:[%s357 + $0x94] sm:$0xf]
        %v384 = vld [vmem:[%s357 + $0x9c] sm:$0xf]
        %v385 = vld [vmem:[%s357 + $0xa0] sm:$0xf]
        %v386 = vld [vmem:[%s357 + $0xa8] sm:$0xf]
        %v387 = vld [vmem:[%s357 + $0xac] sm:$0xf]
        %v388 = vld [vmem:[%s357 + $0xb4] sm:$0xf]
        %v389 = vld [vmem:[%s357 + $0xb8] sm:$0xf]
        %v390 = vld [vmem:[%s357 + $0x8] sm:$0x1]
        %v391 = vld [vmem:[%s357 + $0x14] sm:$0x1]
        %v392 = vld [vmem:[%s357 + $0x20] sm:$0x1]
        %v393 = vld [vmem:[%s357 + $0x2c] sm:$0x1]
        %v394 = vld [vmem:[%s357 + $0x38] sm:$0x1]
        %v395 = vld [vmem:[%s357 + $0x44] sm:$0x1]
        %v396 = vld [vmem:[%s357 + $0x50] sm:$0x1]
        %v397 = vld [vmem:[%s357 + $0x5c] sm:$0x1]
        %v398 = vld [vmem:[%s357 + $0x68] sm:$0x1]
        %v399 = vld [vmem:[%s357 + $0x74] sm:$0x1]
        %v400 = vld [vmem:[%s357 + $0x80] sm:$0x1]
        %v401 = vld [vmem:[%s357 + $0x8c] sm:$0x1]
        %v402 = vld [vmem:[%s357 + $0x98] sm:$0x1]
        %v403 = vld [vmem:[%s357 + $0xa4] sm:$0x1]
        %v404 = vld [vmem:[%s357 + $0xb0] sm:$0x1]
        %v405 = vld [vmem:[%s357 + $0xbc] sm:$0x1]
        %v406 = vld [vmem:[%s357] sm:$0xe]
        %v407 = vld [vmem:[%s357 + $0xc] sm:$0xe]
        %v408 = vld [vmem:[%s357 + $0x18] sm:$0xe]
        %v409 = vld [vmem:[%s357 + $0x24] sm:$0xe]
        %v410 = vld [vmem:[%s357 + $0x30] sm:$0xe]
        %v411 = vld [vmem:[%s357 + $0x3c] sm:$0xe]
        %v412 = vld [vmem:[%s357 + $0x48] sm:$0xe]
        %v413 = vld [vmem:[%s357 + $0x54] sm:$0xe]
        %v414 = vld [vmem:[%s357 + $0x60] sm:$0xe]
        %v415 = vld [vmem:[%s357 + $0x6c] sm:$0xe]
        %v416 = vld [vmem:[%s357 + $0x78] sm:$0xe]
        %v417 = vld [vmem:[%s357 + $0x84] sm:$0xe]
        %v418 = vld [vmem:[%s357 + $0x90] sm:$0xe]
        %v419 = vld [vmem:[%s357 + $0x9c] sm:$0xe]
        %v420 = vld [vmem:[%s357 + $0xa8] sm:$0xe]
        %v421 = vld [vmem:[%s357 + $0xb4] sm:$0xe]
        %s422 = scalar_lea.vmem %s291, 24
        %v423 = vld [vmem:[%s422] sm:$0xf]
        %v424 = vld [vmem:[%s422 + $0x4] sm:$0xf]
        %v425 = vld [vmem:[%s422 + $0xc] sm:$0xf]
        %v426 = vld [vmem:[%s422 + $0x10] sm:$0xf]
        %v427 = vld [vmem:[%s422 + $0x18] sm:$0xf]
        %v428 = vld [vmem:[%s422 + $0x1c] sm:$0xf]
        %v429 = vld [vmem:[%s422 + $0x24] sm:$0xf]
        %v430 = vld [vmem:[%s422 + $0x28] sm:$0xf]
        %v431 = vld [vmem:[%s422 + $0x30] sm:$0xf]
        %v432 = vld [vmem:[%s422 + $0x34] sm:$0xf]
        %v433 = vld [vmem:[%s422 + $0x3c] sm:$0xf]
        %v434 = vld [vmem:[%s422 + $0x40] sm:$0xf]
        %v435 = vld [vmem:[%s422 + $0x48] sm:$0xf]
        %v436 = vld [vmem:[%s422 + $0x4c] sm:$0xf]
        %v437 = vld [vmem:[%s422 + $0x54] sm:$0xf]
        %v438 = vld [vmem:[%s422 + $0x58] sm:$0xf]
        %v439 = vld [vmem:[%s422 + $0x60] sm:$0xf]
        %v440 = vld [vmem:[%s422 + $0x64] sm:$0xf]
        %v441 = vld [vmem:[%s422 + $0x6c] sm:$0xf]
        %v442 = vld [vmem:[%s422 + $0x70] sm:$0xf]
        %v443 = vld [vmem:[%s422 + $0x78] sm:$0xf]
        %v444 = vld [vmem:[%s422 + $0x7c] sm:$0xf]
        %v445 = vld [vmem:[%s422 + $0x84] sm:$0xf]
        %v446 = vld [vmem:[%s422 + $0x88] sm:$0xf]
        %v447 = vld [vmem:[%s422 + $0x90] sm:$0xf]
        %v448 = vld [vmem:[%s422 + $0x94] sm:$0xf]
        %v449 = vld [vmem:[%s422 + $0x9c] sm:$0xf]
        %v450 = vld [vmem:[%s422 + $0xa0] sm:$0xf]
        %v451 = vld [vmem:[%s422 + $0xa8] sm:$0xf]
        %v452 = vld [vmem:[%s422 + $0xac] sm:$0xf]
        %v453 = vld [vmem:[%s422 + $0xb4] sm:$0xf]
        %v454 = vld [vmem:[%s422 + $0xb8] sm:$0xf]
        %v455 = vld [vmem:[%s422 + $0x8] sm:$0x1]
        %v456 = vld [vmem:[%s422 + $0x14] sm:$0x1]
        %v457 = vld [vmem:[%s422 + $0x20] sm:$0x1]
        %v458 = vld [vmem:[%s422 + $0x2c] sm:$0x1]
        %v459 = vld [vmem:[%s422 + $0x38] sm:$0x1]
        %v460 = vld [vmem:[%s422 + $0x44] sm:$0x1]
        %v461 = vld [vmem:[%s422 + $0x50] sm:$0x1]
        %v462 = vld [vmem:[%s422 + $0x5c] sm:$0x1]
        %v463 = vld [vmem:[%s422 + $0x68] sm:$0x1]
        %v464 = vld [vmem:[%s422 + $0x74] sm:$0x1]
        %v465 = vld [vmem:[%s422 + $0x80] sm:$0x1]
        %v466 = vld [vmem:[%s422 + $0x8c] sm:$0x1]
        %v467 = vld [vmem:[%s422 + $0x98] sm:$0x1]
        %v468 = vld [vmem:[%s422 + $0xa4] sm:$0x1]
        %v469 = vld [vmem:[%s422 + $0xb0] sm:$0x1]
        %v470 = vld [vmem:[%s422 + $0xbc] sm:$0x1]
        %v471 = vld [vmem:[%s422] sm:$0xe]
        %v472 = vld [vmem:[%s422 + $0xc] sm:$0xe]
        %v473 = vld [vmem:[%s422 + $0x18] sm:$0xe]
        %v474 = vld [vmem:[%s422 + $0x24] sm:$0xe]
        %v475 = vld [vmem:[%s422 + $0x30] sm:$0xe]
        %v476 = vld [vmem:[%s422 + $0x3c] sm:$0xe]
        %v477 = vld [vmem:[%s422 + $0x48] sm:$0xe]
        %v478 = vld [vmem:[%s422 + $0x54] sm:$0xe]
        %v479 = vld [vmem:[%s422 + $0x60] sm:$0xe]
        %v480 = vld [vmem:[%s422 + $0x6c] sm:$0xe]
        %v481 = vld [vmem:[%s422 + $0x78] sm:$0xe]
        %v482 = vld [vmem:[%s422 + $0x84] sm:$0xe]
        %v483 = vld [vmem:[%s422 + $0x90] sm:$0xe]
        %v484 = vld [vmem:[%s422 + $0x9c] sm:$0xe]
        %v485 = vld [vmem:[%s422 + $0xa8] sm:$0xe]
        %v486 = vld [vmem:[%s422 + $0xb4] sm:$0xe]
        %v519 = vunpack.c.l.b16 %v293
        %v520 = vunpack.c.l.b16 %v294
        %v521 = vunpack.c.l.b16 %v295
        %v522 = vunpack.c.l.b16 %v296
        %v523 = vunpack.c.l.b16 %v297
        %v524 = vunpack.c.l.b16 %v298
        %v525 = vunpack.c.l.b16 %v299
        %v526 = vunpack.c.l.b16 %v300
        %v527 = vunpack.c.l.b16 %v301
        %v528 = vunpack.c.l.b16 %v302
        %v529 = vunpack.c.l.b16 %v303
        %v530 = vunpack.c.l.b16 %v304
        %v531 = vunpack.c.l.b16 %v305
        %v532 = vunpack.c.l.b16 %v306
        %v533 = vunpack.c.l.b16 %v307
        %v534 = vunpack.c.l.b16 %v308
        %v535 = vunpack.c.l.b16 %v309
        %v536 = vunpack.c.l.b16 %v310
        %v537 = vunpack.c.l.b16 %v311
        %v538 = vunpack.c.l.b16 %v312
        %v539 = vunpack.c.l.b16 %v313
        %v540 = vunpack.c.l.b16 %v314
        %v541 = vunpack.c.l.b16 %v315
        %v542 = vunpack.c.l.b16 %v316
        %v543 = vunpack.c.l.b16 %v317
        %v544 = vunpack.c.l.b16 %v318
        %v545 = vunpack.c.l.b16 %v319
        %v546 = vunpack.c.l.b16 %v320
        %v547 = vunpack.c.l.b16 %v321
        %v548 = vunpack.c.l.b16 %v322
        %v549 = vunpack.c.l.b16 %v323
        %v550 = vunpack.c.l.b16 %v324
        %v551 = vpack.c.b16 %v520, %v519
        %v552 = vpack.c.b16 %v522, %v521
        %v553 = vpack.c.b16 %v524, %v523
        %v554 = vpack.c.b16 %v526, %v525
        %v555 = vpack.c.b16 %v528, %v527
        %v556 = vpack.c.b16 %v530, %v529
        %v557 = vpack.c.b16 %v532, %v531
        %v558 = vpack.c.b16 %v534, %v533
        %v559 = vpack.c.b16 %v536, %v535
        %v560 = vpack.c.b16 %v538, %v537
        %v561 = vpack.c.b16 %v540, %v539
        %v562 = vpack.c.b16 %v542, %v541
        %v563 = vpack.c.b16 %v544, %v543
        %v564 = vpack.c.b16 %v546, %v545
        %v565 = vpack.c.b16 %v548, %v547
        %v566 = vpack.c.b16 %v550, %v549
        %v583 = vunpack.c.l.b16 %v325
        %v584 = vunpack.c.l.b16 %v326
        %v585 = vunpack.c.l.b16 %v327
        %v586 = vunpack.c.l.b16 %v328
        %v587 = vunpack.c.l.b16 %v329
        %v588 = vunpack.c.l.b16 %v330
        %v589 = vunpack.c.l.b16 %v331
        %v590 = vunpack.c.l.b16 %v332
        %v591 = vunpack.c.l.b16 %v333
        %v592 = vunpack.c.l.b16 %v334
        %v593 = vunpack.c.l.b16 %v335
        %v594 = vunpack.c.l.b16 %v336
        %v595 = vunpack.c.l.b16 %v337
        %v596 = vunpack.c.l.b16 %v338
        %v597 = vunpack.c.l.b16 %v339
        %v598 = vunpack.c.l.b16 %v340
        %v599 = vpack.c.b16 %v583, %v583
        %v600 = vpack.c.b16 %v584, %v584
        %v601 = vpack.c.b16 %v585, %v585
        %v602 = vpack.c.b16 %v586, %v586
        %v603 = vpack.c.b16 %v587, %v587
        %v604 = vpack.c.b16 %v588, %v588
        %v605 = vpack.c.b16 %v589, %v589
        %v606 = vpack.c.b16 %v590, %v590
        %v607 = vpack.c.b16 %v591, %v591
        %v608 = vpack.c.b16 %v592, %v592
        %v609 = vpack.c.b16 %v593, %v593
        %v610 = vpack.c.b16 %v594, %v594
        %v611 = vpack.c.b16 %v595, %v595
        %v612 = vpack.c.b16 %v596, %v596
        %v613 = vpack.c.b16 %v597, %v597
        %v614 = vpack.c.b16 %v598, %v598
        %vm615 = vsmask.f32 7424
        %v617 = vshrl.u32 %v551, 16
        %v619 = vshll.u32 %v551, 16
        %v621 = vrot.slane %v619, 1
        %v622 = vor.u32 %v617, %v621
        %v624 = vshll.u32 %v599, 16
        %v626 = vrot.slane %v624, 1
        %v627 = vsel %vm615, %v622, %v626
        %v629 = vshrl.u32 %v552, 16
        %v631 = vshll.u32 %v552, 16
        %v633 = vrot.slane %v631, 1
        %v634 = vor.u32 %v629, %v633
        %v636 = vshll.u32 %v600, 16
        %v638 = vrot.slane %v636, 1
        %v639 = vsel %vm615, %v634, %v638
        %v641 = vshrl.u32 %v553, 16
        %v643 = vshll.u32 %v553, 16
        %v645 = vrot.slane %v643, 1
        %v646 = vor.u32 %v641, %v645
        %v648 = vshll.u32 %v601, 16
        %v650 = vrot.slane %v648, 1
        %v651 = vsel %vm615, %v646, %v650
        %v653 = vshrl.u32 %v554, 16
        %v655 = vshll.u32 %v554, 16
        %v657 = vrot.slane %v655, 1
        %v658 = vor.u32 %v653, %v657
        %v660 = vshll.u32 %v602, 16
        %v662 = vrot.slane %v660, 1
        %v663 = vsel %vm615, %v658, %v662
        %v665 = vshrl.u32 %v555, 16
        %v667 = vshll.u32 %v555, 16
        %v669 = vrot.slane %v667, 1
        %v670 = vor.u32 %v665, %v669
        %v672 = vshll.u32 %v603, 16
        %v674 = vrot.slane %v672, 1
        %v675 = vsel %vm615, %v670, %v674
        %v677 = vshrl.u32 %v556, 16
        %v679 = vshll.u32 %v556, 16
        %v681 = vrot.slane %v679, 1
        %v682 = vor.u32 %v677, %v681
        %v684 = vshll.u32 %v604, 16
        %v686 = vrot.slane %v684, 1
        %v687 = vsel %vm615, %v682, %v686
        %v689 = vshrl.u32 %v557, 16
        %v691 = vshll.u32 %v557, 16
        %v693 = vrot.slane %v691, 1
        %v694 = vor.u32 %v689, %v693
        %v696 = vshll.u32 %v605, 16
        %v698 = vrot.slane %v696, 1
        %v699 = vsel %vm615, %v694, %v698
        %v701 = vshrl.u32 %v558, 16
        %v703 = vshll.u32 %v558, 16
        %v705 = vrot.slane %v703, 1
        %v706 = vor.u32 %v701, %v705
        %v708 = vshll.u32 %v606, 16
        %v710 = vrot.slane %v708, 1
        %v711 = vsel %vm615, %v706, %v710
        %v713 = vshrl.u32 %v559, 16
        %v715 = vshll.u32 %v559, 16
        %v717 = vrot.slane %v715, 1
        %v718 = vor.u32 %v713, %v717
        %v720 = vshll.u32 %v607, 16
        %v722 = vrot.slane %v720, 1
        %v723 = vsel %vm615, %v718, %v722
        %v725 = vshrl.u32 %v560, 16
        %v727 = vshll.u32 %v560, 16
        %v729 = vrot.slane %v727, 1
        %v730 = vor.u32 %v725, %v729
        %v732 = vshll.u32 %v608, 16
        %v734 = vrot.slane %v732, 1
        %v735 = vsel %vm615, %v730, %v734
        %v737 = vshrl.u32 %v561, 16
        %v739 = vshll.u32 %v561, 16
        %v741 = vrot.slane %v739, 1
        %v742 = vor.u32 %v737, %v741
        %v744 = vshll.u32 %v609, 16
        %v746 = vrot.slane %v744, 1
        %v747 = vsel %vm615, %v742, %v746
        %v749 = vshrl.u32 %v562, 16
        %v751 = vshll.u32 %v562, 16
        %v753 = vrot.slane %v751, 1
        %v754 = vor.u32 %v749, %v753
        %v756 = vshll.u32 %v610, 16
        %v758 = vrot.slane %v756, 1
        %v759 = vsel %vm615, %v754, %v758
        %v761 = vshrl.u32 %v563, 16
        %v763 = vshll.u32 %v563, 16
        %v765 = vrot.slane %v763, 1
        %v766 = vor.u32 %v761, %v765
        %v768 = vshll.u32 %v611, 16
        %v770 = vrot.slane %v768, 1
        %v771 = vsel %vm615, %v766, %v770
        %v773 = vshrl.u32 %v564, 16
        %v775 = vshll.u32 %v564, 16
        %v777 = vrot.slane %v775, 1
        %v778 = vor.u32 %v773, %v777
        %v780 = vshll.u32 %v612, 16
        %v782 = vrot.slane %v780, 1
        %v783 = vsel %vm615, %v778, %v782
        %v785 = vshrl.u32 %v565, 16
        %v787 = vshll.u32 %v565, 16
        %v789 = vrot.slane %v787, 1
        %v790 = vor.u32 %v785, %v789
        %v792 = vshll.u32 %v613, 16
        %v794 = vrot.slane %v792, 1
        %v795 = vsel %vm615, %v790, %v794
        %v797 = vshrl.u32 %v566, 16
        %v799 = vshll.u32 %v566, 16
        %v801 = vrot.slane %v799, 1
        %v802 = vor.u32 %v797, %v801
        %v804 = vshll.u32 %v614, 16
        %v806 = vrot.slane %v804, 1
        %v807 = vsel %vm615, %v802, %v806
        %808 = vrot.lane.b32.xlu0 %v627, 4
        %v809 = vpop.permute.xlu0 %808
        %810 = vrot.lane.b32.xlu0 %v639, 4
        %v811 = vpop.permute.xlu0 %810
        %812 = vrot.lane.b32.xlu0 %v651, 4
        %v813 = vpop.permute.xlu0 %812
        %814 = vrot.lane.b32.xlu0 %v663, 4
        %v815 = vpop.permute.xlu0 %814
        %816 = vrot.lane.b32.xlu0 %v675, 4
        %v817 = vpop.permute.xlu0 %816
        %818 = vrot.lane.b32.xlu0 %v687, 4
        %v819 = vpop.permute.xlu0 %818
        %820 = vrot.lane.b32.xlu0 %v699, 4
        %v821 = vpop.permute.xlu0 %820
        %822 = vrot.lane.b32.xlu0 %v711, 4
        %v823 = vpop.permute.xlu0 %822
        %824 = vrot.lane.b32.xlu0 %v723, 4
        %v825 = vpop.permute.xlu0 %824
        %826 = vrot.lane.b32.xlu0 %v735, 4
        %v827 = vpop.permute.xlu0 %826
        %828 = vrot.lane.b32.xlu0 %v747, 4
        %v829 = vpop.permute.xlu0 %828
        %830 = vrot.lane.b32.xlu0 %v759, 4
        %v831 = vpop.permute.xlu0 %830
        %832 = vrot.lane.b32.xlu0 %v771, 4
        %v833 = vpop.permute.xlu0 %832
        %834 = vrot.lane.b32.xlu0 %v783, 4
        %v835 = vpop.permute.xlu0 %834
        %836 = vrot.lane.b32.xlu0 %v795, 4
        %v837 = vpop.permute.xlu0 %836
        %838 = vrot.lane.b32.xlu0 %v807, 4
        %v839 = vpop.permute.xlu0 %838
        %v856 = vunpack.c.l.b16 %v341
        %v857 = vunpack.c.l.b16 %v342
        %v858 = vunpack.c.l.b16 %v343
        %v859 = vunpack.c.l.b16 %v344
        %v860 = vunpack.c.l.b16 %v345
        %v861 = vunpack.c.l.b16 %v346
        %v862 = vunpack.c.l.b16 %v347
        %v863 = vunpack.c.l.b16 %v348
        %v864 = vunpack.c.l.b16 %v349
        %v865 = vunpack.c.l.b16 %v350
        %v866 = vunpack.c.l.b16 %v351
        %v867 = vunpack.c.l.b16 %v352
        %v868 = vunpack.c.l.b16 %v353
        %v869 = vunpack.c.l.b16 %v354
        %v870 = vunpack.c.l.b16 %v355
        %v871 = vunpack.c.l.b16 %v356
        %v872 = vpack.c.b16 %v520, %v856
        %v873 = vpack.c.b16 %v522, %v857
        %v874 = vpack.c.b16 %v524, %v858
        %v875 = vpack.c.b16 %v526, %v859
        %v876 = vpack.c.b16 %v528, %v860
        %v877 = vpack.c.b16 %v530, %v861
        %v878 = vpack.c.b16 %v532, %v862
        %v879 = vpack.c.b16 %v534, %v863
        %v880 = vpack.c.b16 %v536, %v864
        %v881 = vpack.c.b16 %v538, %v865
        %v882 = vpack.c.b16 %v540, %v866
        %v883 = vpack.c.b16 %v542, %v867
        %v884 = vpack.c.b16 %v544, %v868
        %v885 = vpack.c.b16 %v546, %v869
        %v886 = vpack.c.b16 %v548, %v870
        %v887 = vpack.c.b16 %v550, %v871
        %vm888 = vcmask 1046528
        %v889 = vrot.slane %v872, 1
        %v890 = vrot.slane %v599, 1
        %v891 = vsel %vm888, %v889, %v890
        %v892 = vrot.slane %v873, 1
        %v893 = vrot.slane %v600, 1
        %v894 = vsel %vm888, %v892, %v893
        %v895 = vrot.slane %v874, 1
        %v896 = vrot.slane %v601, 1
        %v897 = vsel %vm888, %v895, %v896
        %v898 = vrot.slane %v875, 1
        %v899 = vrot.slane %v602, 1
        %v900 = vsel %vm888, %v898, %v899
        %v901 = vrot.slane %v876, 1
        %v902 = vrot.slane %v603, 1
        %v903 = vsel %vm888, %v901, %v902
        %v904 = vrot.slane %v877, 1
        %v905 = vrot.slane %v604, 1
        %v906 = vsel %vm888, %v904, %v905
        %v907 = vrot.slane %v878, 1
        %v908 = vrot.slane %v605, 1
        %v909 = vsel %vm888, %v907, %v908
        %v910 = vrot.slane %v879, 1
        %v911 = vrot.slane %v606, 1
        %v912 = vsel %vm888, %v910, %v911
        %v913 = vrot.slane %v880, 1
        %v914 = vrot.slane %v607, 1
        %v915 = vsel %vm888, %v913, %v914
        %v916 = vrot.slane %v881, 1
        %v917 = vrot.slane %v608, 1
        %v918 = vsel %vm888, %v916, %v917
        %v919 = vrot.slane %v882, 1
        %v920 = vrot.slane %v609, 1
        %v921 = vsel %vm888, %v919, %v920
        %v922 = vrot.slane %v883, 1
        %v923 = vrot.slane %v610, 1
        %v924 = vsel %vm888, %v922, %v923
        %v925 = vrot.slane %v884, 1
        %v926 = vrot.slane %v611, 1
        %v927 = vsel %vm888, %v925, %v926
        %v928 = vrot.slane %v885, 1
        %v929 = vrot.slane %v612, 1
        %v930 = vsel %vm888, %v928, %v929
        %v931 = vrot.slane %v886, 1
        %v932 = vrot.slane %v613, 1
        %v933 = vsel %vm888, %v931, %v932
        %v934 = vrot.slane %v887, 1
        %v935 = vrot.slane %v614, 1
        %v936 = vsel %vm888, %v934, %v935
        %937 = vrot.lane.b32.xlu0 %v891, 8
        %v938 = vpop.permute.xlu0 %937
        %939 = vrot.lane.b32.xlu0 %v894, 8
        %v940 = vpop.permute.xlu0 %939
        %941 = vrot.lane.b32.xlu0 %v897, 8
        %v942 = vpop.permute.xlu0 %941
        %943 = vrot.lane.b32.xlu0 %v900, 8
        %v944 = vpop.permute.xlu0 %943
        %945 = vrot.lane.b32.xlu0 %v903, 8
        %v946 = vpop.permute.xlu0 %945
        %947 = vrot.lane.b32.xlu0 %v906, 8
        %v948 = vpop.permute.xlu0 %947
        %949 = vrot.lane.b32.xlu0 %v909, 8
        %v950 = vpop.permute.xlu0 %949
        %951 = vrot.lane.b32.xlu0 %v912, 8
        %v952 = vpop.permute.xlu0 %951
        %953 = vrot.lane.b32.xlu0 %v915, 8
        %v954 = vpop.permute.xlu0 %953
        %955 = vrot.lane.b32.xlu0 %v918, 8
        %v956 = vpop.permute.xlu0 %955
        %957 = vrot.lane.b32.xlu0 %v921, 8
        %v958 = vpop.permute.xlu0 %957
        %959 = vrot.lane.b32.xlu0 %v924, 8
        %v960 = vpop.permute.xlu0 %959
        %961 = vrot.lane.b32.xlu0 %v927, 8
        %v962 = vpop.permute.xlu0 %961
        %963 = vrot.lane.b32.xlu0 %v930, 8
        %v964 = vpop.permute.xlu0 %963
        %965 = vrot.lane.b32.xlu0 %v933, 8
        %v966 = vpop.permute.xlu0 %965
        %967 = vrot.lane.b32.xlu0 %v936, 8
        %v968 = vpop.permute.xlu0 %967
        %v1001 = vunpack.c.l.b16 %v358
        %v1002 = vunpack.c.l.b16 %v359
        %v1003 = vunpack.c.l.b16 %v360
        %v1004 = vunpack.c.l.b16 %v361
        %v1005 = vunpack.c.l.b16 %v362
        %v1006 = vunpack.c.l.b16 %v363
        %v1007 = vunpack.c.l.b16 %v364
        %v1008 = vunpack.c.l.b16 %v365
        %v1009 = vunpack.c.l.b16 %v366
        %v1010 = vunpack.c.l.b16 %v367
        %v1011 = vunpack.c.l.b16 %v368
        %v1012 = vunpack.c.l.b16 %v369
        %v1013 = vunpack.c.l.b16 %v370
        %v1014 = vunpack.c.l.b16 %v371
        %v1015 = vunpack.c.l.b16 %v372
        %v1016 = vunpack.c.l.b16 %v373
        %v1017 = vunpack.c.l.b16 %v374
        %v1018 = vunpack.c.l.b16 %v375
        %v1019 = vunpack.c.l.b16 %v376
        %v1020 = vunpack.c.l.b16 %v377
        %v1021 = vunpack.c.l.b16 %v378
        %v1022 = vunpack.c.l.b16 %v379
        %v1023 = vunpack.c.l.b16 %v380
        %v1024 = vunpack.c.l.b16 %v381
        %v1025 = vunpack.c.l.b16 %v382
        %v1026 = vunpack.c.l.b16 %v383
        %v1027 = vunpack.c.l.b16 %v384
        %v1028 = vunpack.c.l.b16 %v385
        %v1029 = vunpack.c.l.b16 %v386
        %v1030 = vunpack.c.l.b16 %v387
        %v1031 = vunpack.c.l.b16 %v388
        %v1032 = vunpack.c.l.b16 %v389
        %v1033 = vpack.c.b16 %v1002, %v1001
        %v1034 = vpack.c.b16 %v1004, %v1003
        %v1035 = vpack.c.b16 %v1006, %v1005
        %v1036 = vpack.c.b16 %v1008, %v1007
        %v1037 = vpack.c.b16 %v1010, %v1009
        %v1038 = vpack.c.b16 %v1012, %v1011
        %v1039 = vpack.c.b16 %v1014, %v1013
        %v1040 = vpack.c.b16 %v1016, %v1015
        %v1041 = vpack.c.b16 %v1018, %v1017
        %v1042 = vpack.c.b16 %v1020, %v1019
        %v1043 = vpack.c.b16 %v1022, %v1021
        %v1044 = vpack.c.b16 %v1024, %v1023
        %v1045 = vpack.c.b16 %v1026, %v1025
        %v1046 = vpack.c.b16 %v1028, %v1027
        %v1047 = vpack.c.b16 %v1030, %v1029
        %v1048 = vpack.c.b16 %v1032, %v1031
        %1049 = vrot.lane.b32.xlu0 %v1033, 12
        %v1050 = vpop.permute.xlu0 %1049
        %1051 = vrot.lane.b32.xlu0 %v1034, 12
        %v1052 = vpop.permute.xlu0 %1051
        %1053 = vrot.lane.b32.xlu0 %v1035, 12
        %v1054 = vpop.permute.xlu0 %1053
        %1055 = vrot.lane.b32.xlu0 %v1036, 12
        %v1056 = vpop.permute.xlu0 %1055
        %1057 = vrot.lane.b32.xlu0 %v1037, 12
        %v1058 = vpop.permute.xlu0 %1057
        %1059 = vrot.lane.b32.xlu0 %v1038, 12
        %v1060 = vpop.permute.xlu0 %1059
        %1061 = vrot.lane.b32.xlu0 %v1039, 12
        %v1062 = vpop.permute.xlu0 %1061
        %1063 = vrot.lane.b32.xlu0 %v1040, 12
        %v1064 = vpop.permute.xlu0 %1063
        %1065 = vrot.lane.b32.xlu0 %v1041, 12
        %v1066 = vpop.permute.xlu0 %1065
        %1067 = vrot.lane.b32.xlu0 %v1042, 12
        %v1068 = vpop.permute.xlu0 %1067
        %1069 = vrot.lane.b32.xlu0 %v1043, 12
        %v1070 = vpop.permute.xlu0 %1069
        %1071 = vrot.lane.b32.xlu0 %v1044, 12
        %v1072 = vpop.permute.xlu0 %1071
        %1073 = vrot.lane.b32.xlu0 %v1045, 12
        %v1074 = vpop.permute.xlu0 %1073
        %1075 = vrot.lane.b32.xlu0 %v1046, 12
        %v1076 = vpop.permute.xlu0 %1075
        %1077 = vrot.lane.b32.xlu0 %v1047, 12
        %v1078 = vpop.permute.xlu0 %1077
        %1079 = vrot.lane.b32.xlu0 %v1048, 12
        %v1080 = vpop.permute.xlu0 %1079
        %v1097 = vunpack.c.l.b16 %v390
        %v1098 = vunpack.c.l.b16 %v391
        %v1099 = vunpack.c.l.b16 %v392
        %v1100 = vunpack.c.l.b16 %v393
        %v1101 = vunpack.c.l.b16 %v394
        %v1102 = vunpack.c.l.b16 %v395
        %v1103 = vunpack.c.l.b16 %v396
        %v1104 = vunpack.c.l.b16 %v397
        %v1105 = vunpack.c.l.b16 %v398
        %v1106 = vunpack.c.l.b16 %v399
        %v1107 = vunpack.c.l.b16 %v400
        %v1108 = vunpack.c.l.b16 %v401
        %v1109 = vunpack.c.l.b16 %v402
        %v1110 = vunpack.c.l.b16 %v403
        %v1111 = vunpack.c.l.b16 %v404
        %v1112 = vunpack.c.l.b16 %v405
        %v1113 = vpack.c.b16 %v1097, %v1097
        %v1114 = vpack.c.b16 %v1098, %v1098
        %v1115 = vpack.c.b16 %v1099, %v1099
        %v1116 = vpack.c.b16 %v1100, %v1100
        %v1117 = vpack.c.b16 %v1101, %v1101
        %v1118 = vpack.c.b16 %v1102, %v1102
        %v1119 = vpack.c.b16 %v1103, %v1103
        %v1120 = vpack.c.b16 %v1104, %v1104
        %v1121 = vpack.c.b16 %v1105, %v1105
        %v1122 = vpack.c.b16 %v1106, %v1106
        %v1123 = vpack.c.b16 %v1107, %v1107
        %v1124 = vpack.c.b16 %v1108, %v1108
        %v1125 = vpack.c.b16 %v1109, %v1109
        %v1126 = vpack.c.b16 %v1110, %v1110
        %v1127 = vpack.c.b16 %v1111, %v1111
        %v1128 = vpack.c.b16 %v1112, %v1112
        %v1130 = vshrl.u32 %v1033, 16
        %v1132 = vshll.u32 %v1033, 16
        %v1134 = vrot.slane %v1132, 1
        %v1135 = vor.u32 %v1130, %v1134
        %v1137 = vshll.u32 %v1113, 16
        %v1139 = vrot.slane %v1137, 1
        %v1140 = vsel %vm615, %v1135, %v1139
        %v1142 = vshrl.u32 %v1034, 16
        %v1144 = vshll.u32 %v1034, 16
        %v1146 = vrot.slane %v1144, 1
        %v1147 = vor.u32 %v1142, %v1146
        %v1149 = vshll.u32 %v1114, 16
        %v1151 = vrot.slane %v1149, 1
        %v1152 = vsel %vm615, %v1147, %v1151
        %v1154 = vshrl.u32 %v1035, 16
        %v1156 = vshll.u32 %v1035, 16
        %v1158 = vrot.slane %v1156, 1
        %v1159 = vor.u32 %v1154, %v1158
        %v1161 = vshll.u32 %v1115, 16
        %v1163 = vrot.slane %v1161, 1
        %v1164 = vsel %vm615, %v1159, %v1163
        %v1166 = vshrl.u32 %v1036, 16
        %v1168 = vshll.u32 %v1036, 16
        %v1170 = vrot.slane %v1168, 1
        %v1171 = vor.u32 %v1166, %v1170
        %v1173 = vshll.u32 %v1116, 16
        %v1175 = vrot.slane %v1173, 1
        %v1176 = vsel %vm615, %v1171, %v1175
        %v1178 = vshrl.u32 %v1037, 16
        %v1180 = vshll.u32 %v1037, 16
        %v1182 = vrot.slane %v1180, 1
        %v1183 = vor.u32 %v1178, %v1182
        %v1185 = vshll.u32 %v1117, 16
        %v1187 = vrot.slane %v1185, 1
        %v1188 = vsel %vm615, %v1183, %v1187
        %v1190 = vshrl.u32 %v1038, 16
        %v1192 = vshll.u32 %v1038, 16
        %v1194 = vrot.slane %v1192, 1
        %v1195 = vor.u32 %v1190, %v1194
        %v1197 = vshll.u32 %v1118, 16
        %v1199 = vrot.slane %v1197, 1
        %v1200 = vsel %vm615, %v1195, %v1199
        %v1202 = vshrl.u32 %v1039, 16
        %v1204 = vshll.u32 %v1039, 16
        %v1206 = vrot.slane %v1204, 1
        %v1207 = vor.u32 %v1202, %v1206
        %v1209 = vshll.u32 %v1119, 16
        %v1211 = vrot.slane %v1209, 1
        %v1212 = vsel %vm615, %v1207, %v1211
        %v1214 = vshrl.u32 %v1040, 16
        %v1216 = vshll.u32 %v1040, 16
        %v1218 = vrot.slane %v1216, 1
        %v1219 = vor.u32 %v1214, %v1218
        %v1221 = vshll.u32 %v1120, 16
        %v1223 = vrot.slane %v1221, 1
        %v1224 = vsel %vm615, %v1219, %v1223
        %v1226 = vshrl.u32 %v1041, 16
        %v1228 = vshll.u32 %v1041, 16
        %v1230 = vrot.slane %v1228, 1
        %v1231 = vor.u32 %v1226, %v1230
        %v1233 = vshll.u32 %v1121, 16
        %v1235 = vrot.slane %v1233, 1
        %v1236 = vsel %vm615, %v1231, %v1235
        %v1238 = vshrl.u32 %v1042, 16
        %v1240 = vshll.u32 %v1042, 16
        %v1242 = vrot.slane %v1240, 1
        %v1243 = vor.u32 %v1238, %v1242
        %v1245 = vshll.u32 %v1122, 16
        %v1247 = vrot.slane %v1245, 1
        %v1248 = vsel %vm615, %v1243, %v1247
        %v1250 = vshrl.u32 %v1043, 16
        %v1252 = vshll.u32 %v1043, 16
        %v1254 = vrot.slane %v1252, 1
        %v1255 = vor.u32 %v1250, %v1254
        %v1257 = vshll.u32 %v1123, 16
        %v1259 = vrot.slane %v1257, 1
        %v1260 = vsel %vm615, %v1255, %v1259
        %v1262 = vshrl.u32 %v1044, 16
        %v1264 = vshll.u32 %v1044, 16
        %v1266 = vrot.slane %v1264, 1
        %v1267 = vor.u32 %v1262, %v1266
        %v1269 = vshll.u32 %v1124, 16
        %v1271 = vrot.slane %v1269, 1
        %v1272 = vsel %vm615, %v1267, %v1271
        %v1274 = vshrl.u32 %v1045, 16
        %v1276 = vshll.u32 %v1045, 16
        %v1278 = vrot.slane %v1276, 1
        %v1279 = vor.u32 %v1274, %v1278
        %v1281 = vshll.u32 %v1125, 16
        %v1283 = vrot.slane %v1281, 1
        %v1284 = vsel %vm615, %v1279, %v1283
        %v1286 = vshrl.u32 %v1046, 16
        %v1288 = vshll.u32 %v1046, 16
        %v1290 = vrot.slane %v1288, 1
        %v1291 = vor.u32 %v1286, %v1290
        %v1293 = vshll.u32 %v1126, 16
        %v1295 = vrot.slane %v1293, 1
        %v1296 = vsel %vm615, %v1291, %v1295
        %v1298 = vshrl.u32 %v1047, 16
        %v1300 = vshll.u32 %v1047, 16
        %v1302 = vrot.slane %v1300, 1
        %v1303 = vor.u32 %v1298, %v1302
        %v1305 = vshll.u32 %v1127, 16
        %v1307 = vrot.slane %v1305, 1
        %v1308 = vsel %vm615, %v1303, %v1307
        %v1310 = vshrl.u32 %v1048, 16
        %v1312 = vshll.u32 %v1048, 16
        %v1314 = vrot.slane %v1312, 1
        %v1315 = vor.u32 %v1310, %v1314
        %v1317 = vshll.u32 %v1128, 16
        %v1319 = vrot.slane %v1317, 1
        %v1320 = vsel %vm615, %v1315, %v1319
        %1321 = vrot.lane.b32.xlu0 %v1140, 16
        %v1322 = vpop.permute.xlu0 %1321
        %1323 = vrot.lane.b32.xlu0 %v1152, 16
        %v1324 = vpop.permute.xlu0 %1323
        %1325 = vrot.lane.b32.xlu0 %v1164, 16
        %v1326 = vpop.permute.xlu0 %1325
        %1327 = vrot.lane.b32.xlu0 %v1176, 16
        %v1328 = vpop.permute.xlu0 %1327
        %1329 = vrot.lane.b32.xlu0 %v1188, 16
        %v1330 = vpop.permute.xlu0 %1329
        %1331 = vrot.lane.b32.xlu0 %v1200, 16
        %v1332 = vpop.permute.xlu0 %1331
        %1333 = vrot.lane.b32.xlu0 %v1212, 16
        %v1334 = vpop.permute.xlu0 %1333
        %1335 = vrot.lane.b32.xlu0 %v1224, 16
        %v1336 = vpop.permute.xlu0 %1335
        %1337 = vrot.lane.b32.xlu0 %v1236, 16
        %v1338 = vpop.permute.xlu0 %1337
        %1339 = vrot.lane.b32.xlu0 %v1248, 16
        %v1340 = vpop.permute.xlu0 %1339
        %1341 = vrot.lane.b32.xlu0 %v1260, 16
        %v1342 = vpop.permute.xlu0 %1341
        %1343 = vrot.lane.b32.xlu0 %v1272, 16
        %v1344 = vpop.permute.xlu0 %1343
        %1345 = vrot.lane.b32.xlu0 %v1284, 16
        %v1346 = vpop.permute.xlu0 %1345
        %1347 = vrot.lane.b32.xlu0 %v1296, 16
        %v1348 = vpop.permute.xlu0 %1347
        %1349 = vrot.lane.b32.xlu0 %v1308, 16
        %v1350 = vpop.permute.xlu0 %1349
        %1351 = vrot.lane.b32.xlu0 %v1320, 16
        %v1352 = vpop.permute.xlu0 %1351
        %v1369 = vunpack.c.l.b16 %v406
        %v1370 = vunpack.c.l.b16 %v407
        %v1371 = vunpack.c.l.b16 %v408
        %v1372 = vunpack.c.l.b16 %v409
        %v1373 = vunpack.c.l.b16 %v410
        %v1374 = vunpack.c.l.b16 %v411
        %v1375 = vunpack.c.l.b16 %v412
        %v1376 = vunpack.c.l.b16 %v413
        %v1377 = vunpack.c.l.b16 %v414
        %v1378 = vunpack.c.l.b16 %v415
        %v1379 = vunpack.c.l.b16 %v416
        %v1380 = vunpack.c.l.b16 %v417
        %v1381 = vunpack.c.l.b16 %v418
        %v1382 = vunpack.c.l.b16 %v419
        %v1383 = vunpack.c.l.b16 %v420
        %v1384 = vunpack.c.l.b16 %v421
        %v1385 = vpack.c.b16 %v1002, %v1369
        %v1386 = vpack.c.b16 %v1004, %v1370
        %v1387 = vpack.c.b16 %v1006, %v1371
        %v1388 = vpack.c.b16 %v1008, %v1372
        %v1389 = vpack.c.b16 %v1010, %v1373
        %v1390 = vpack.c.b16 %v1012, %v1374
        %v1391 = vpack.c.b16 %v1014, %v1375
        %v1392 = vpack.c.b16 %v1016, %v1376
        %v1393 = vpack.c.b16 %v1018, %v1377
        %v1394 = vpack.c.b16 %v1020, %v1378
        %v1395 = vpack.c.b16 %v1022, %v1379
        %v1396 = vpack.c.b16 %v1024, %v1380
        %v1397 = vpack.c.b16 %v1026, %v1381
        %v1398 = vpack.c.b16 %v1028, %v1382
        %v1399 = vpack.c.b16 %v1030, %v1383
        %v1400 = vpack.c.b16 %v1032, %v1384
        %v1401 = vrot.slane %v1385, 1
        %v1402 = vrot.slane %v1113, 1
        %v1403 = vsel %vm888, %v1401, %v1402
        %v1404 = vrot.slane %v1386, 1
        %v1405 = vrot.slane %v1114, 1
        %v1406 = vsel %vm888, %v1404, %v1405
        %v1407 = vrot.slane %v1387, 1
        %v1408 = vrot.slane %v1115, 1
        %v1409 = vsel %vm888, %v1407, %v1408
        %v1410 = vrot.slane %v1388, 1
        %v1411 = vrot.slane %v1116, 1
        %v1412 = vsel %vm888, %v1410, %v1411
        %v1413 = vrot.slane %v1389, 1
        %v1414 = vrot.slane %v1117, 1
        %v1415 = vsel %vm888, %v1413, %v1414
        %v1416 = vrot.slane %v1390, 1
        %v1417 = vrot.slane %v1118, 1
        %v1418 = vsel %vm888, %v1416, %v1417
        %v1419 = vrot.slane %v1391, 1
        %v1420 = vrot.slane %v1119, 1
        %v1421 = vsel %vm888, %v1419, %v1420
        %v1422 = vrot.slane %v1392, 1
        %v1423 = vrot.slane %v1120, 1
        %v1424 = vsel %vm888, %v1422, %v1423
        %v1425 = vrot.slane %v1393, 1
        %v1426 = vrot.slane %v1121, 1
        %v1427 = vsel %vm888, %v1425, %v1426
        %v1428 = vrot.slane %v1394, 1
        %v1429 = vrot.slane %v1122, 1
        %v1430 = vsel %vm888, %v1428, %v1429
        %v1431 = vrot.slane %v1395, 1
        %v1432 = vrot.slane %v1123, 1
        %v1433 = vsel %vm888, %v1431, %v1432
        %v1434 = vrot.slane %v1396, 1
        %v1435 = vrot.slane %v1124, 1
        %v1436 = vsel %vm888, %v1434, %v1435
        %v1437 = vrot.slane %v1397, 1
        %v1438 = vrot.slane %v1125, 1
        %v1439 = vsel %vm888, %v1437, %v1438
        %v1440 = vrot.slane %v1398, 1
        %v1441 = vrot.slane %v1126, 1
        %v1442 = vsel %vm888, %v1440, %v1441
        %v1443 = vrot.slane %v1399, 1
        %v1444 = vrot.slane %v1127, 1
        %v1445 = vsel %vm888, %v1443, %v1444
        %v1446 = vrot.slane %v1400, 1
        %v1447 = vrot.slane %v1128, 1
        %v1448 = vsel %vm888, %v1446, %v1447
        %1449 = vrot.lane.b32.xlu0 %v1403, 20
        %v1450 = vpop.permute.xlu0 %1449
        %1451 = vrot.lane.b32.xlu0 %v1406, 20
        %v1452 = vpop.permute.xlu0 %1451
        %1453 = vrot.lane.b32.xlu0 %v1409, 20
        %v1454 = vpop.permute.xlu0 %1453
        %1455 = vrot.lane.b32.xlu0 %v1412, 20
        %v1456 = vpop.permute.xlu0 %1455
        %1457 = vrot.lane.b32.xlu0 %v1415, 20
        %v1458 = vpop.permute.xlu0 %1457
        %1459 = vrot.lane.b32.xlu0 %v1418, 20
        %v1460 = vpop.permute.xlu0 %1459
        %1461 = vrot.lane.b32.xlu0 %v1421, 20
        %v1462 = vpop.permute.xlu0 %1461
        %1463 = vrot.lane.b32.xlu0 %v1424, 20
        %v1464 = vpop.permute.xlu0 %1463
        %1465 = vrot.lane.b32.xlu0 %v1427, 20
        %v1466 = vpop.permute.xlu0 %1465
        %1467 = vrot.lane.b32.xlu0 %v1430, 20
        %v1468 = vpop.permute.xlu0 %1467
        %1469 = vrot.lane.b32.xlu0 %v1433, 20
        %v1470 = vpop.permute.xlu0 %1469
        %1471 = vrot.lane.b32.xlu0 %v1436, 20
        %v1472 = vpop.permute.xlu0 %1471
        %1473 = vrot.lane.b32.xlu0 %v1439, 20
        %v1474 = vpop.permute.xlu0 %1473
        %1475 = vrot.lane.b32.xlu0 %v1442, 20
        %v1476 = vpop.permute.xlu0 %1475
        %1477 = vrot.lane.b32.xlu0 %v1445, 20
        %v1478 = vpop.permute.xlu0 %1477
        %1479 = vrot.lane.b32.xlu0 %v1448, 20
        %v1480 = vpop.permute.xlu0 %1479
        %v1513 = vunpack.c.l.b16 %v423
        %v1514 = vunpack.c.l.b16 %v424
        %v1515 = vunpack.c.l.b16 %v425
        %v1516 = vunpack.c.l.b16 %v426
        %v1517 = vunpack.c.l.b16 %v427
        %v1518 = vunpack.c.l.b16 %v428
        %v1519 = vunpack.c.l.b16 %v429
        %v1520 = vunpack.c.l.b16 %v430
        %v1521 = vunpack.c.l.b16 %v431
        %v1522 = vunpack.c.l.b16 %v432
        %v1523 = vunpack.c.l.b16 %v433
        %v1524 = vunpack.c.l.b16 %v434
        %v1525 = vunpack.c.l.b16 %v435
        %v1526 = vunpack.c.l.b16 %v436
        %v1527 = vunpack.c.l.b16 %v437
        %v1528 = vunpack.c.l.b16 %v438
        %v1529 = vunpack.c.l.b16 %v439
        %v1530 = vunpack.c.l.b16 %v440
        %v1531 = vunpack.c.l.b16 %v441
        %v1532 = vunpack.c.l.b16 %v442
        %v1533 = vunpack.c.l.b16 %v443
        %v1534 = vunpack.c.l.b16 %v444
        %v1535 = vunpack.c.l.b16 %v445
        %v1536 = vunpack.c.l.b16 %v446
        %v1537 = vunpack.c.l.b16 %v447
        %v1538 = vunpack.c.l.b16 %v448
        %v1539 = vunpack.c.l.b16 %v449
        %v1540 = vunpack.c.l.b16 %v450
        %v1541 = vunpack.c.l.b16 %v451
        %v1542 = vunpack.c.l.b16 %v452
        %v1543 = vunpack.c.l.b16 %v453
        %v1544 = vunpack.c.l.b16 %v454
        %v1545 = vpack.c.b16 %v1514, %v1513
        %v1546 = vpack.c.b16 %v1516, %v1515
        %v1547 = vpack.c.b16 %v1518, %v1517
        %v1548 = vpack.c.b16 %v1520, %v1519
        %v1549 = vpack.c.b16 %v1522, %v1521
        %v1550 = vpack.c.b16 %v1524, %v1523
        %v1551 = vpack.c.b16 %v1526, %v1525
        %v1552 = vpack.c.b16 %v1528, %v1527
        %v1553 = vpack.c.b16 %v1530, %v1529
        %v1554 = vpack.c.b16 %v1532, %v1531
        %v1555 = vpack.c.b16 %v1534, %v1533
        %v1556 = vpack.c.b16 %v1536, %v1535
        %v1557 = vpack.c.b16 %v1538, %v1537
        %v1558 = vpack.c.b16 %v1540, %v1539
        %v1559 = vpack.c.b16 %v1542, %v1541
        %v1560 = vpack.c.b16 %v1544, %v1543
        %1561 = vrot.lane.b32.xlu0 %v1545, 24
        %v1562 = vpop.permute.xlu0 %1561
        %1563 = vrot.lane.b32.xlu0 %v1546, 24
        %v1564 = vpop.permute.xlu0 %1563
        %1565 = vrot.lane.b32.xlu0 %v1547, 24
        %v1566 = vpop.permute.xlu0 %1565
        %1567 = vrot.lane.b32.xlu0 %v1548, 24
        %v1568 = vpop.permute.xlu0 %1567
        %1569 = vrot.lane.b32.xlu0 %v1549, 24
        %v1570 = vpop.permute.xlu0 %1569
        %1571 = vrot.lane.b32.xlu0 %v1550, 24
        %v1572 = vpop.permute.xlu0 %1571
        %1573 = vrot.lane.b32.xlu0 %v1551, 24
        %v1574 = vpop.permute.xlu0 %1573
        %1575 = vrot.lane.b32.xlu0 %v1552, 24
        %v1576 = vpop.permute.xlu0 %1575
        %1577 = vrot.lane.b32.xlu0 %v1553, 24
        %v1578 = vpop.permute.xlu0 %1577
        %1579 = vrot.lane.b32.xlu0 %v1554, 24
        %v1580 = vpop.permute.xlu0 %1579
        %1581 = vrot.lane.b32.xlu0 %v1555, 24
        %v1582 = vpop.permute.xlu0 %1581
        %1583 = vrot.lane.b32.xlu0 %v1556, 24
        %v1584 = vpop.permute.xlu0 %1583
        %1585 = vrot.lane.b32.xlu0 %v1557, 24
        %v1586 = vpop.permute.xlu0 %1585
        %1587 = vrot.lane.b32.xlu0 %v1558, 24
        %v1588 = vpop.permute.xlu0 %1587
        %1589 = vrot.lane.b32.xlu0 %v1559, 24
        %v1590 = vpop.permute.xlu0 %1589
        %1591 = vrot.lane.b32.xlu0 %v1560, 24
        %v1592 = vpop.permute.xlu0 %1591
        %v1609 = vunpack.c.l.b16 %v455
        %v1610 = vunpack.c.l.b16 %v456
        %v1611 = vunpack.c.l.b16 %v457
        %v1612 = vunpack.c.l.b16 %v458
        %v1613 = vunpack.c.l.b16 %v459
        %v1614 = vunpack.c.l.b16 %v460
        %v1615 = vunpack.c.l.b16 %v461
        %v1616 = vunpack.c.l.b16 %v462
        %v1617 = vunpack.c.l.b16 %v463
        %v1618 = vunpack.c.l.b16 %v464
        %v1619 = vunpack.c.l.b16 %v465
        %v1620 = vunpack.c.l.b16 %v466
        %v1621 = vunpack.c.l.b16 %v467
        %v1622 = vunpack.c.l.b16 %v468
        %v1623 = vunpack.c.l.b16 %v469
        %v1624 = vunpack.c.l.b16 %v470
        %v1625 = vpack.c.b16 %v1609, %v1609
        %v1626 = vpack.c.b16 %v1610, %v1610
        %v1627 = vpack.c.b16 %v1611, %v1611
        %v1628 = vpack.c.b16 %v1612, %v1612
        %v1629 = vpack.c.b16 %v1613, %v1613
        %v1630 = vpack.c.b16 %v1614, %v1614
        %v1631 = vpack.c.b16 %v1615, %v1615
        %v1632 = vpack.c.b16 %v1616, %v1616
        %v1633 = vpack.c.b16 %v1617, %v1617
        %v1634 = vpack.c.b16 %v1618, %v1618
        %v1635 = vpack.c.b16 %v1619, %v1619
        %v1636 = vpack.c.b16 %v1620, %v1620
        %v1637 = vpack.c.b16 %v1621, %v1621
        %v1638 = vpack.c.b16 %v1622, %v1622
        %v1639 = vpack.c.b16 %v1623, %v1623
        %v1640 = vpack.c.b16 %v1624, %v1624
        %v1642 = vshrl.u32 %v1545, 16
        %v1644 = vshll.u32 %v1545, 16
        %v1646 = vrot.slane %v1644, 1
        %v1647 = vor.u32 %v1642, %v1646
        %v1649 = vshll.u32 %v1625, 16
        %v1651 = vrot.slane %v1649, 1
        %v1652 = vsel %vm615, %v1647, %v1651
        %v1654 = vshrl.u32 %v1546, 16
        %v1656 = vshll.u32 %v1546, 16
        %v1658 = vrot.slane %v1656, 1
        %v1659 = vor.u32 %v1654, %v1658
        %v1661 = vshll.u32 %v1626, 16
        %v1663 = vrot.slane %v1661, 1
        %v1664 = vsel %vm615, %v1659, %v1663
        %v1666 = vshrl.u32 %v1547, 16
        %v1668 = vshll.u32 %v1547, 16
        %v1670 = vrot.slane %v1668, 1
        %v1671 = vor.u32 %v1666, %v1670
        %v1673 = vshll.u32 %v1627, 16
        %v1675 = vrot.slane %v1673, 1
        %v1676 = vsel %vm615, %v1671, %v1675
        %v1678 = vshrl.u32 %v1548, 16
        %v1680 = vshll.u32 %v1548, 16
        %v1682 = vrot.slane %v1680, 1
        %v1683 = vor.u32 %v1678, %v1682
        %v1685 = vshll.u32 %v1628, 16
        %v1687 = vrot.slane %v1685, 1
        %v1688 = vsel %vm615, %v1683, %v1687
        %v1690 = vshrl.u32 %v1549, 16
        %v1692 = vshll.u32 %v1549, 16
        %v1694 = vrot.slane %v1692, 1
        %v1695 = vor.u32 %v1690, %v1694
        %v1697 = vshll.u32 %v1629, 16
        %v1699 = vrot.slane %v1697, 1
        %v1700 = vsel %vm615, %v1695, %v1699
        %v1702 = vshrl.u32 %v1550, 16
        %v1704 = vshll.u32 %v1550, 16
        %v1706 = vrot.slane %v1704, 1
        %v1707 = vor.u32 %v1702, %v1706
        %v1709 = vshll.u32 %v1630, 16
        %v1711 = vrot.slane %v1709, 1
        %v1712 = vsel %vm615, %v1707, %v1711
        %v1714 = vshrl.u32 %v1551, 16
        %v1716 = vshll.u32 %v1551, 16
        %v1718 = vrot.slane %v1716, 1
        %v1719 = vor.u32 %v1714, %v1718
        %v1721 = vshll.u32 %v1631, 16
        %v1723 = vrot.slane %v1721, 1
        %v1724 = vsel %vm615, %v1719, %v1723
        %v1726 = vshrl.u32 %v1552, 16
        %v1728 = vshll.u32 %v1552, 16
        %v1730 = vrot.slane %v1728, 1
        %v1731 = vor.u32 %v1726, %v1730
        %v1733 = vshll.u32 %v1632, 16
        %v1735 = vrot.slane %v1733, 1
        %v1736 = vsel %vm615, %v1731, %v1735
        %v1738 = vshrl.u32 %v1553, 16
        %v1740 = vshll.u32 %v1553, 16
        %v1742 = vrot.slane %v1740, 1
        %v1743 = vor.u32 %v1738, %v1742
        %v1745 = vshll.u32 %v1633, 16
        %v1747 = vrot.slane %v1745, 1
        %v1748 = vsel %vm615, %v1743, %v1747
        %v1750 = vshrl.u32 %v1554, 16
        %v1752 = vshll.u32 %v1554, 16
        %v1754 = vrot.slane %v1752, 1
        %v1755 = vor.u32 %v1750, %v1754
        %v1757 = vshll.u32 %v1634, 16
        %v1759 = vrot.slane %v1757, 1
        %v1760 = vsel %vm615, %v1755, %v1759
        %v1762 = vshrl.u32 %v1555, 16
        %v1764 = vshll.u32 %v1555, 16
        %v1766 = vrot.slane %v1764, 1
        %v1767 = vor.u32 %v1762, %v1766
        %v1769 = vshll.u32 %v1635, 16
        %v1771 = vrot.slane %v1769, 1
        %v1772 = vsel %vm615, %v1767, %v1771
        %v1774 = vshrl.u32 %v1556, 16
        %v1776 = vshll.u32 %v1556, 16
        %v1778 = vrot.slane %v1776, 1
        %v1779 = vor.u32 %v1774, %v1778
        %v1781 = vshll.u32 %v1636, 16
        %v1783 = vrot.slane %v1781, 1
        %v1784 = vsel %vm615, %v1779, %v1783
        %v1786 = vshrl.u32 %v1557, 16
        %v1788 = vshll.u32 %v1557, 16
        %v1790 = vrot.slane %v1788, 1
        %v1791 = vor.u32 %v1786, %v1790
        %v1793 = vshll.u32 %v1637, 16
        %v1795 = vrot.slane %v1793, 1
        %v1796 = vsel %vm615, %v1791, %v1795
        %v1798 = vshrl.u32 %v1558, 16
        %v1800 = vshll.u32 %v1558, 16
        %v1802 = vrot.slane %v1800, 1
        %v1803 = vor.u32 %v1798, %v1802
        %v1805 = vshll.u32 %v1638, 16
        %v1807 = vrot.slane %v1805, 1
        %v1808 = vsel %vm615, %v1803, %v1807
        %v1810 = vshrl.u32 %v1559, 16
        %v1812 = vshll.u32 %v1559, 16
        %v1814 = vrot.slane %v1812, 1
        %v1815 = vor.u32 %v1810, %v1814
        %v1817 = vshll.u32 %v1639, 16
        %v1819 = vrot.slane %v1817, 1
        %v1820 = vsel %vm615, %v1815, %v1819
        %v1822 = vshrl.u32 %v1560, 16
        %v1824 = vshll.u32 %v1560, 16
        %v1826 = vrot.slane %v1824, 1
        %v1827 = vor.u32 %v1822, %v1826
        %v1829 = vshll.u32 %v1640, 16
        %v1831 = vrot.slane %v1829, 1
        %v1832 = vsel %vm615, %v1827, %v1831
        %1833 = vrot.lane.b32.xlu0 %v1652, 28
        %v1834 = vpop.permute.xlu0 %1833
        %1835 = vrot.lane.b32.xlu0 %v1664, 28
        %v1836 = vpop.permute.xlu0 %1835
        %1837 = vrot.lane.b32.xlu0 %v1676, 28
        %v1838 = vpop.permute.xlu0 %1837
        %1839 = vrot.lane.b32.xlu0 %v1688, 28
        %v1840 = vpop.permute.xlu0 %1839
        %1841 = vrot.lane.b32.xlu0 %v1700, 28
        %v1842 = vpop.permute.xlu0 %1841
        %1843 = vrot.lane.b32.xlu0 %v1712, 28
        %v1844 = vpop.permute.xlu0 %1843
        %1845 = vrot.lane.b32.xlu0 %v1724, 28
        %v1846 = vpop.permute.xlu0 %1845
        %1847 = vrot.lane.b32.xlu0 %v1736, 28
        %v1848 = vpop.permute.xlu0 %1847
        %1849 = vrot.lane.b32.xlu0 %v1748, 28
        %v1850 = vpop.permute.xlu0 %1849
        %1851 = vrot.lane.b32.xlu0 %v1760, 28
        %v1852 = vpop.permute.xlu0 %1851
        %1853 = vrot.lane.b32.xlu0 %v1772, 28
        %v1854 = vpop.permute.xlu0 %1853
        %1855 = vrot.lane.b32.xlu0 %v1784, 28
        %v1856 = vpop.permute.xlu0 %1855
        %1857 = vrot.lane.b32.xlu0 %v1796, 28
        %v1858 = vpop.permute.xlu0 %1857
        %1859 = vrot.lane.b32.xlu0 %v1808, 28
        %v1860 = vpop.permute.xlu0 %1859
        %1861 = vrot.lane.b32.xlu0 %v1820, 28
        %v1862 = vpop.permute.xlu0 %1861
        %1863 = vrot.lane.b32.xlu0 %v1832, 28
        %v1864 = vpop.permute.xlu0 %1863
        %v1881 = vunpack.c.l.b16 %v471
        %v1882 = vunpack.c.l.b16 %v472
        %v1883 = vunpack.c.l.b16 %v473
        %v1884 = vunpack.c.l.b16 %v474
        %v1885 = vunpack.c.l.b16 %v475
        %v1886 = vunpack.c.l.b16 %v476
        %v1887 = vunpack.c.l.b16 %v477
        %v1888 = vunpack.c.l.b16 %v478
        %v1889 = vunpack.c.l.b16 %v479
        %v1890 = vunpack.c.l.b16 %v480
        %v1891 = vunpack.c.l.b16 %v481
        %v1892 = vunpack.c.l.b16 %v482
        %v1893 = vunpack.c.l.b16 %v483
        %v1894 = vunpack.c.l.b16 %v484
        %v1895 = vunpack.c.l.b16 %v485
        %v1896 = vunpack.c.l.b16 %v486
        %v1897 = vpack.c.b16 %v1514, %v1881
        %v1898 = vpack.c.b16 %v1516, %v1882
        %v1899 = vpack.c.b16 %v1518, %v1883
        %v1900 = vpack.c.b16 %v1520, %v1884
        %v1901 = vpack.c.b16 %v1522, %v1885
        %v1902 = vpack.c.b16 %v1524, %v1886
        %v1903 = vpack.c.b16 %v1526, %v1887
        %v1904 = vpack.c.b16 %v1528, %v1888
        %v1905 = vpack.c.b16 %v1530, %v1889
        %v1906 = vpack.c.b16 %v1532, %v1890
        %v1907 = vpack.c.b16 %v1534, %v1891
        %v1908 = vpack.c.b16 %v1536, %v1892
        %v1909 = vpack.c.b16 %v1538, %v1893
        %v1910 = vpack.c.b16 %v1540, %v1894
        %v1911 = vpack.c.b16 %v1542, %v1895
        %v1912 = vpack.c.b16 %v1544, %v1896
        %v1913 = vrot.slane %v1897, 1
        %v1914 = vrot.slane %v1625, 1
        %v1915 = vsel %vm888, %v1913, %v1914
        %v1916 = vrot.slane %v1898, 1
        %v1917 = vrot.slane %v1626, 1
        %v1918 = vsel %vm888, %v1916, %v1917
        %v1919 = vrot.slane %v1899, 1
        %v1920 = vrot.slane %v1627, 1
        %v1921 = vsel %vm888, %v1919, %v1920
        %v1922 = vrot.slane %v1900, 1
        %v1923 = vrot.slane %v1628, 1
        %v1924 = vsel %vm888, %v1922, %v1923
        %v1925 = vrot.slane %v1901, 1
        %v1926 = vrot.slane %v1629, 1
        %v1927 = vsel %vm888, %v1925, %v1926
        %v1928 = vrot.slane %v1902, 1
        %v1929 = vrot.slane %v1630, 1
        %v1930 = vsel %vm888, %v1928, %v1929
        %v1931 = vrot.slane %v1903, 1
        %v1932 = vrot.slane %v1631, 1
        %v1933 = vsel %vm888, %v1931, %v1932
        %v1934 = vrot.slane %v1904, 1
        %v1935 = vrot.slane %v1632, 1
        %v1936 = vsel %vm888, %v1934, %v1935
        %v1937 = vrot.slane %v1905, 1
        %v1938 = vrot.slane %v1633, 1
        %v1939 = vsel %vm888, %v1937, %v1938
        %v1940 = vrot.slane %v1906, 1
        %v1941 = vrot.slane %v1634, 1
        %v1942 = vsel %vm888, %v1940, %v1941
        %v1943 = vrot.slane %v1907, 1
        %v1944 = vrot.slane %v1635, 1
        %v1945 = vsel %vm888, %v1943, %v1944
        %v1946 = vrot.slane %v1908, 1
        %v1947 = vrot.slane %v1636, 1
        %v1948 = vsel %vm888, %v1946, %v1947
        %v1949 = vrot.slane %v1909, 1
        %v1950 = vrot.slane %v1637, 1
        %v1951 = vsel %vm888, %v1949, %v1950
        %v1952 = vrot.slane %v1910, 1
        %v1953 = vrot.slane %v1638, 1
        %v1954 = vsel %vm888, %v1952, %v1953
        %v1955 = vrot.slane %v1911, 1
        %v1956 = vrot.slane %v1639, 1
        %v1957 = vsel %vm888, %v1955, %v1956
        %v1958 = vrot.slane %v1912, 1
        %v1959 = vrot.slane %v1640, 1
        %v1960 = vsel %vm888, %v1958, %v1959
        %1961 = vrot.lane.b32.xlu0 %v1915, 32
        %v1962 = vpop.permute.xlu0 %1961
        %1963 = vrot.lane.b32.xlu0 %v1918, 32
        %v1964 = vpop.permute.xlu0 %1963
        %1965 = vrot.lane.b32.xlu0 %v1921, 32
        %v1966 = vpop.permute.xlu0 %1965
        %1967 = vrot.lane.b32.xlu0 %v1924, 32
        %v1968 = vpop.permute.xlu0 %1967
        %1969 = vrot.lane.b32.xlu0 %v1927, 32
        %v1970 = vpop.permute.xlu0 %1969
        %1971 = vrot.lane.b32.xlu0 %v1930, 32
        %v1972 = vpop.permute.xlu0 %1971
        %1973 = vrot.lane.b32.xlu0 %v1933, 32
        %v1974 = vpop.permute.xlu0 %1973
        %1975 = vrot.lane.b32.xlu0 %v1936, 32
        %v1976 = vpop.permute.xlu0 %1975
        %1977 = vrot.lane.b32.xlu0 %v1939, 32
        %v1978 = vpop.permute.xlu0 %1977
        %1979 = vrot.lane.b32.xlu0 %v1942, 32
        %v1980 = vpop.permute.xlu0 %1979
        %1981 = vrot.lane.b32.xlu0 %v1945, 32
        %v1982 = vpop.permute.xlu0 %1981
        %1983 = vrot.lane.b32.xlu0 %v1948, 32
        %v1984 = vpop.permute.xlu0 %1983
        %1985 = vrot.lane.b32.xlu0 %v1951, 32
        %v1986 = vpop.permute.xlu0 %1985
        %1987 = vrot.lane.b32.xlu0 %v1954, 32
        %v1988 = vpop.permute.xlu0 %1987
        %1989 = vrot.lane.b32.xlu0 %v1957, 32
        %v1990 = vpop.permute.xlu0 %1989
        %1991 = vrot.lane.b32.xlu0 %v1960, 32
        %v1992 = vpop.permute.xlu0 %1991
        %vm1993 = vcmask 31744
        %v1995 = vsel %vm1993, %v551, %v809
        %v1997 = vsel %vm1993, %v552, %v811
        %v1999 = vsel %vm1993, %v553, %v813
        %v2001 = vsel %vm1993, %v554, %v815
        %v2003 = vsel %vm1993, %v555, %v817
        %v2005 = vsel %vm1993, %v556, %v819
        %v2007 = vsel %vm1993, %v557, %v821
        %v2009 = vsel %vm1993, %v558, %v823
        %v2011 = vsel %vm1993, %v559, %v825
        %v2013 = vsel %vm1993, %v560, %v827
        %v2015 = vsel %vm1993, %v561, %v829
        %v2017 = vsel %vm1993, %v562, %v831
        %v2019 = vsel %vm1993, %v563, %v833
        %v2021 = vsel %vm1993, %v564, %v835
        %v2023 = vsel %vm1993, %v565, %v837
        %v2025 = vsel %vm1993, %v566, %v839
        %vm2026 = vcmask 64512
        %v2028 = vsel %vm2026, %v1995, %v938
        %v2030 = vsel %vm2026, %v1997, %v940
        %v2032 = vsel %vm2026, %v1999, %v942
        %v2034 = vsel %vm2026, %v2001, %v944
        %v2036 = vsel %vm2026, %v2003, %v946
        %v2038 = vsel %vm2026, %v2005, %v948
        %v2040 = vsel %vm2026, %v2007, %v950
        %v2042 = vsel %vm2026, %v2009, %v952
        %v2044 = vsel %vm2026, %v2011, %v954
        %v2046 = vsel %vm2026, %v2013, %v956
        %v2048 = vsel %vm2026, %v2015, %v958
        %v2050 = vsel %vm2026, %v2017, %v960
        %v2052 = vsel %vm2026, %v2019, %v962
        %v2054 = vsel %vm2026, %v2021, %v964
        %v2056 = vsel %vm2026, %v2023, %v966
        %v2058 = vsel %vm2026, %v2025, %v968
        %vm2059 = vcmask 97280
        %v2061 = vsel %vm2059, %v2028, %v1050
        %v2063 = vsel %vm2059, %v2030, %v1052
        %v2065 = vsel %vm2059, %v2032, %v1054
        %v2067 = vsel %vm2059, %v2034, %v1056
        %v2069 = vsel %vm2059, %v2036, %v1058
        %v2071 = vsel %vm2059, %v2038, %v1060
        %v2073 = vsel %vm2059, %v2040, %v1062
        %v2075 = vsel %vm2059, %v2042, %v1064
        %v2077 = vsel %vm2059, %v2044, %v1066
        %v2079 = vsel %vm2059, %v2046, %v1068
        %v2081 = vsel %vm2059, %v2048, %v1070
        %v2083 = vsel %vm2059, %v2050, %v1072
        %v2085 = vsel %vm2059, %v2052, %v1074
        %v2087 = vsel %vm2059, %v2054, %v1076
        %v2089 = vsel %vm2059, %v2056, %v1078
        %v2091 = vsel %vm2059, %v2058, %v1080
        %vm2092 = vcmask 130048
        %v2094 = vsel %vm2092, %v2061, %v1322
        %v2096 = vsel %vm2092, %v2063, %v1324
        %v2098 = vsel %vm2092, %v2065, %v1326
        %v2100 = vsel %vm2092, %v2067, %v1328
        %v2102 = vsel %vm2092, %v2069, %v1330
        %v2104 = vsel %vm2092, %v2071, %v1332
        %v2106 = vsel %vm2092, %v2073, %v1334
        %v2108 = vsel %vm2092, %v2075, %v1336
        %v2110 = vsel %vm2092, %v2077, %v1338
        %v2112 = vsel %vm2092, %v2079, %v1340
        %v2114 = vsel %vm2092, %v2081, %v1342
        %v2116 = vsel %vm2092, %v2083, %v1344
        %v2118 = vsel %vm2092, %v2085, %v1346
        %v2120 = vsel %vm2092, %v2087, %v1348
        %v2122 = vsel %vm2092, %v2089, %v1350
        %v2124 = vsel %vm2092, %v2091, %v1352
        %vm2125 = vcmask 162816
        %v2127 = vsel %vm2125, %v2094, %v1450
        %v2129 = vsel %vm2125, %v2096, %v1452
        %v2131 = vsel %vm2125, %v2098, %v1454
        %v2133 = vsel %vm2125, %v2100, %v1456
        %v2135 = vsel %vm2125, %v2102, %v1458
        %v2137 = vsel %vm2125, %v2104, %v1460
        %v2139 = vsel %vm2125, %v2106, %v1462
        %v2141 = vsel %vm2125, %v2108, %v1464
        %v2143 = vsel %vm2125, %v2110, %v1466
        %v2145 = vsel %vm2125, %v2112, %v1468
        %v2147 = vsel %vm2125, %v2114, %v1470
        %v2149 = vsel %vm2125, %v2116, %v1472
        %v2151 = vsel %vm2125, %v2118, %v1474
        %v2153 = vsel %vm2125, %v2120, %v1476
        %v2155 = vsel %vm2125, %v2122, %v1478
        %v2157 = vsel %vm2125, %v2124, %v1480
        %vm2158 = vcmask 195584
        %v2160 = vsel %vm2158, %v2127, %v1562
        %v2162 = vsel %vm2158, %v2129, %v1564
        %v2164 = vsel %vm2158, %v2131, %v1566
        %v2166 = vsel %vm2158, %v2133, %v1568
        %v2168 = vsel %vm2158, %v2135, %v1570
        %v2170 = vsel %vm2158, %v2137, %v1572
        %v2172 = vsel %vm2158, %v2139, %v1574
        %v2174 = vsel %vm2158, %v2141, %v1576
        %v2176 = vsel %vm2158, %v2143, %v1578
        %v2178 = vsel %vm2158, %v2145, %v1580
        %v2180 = vsel %vm2158, %v2147, %v1582
        %v2182 = vsel %vm2158, %v2149, %v1584
        %v2184 = vsel %vm2158, %v2151, %v1586
        %v2186 = vsel %vm2158, %v2153, %v1588
        %v2188 = vsel %vm2158, %v2155, %v1590
        %v2190 = vsel %vm2158, %v2157, %v1592
        %vm2191 = vcmask 228352
        %v2193 = vsel %vm2191, %v2160, %v1834
        %v2195 = vsel %vm2191, %v2162, %v1836
        %v2197 = vsel %vm2191, %v2164, %v1838
        %v2199 = vsel %vm2191, %v2166, %v1840
        %v2201 = vsel %vm2191, %v2168, %v1842
        %v2203 = vsel %vm2191, %v2170, %v1844
        %v2205 = vsel %vm2191, %v2172, %v1846
        %v2207 = vsel %vm2191, %v2174, %v1848
        %v2209 = vsel %vm2191, %v2176, %v1850
        %v2211 = vsel %vm2191, %v2178, %v1852
        %v2213 = vsel %vm2191, %v2180, %v1854
        %v2215 = vsel %vm2191, %v2182, %v1856
        %v2217 = vsel %vm2191, %v2184, %v1858
        %v2219 = vsel %vm2191, %v2186, %v1860
        %v2221 = vsel %vm2191, %v2188, %v1862
        %v2223 = vsel %vm2191, %v2190, %v1864
        %vm2224 = vcmask 261120
        %v2226 = vsel %vm2224, %v2193, %v1962
        %v2228 = vsel %vm2224, %v2195, %v1964
        %v2230 = vsel %vm2224, %v2197, %v1966
        %v2232 = vsel %vm2224, %v2199, %v1968
        %v2234 = vsel %vm2224, %v2201, %v1970
        %v2236 = vsel %vm2224, %v2203, %v1972
        %v2238 = vsel %vm2224, %v2205, %v1974
        %v2240 = vsel %vm2224, %v2207, %v1976
        %v2242 = vsel %vm2224, %v2209, %v1978
        %v2244 = vsel %vm2224, %v2211, %v1980
        %v2246 = vsel %vm2224, %v2213, %v1982
        %v2248 = vsel %vm2224, %v2215, %v1984
        %v2250 = vsel %vm2224, %v2217, %v1986
        %v2252 = vsel %vm2224, %v2219, %v1988
        %v2254 = vsel %vm2224, %v2221, %v1990
        %v2256 = vsel %vm2224, %v2223, %v1992
        %v2257 = vld [vmem:[%s1] sm:$0xf]
        %v2258 = vld [vmem:[%s1 + $0x4] sm:$0xf]
        %v2259 = vld [vmem:[%s1 + $0x8] sm:$0xf]
        %v2260 = vld [vmem:[%s1 + $0xc] sm:$0xf]
        %v2261 = vld [vmem:[%s1 + $0x10] sm:$0x3]
        %v2267 = vunpack.c.l.b16 %v2257
        %v2268 = vunpack.c.l.b16 %v2258
        %v2269 = vunpack.c.l.b16 %v2259
        %v2270 = vunpack.c.l.b16 %v2260
        %v2271 = vunpack.c.l.b16 %v2261
        %v2272 = vpack.c.b16 %v2268, %v2267
        %v2273 = vpack.c.b16 %v2270, %v2269
        %v2274 = vpack.c.b16 %v2271, %v2271
        %vm2277 = vcmask 293888
        %v2278 = vsel %vm2277, %v2226, 0
        %v2280 = vsel %vm2277, %v2228, 0
        %v2282 = vsel %vm2277, %v2230, 0
        %v2284 = vsel %vm2277, %v2232, 0
        %v2286 = vsel %vm2277, %v2234, 0
        %v2288 = vsel %vm2277, %v2236, 0
        %v2290 = vsel %vm2277, %v2238, 0
        %v2292 = vsel %vm2277, %v2240, 0
        %v2294 = vsel %vm2277, %v2242, 0
        %v2296 = vsel %vm2277, %v2244, 0
        %v2298 = vsel %vm2277, %v2246, 0
        %v2300 = vsel %vm2277, %v2248, 0
        %v2302 = vsel %vm2277, %v2250, 0
        %v2304 = vsel %vm2277, %v2252, 0
        %v2306 = vsel %vm2277, %v2254, 0
        %v2308 = vsel %vm2277, %v2256, 0
        %vm2310 = vcmask 1041408
        %v2312 = vsel %vm2310, %v2274, 0
        %2314 = vmatprep.subr.bf16.mxu0 0
        %2315 = vmatpush1.bf16.msra.mxu0 0
        %2316 = vmatprep.subr.bf16.mxu0 0
        %2317 = vmatpush1.bf16.msra.mxu0 0
        %2318 = vmatprep.subr.bf16.mxu0 0
        %2319 = vmatpush1.bf16.msra.mxu0 0
        %2320 = vmatprep.subr.bf16.mxu0 0
        %2321 = vmatpush1.bf16.msra.mxu0 0
        %2322 = vmatprep.subr.bf16.mxu0 0
        %2323 = vmatpush1.bf16.msra.mxu0 0
        %2324 = vmatprep.subr.bf16.mxu0 0
        %2325 = vmatpush1.bf16.msra.mxu0 %v2312
        %2326 = vmatprep.subr.bf16.mxu0 0
        %2327 = vmatpush1.bf16.msra.mxu0 %v2273
        %2328 = vmatprep.subr.bf16.mxu0 0
        %2329 = vmatpush1.bf16.msra.mxu0 %v2272
        %2330 = vmatprep.subr.bf16.mxu0 0
        %2331 = vmatpush2.bf16.msra.mxu0 0
        %2332 = vmatprep.subr.bf16.mxu0 0
        %2333 = vmatpush2.bf16.msra.mxu0 0
        %2334 = vmatprep.subr.bf16.mxu0 0
        %2335 = vmatpush2.bf16.msra.mxu0 0
        %2336 = vmatprep.subr.bf16.mxu0 0
        %2337 = vmatpush2.bf16.msra.mxu0 0
        %2338 = vmatprep.subr.bf16.mxu0 0
        %2339 = vmatpush2.bf16.msra.mxu0 0
        %2340 = vmatprep.subr.bf16.mxu0 0
        %2341 = vmatpush2.bf16.msra.mxu0 0
        %2342 = vmatprep.subr.bf16.mxu0 0
        %2343 = vmatpush2.bf16.msra.mxu0 0
        %2344 = vmatprep.subr.bf16.mxu0 0
        %2345 = vmatpush2.bf16.msra.mxu0 0
        %2346 = vmatprep.mubr.bf16.mxu0 0
        %2347 = vmatmul.mubr.bf16.gmra.mxu0 %v2278
        %v2348 = vpop.f32.mrf.mxu0
        %v2349 = vadd.f32 0.0, %v2348
        %v2350 = vpop.f32.mrf.mxu0
        %v2351 = vpop.f32.mrf.mxu0
        %v2352 = vadd.f32 0.0, %v2351
        %v2353 = vpop.f32.mrf.mxu0
        %2354 = vmatprep.mubr.bf16.mxu0 0
        %2355 = vmatmul.mubr.bf16.gmra.mxu0 %v2280
        %v2356 = vpop.f32.mrf.mxu0
        %v2357 = vadd.f32 0.0, %v2356
        %v2358 = vpop.f32.mrf.mxu0
        %v2359 = vpop.f32.mrf.mxu0
        %v2360 = vadd.f32 0.0, %v2359
        %v2361 = vpop.f32.mrf.mxu0
        %2362 = vmatprep.mubr.bf16.mxu0 0
        %2363 = vmatmul.mubr.bf16.gmra.mxu0 %v2282
        %v2364 = vpop.f32.mrf.mxu0
        %v2365 = vadd.f32 0.0, %v2364
        %v2366 = vpop.f32.mrf.mxu0
        %v2367 = vpop.f32.mrf.mxu0
        %v2368 = vadd.f32 0.0, %v2367
        %v2369 = vpop.f32.mrf.mxu0
        %2370 = vmatprep.mubr.bf16.mxu0 0
        %2371 = vmatmul.mubr.bf16.gmra.mxu0 %v2284
        %v2372 = vpop.f32.mrf.mxu0
        %v2373 = vadd.f32 0.0, %v2372
        %v2374 = vpop.f32.mrf.mxu0
        %v2375 = vpop.f32.mrf.mxu0
        %v2376 = vadd.f32 0.0, %v2375
        %v2377 = vpop.f32.mrf.mxu0
        %2378 = vmatprep.mubr.bf16.mxu0 0
        %2379 = vmatmul.mubr.bf16.gmra.mxu0 %v2286
        %v2380 = vpop.f32.mrf.mxu0
        %v2381 = vadd.f32 0.0, %v2380
        %v2382 = vpop.f32.mrf.mxu0
        %v2383 = vpop.f32.mrf.mxu0
        %v2384 = vadd.f32 0.0, %v2383
        %v2385 = vpop.f32.mrf.mxu0
        %2386 = vmatprep.mubr.bf16.mxu0 0
        %2387 = vmatmul.mubr.bf16.gmra.mxu0 %v2288
        %v2388 = vpop.f32.mrf.mxu0
        %v2389 = vadd.f32 0.0, %v2388
        %v2390 = vpop.f32.mrf.mxu0
        %v2391 = vpop.f32.mrf.mxu0
        %v2392 = vadd.f32 0.0, %v2391
        %v2393 = vpop.f32.mrf.mxu0
        %2394 = vmatprep.mubr.bf16.mxu0 0
        %2395 = vmatmul.mubr.bf16.gmra.mxu0 %v2290
        %v2396 = vpop.f32.mrf.mxu0
        %v2397 = vadd.f32 0.0, %v2396
        %v2398 = vpop.f32.mrf.mxu0
        %v2399 = vpop.f32.mrf.mxu0
        %v2400 = vadd.f32 0.0, %v2399
        %v2401 = vpop.f32.mrf.mxu0
        %2402 = vmatprep.mubr.bf16.mxu0 0
        %2403 = vmatmul.mubr.bf16.gmra.mxu0 %v2292
        %v2404 = vpop.f32.mrf.mxu0
        %v2405 = vadd.f32 0.0, %v2404
        %v2406 = vpop.f32.mrf.mxu0
        %v2407 = vpop.f32.mrf.mxu0
        %v2408 = vadd.f32 0.0, %v2407
        %v2409 = vpop.f32.mrf.mxu0
        %2410 = vmatprep.mubr.bf16.mxu0 0
        %2411 = vmatmul.mubr.bf16.gmra.mxu0 %v2294
        %v2412 = vpop.f32.mrf.mxu0
        %v2413 = vadd.f32 0.0, %v2412
        %v2414 = vpop.f32.mrf.mxu0
        %v2415 = vpop.f32.mrf.mxu0
        %v2416 = vadd.f32 0.0, %v2415
        %v2417 = vpop.f32.mrf.mxu0
        %2418 = vmatprep.mubr.bf16.mxu0 0
        %2419 = vmatmul.mubr.bf16.gmra.mxu0 %v2296
        %v2420 = vpop.f32.mrf.mxu0
        %v2421 = vadd.f32 0.0, %v2420
        %v2422 = vpop.f32.mrf.mxu0
        %v2423 = vpop.f32.mrf.mxu0
        %v2424 = vadd.f32 0.0, %v2423
        %v2425 = vpop.f32.mrf.mxu0
        %2426 = vmatprep.mubr.bf16.mxu0 0
        %2427 = vmatmul.mubr.bf16.gmra.mxu0 %v2298
        %v2428 = vpop.f32.mrf.mxu0
        %v2429 = vadd.f32 0.0, %v2428
        %v2430 = vpop.f32.mrf.mxu0
        %v2431 = vpop.f32.mrf.mxu0
        %v2432 = vadd.f32 0.0, %v2431
        %v2433 = vpop.f32.mrf.mxu0
        %2434 = vmatprep.mubr.bf16.mxu0 0
        %2435 = vmatmul.mubr.bf16.gmra.mxu0 %v2300
        %v2436 = vpop.f32.mrf.mxu0
        %v2437 = vadd.f32 0.0, %v2436
        %v2438 = vpop.f32.mrf.mxu0
        %v2439 = vpop.f32.mrf.mxu0
        %v2440 = vadd.f32 0.0, %v2439
        %v2441 = vpop.f32.mrf.mxu0
        %2442 = vmatprep.mubr.bf16.mxu0 0
        %2443 = vmatmul.mubr.bf16.gmra.mxu0 %v2302
        %v2444 = vpop.f32.mrf.mxu0
        %v2445 = vadd.f32 0.0, %v2444
        %v2446 = vpop.f32.mrf.mxu0
        %v2447 = vpop.f32.mrf.mxu0
        %v2448 = vadd.f32 0.0, %v2447
        %v2449 = vpop.f32.mrf.mxu0
        %2450 = vmatprep.mubr.bf16.mxu0 0
        %2451 = vmatmul.mubr.bf16.gmra.mxu0 %v2304
        %v2452 = vpop.f32.mrf.mxu0
        %v2453 = vadd.f32 0.0, %v2452
        %v2454 = vpop.f32.mrf.mxu0
        %v2455 = vpop.f32.mrf.mxu0
        %v2456 = vadd.f32 0.0, %v2455
        %v2457 = vpop.f32.mrf.mxu0
        %2458 = vmatprep.mubr.bf16.mxu0 0
        %2459 = vmatmul.mubr.bf16.gmra.mxu0 %v2306
        %v2460 = vpop.f32.mrf.mxu0
        %v2461 = vadd.f32 0.0, %v2460
        %v2462 = vpop.f32.mrf.mxu0
        %v2463 = vpop.f32.mrf.mxu0
        %v2464 = vadd.f32 0.0, %v2463
        %v2465 = vpop.f32.mrf.mxu0
        %2466 = vmatprep.mubr.bf16.mxu0 0
        %2467 = vmatmul.mubr.bf16.gmra.mxu0 %v2308
        %v2468 = vpop.f32.mrf.mxu0
        %v2469 = vadd.f32 0.0, %v2468
        %v2470 = vpop.f32.mrf.mxu0
        %v2471 = vpop.f32.mrf.mxu0
        %v2472 = vadd.f32 0.0, %v2471
        %v2473 = vpop.f32.mrf.mxu0
        %2474 = vdwg.mxu0
        %v2475 = vld [vmem:[%s2] sm:$0x1]
        %v2477 = vlaneseq
        %v2478 = vshrl.u32 %v2477, 7
        %v2479 = vsub.s32 0, %v2478
        %v2480 = vrot.slane %v2475, %v2479
        %v2482 = vmul.f32 %v2349, %v2480
        %v2483 = vmul.f32 %v2352, %v2480
        %v2484 = vmul.f32 %v2357, %v2480
        %v2485 = vmul.f32 %v2360, %v2480
        %v2486 = vmul.f32 %v2365, %v2480
        %v2487 = vmul.f32 %v2368, %v2480
        %v2488 = vmul.f32 %v2373, %v2480
        %v2489 = vmul.f32 %v2376, %v2480
        %v2490 = vmul.f32 %v2381, %v2480
        %v2491 = vmul.f32 %v2384, %v2480
        %v2492 = vmul.f32 %v2389, %v2480
        %v2493 = vmul.f32 %v2392, %v2480
        %v2494 = vmul.f32 %v2397, %v2480
        %v2495 = vmul.f32 %v2400, %v2480
        %v2496 = vmul.f32 %v2405, %v2480
        %v2497 = vmul.f32 %v2408, %v2480
        %v2498 = vmul.f32 %v2413, %v2480
        %v2499 = vmul.f32 %v2416, %v2480
        %v2500 = vmul.f32 %v2421, %v2480
        %v2501 = vmul.f32 %v2424, %v2480
        %v2502 = vmul.f32 %v2429, %v2480
        %v2503 = vmul.f32 %v2432, %v2480
        %v2504 = vmul.f32 %v2437, %v2480
        %v2505 = vmul.f32 %v2440, %v2480
        %v2506 = vmul.f32 %v2445, %v2480
        %v2507 = vmul.f32 %v2448, %v2480
        %v2508 = vmul.f32 %v2453, %v2480
        %v2509 = vmul.f32 %v2456, %v2480
        %v2510 = vmul.f32 %v2461, %v2480
        %v2511 = vmul.f32 %v2464, %v2480
        %v2512 = vmul.f32 %v2469, %v2480
        %v2513 = vmul.f32 %v2472, %v2480
        %v2514 = vld [vmem:[%s3] sm:$0x1]
        %v2516 = vlaneseq
        %v2517 = vshrl.u32 %v2516, 7
        %v2518 = vsub.s32 0, %v2517
        %v2519 = vrot.slane %v2514, %v2518
        %v2521 = vadd.f32 %v2482, %v2519
        %v2522 = vadd.f32 %v2483, %v2519
        %v2523 = vadd.f32 %v2484, %v2519
        %v2524 = vadd.f32 %v2485, %v2519
        %v2525 = vadd.f32 %v2486, %v2519
        %v2526 = vadd.f32 %v2487, %v2519
        %v2527 = vadd.f32 %v2488, %v2519
        %v2528 = vadd.f32 %v2489, %v2519
        %v2529 = vadd.f32 %v2490, %v2519
        %v2530 = vadd.f32 %v2491, %v2519
        %v2531 = vadd.f32 %v2492, %v2519
        %v2532 = vadd.f32 %v2493, %v2519
        %v2533 = vadd.f32 %v2494, %v2519
        %v2534 = vadd.f32 %v2495, %v2519
        %v2535 = vadd.f32 %v2496, %v2519
        %v2536 = vadd.f32 %v2497, %v2519
        %v2537 = vadd.f32 %v2498, %v2519
        %v2538 = vadd.f32 %v2499, %v2519
        %v2539 = vadd.f32 %v2500, %v2519
        %v2540 = vadd.f32 %v2501, %v2519
        %v2541 = vadd.f32 %v2502, %v2519
        %v2542 = vadd.f32 %v2503, %v2519
        %v2543 = vadd.f32 %v2504, %v2519
        %v2544 = vadd.f32 %v2505, %v2519
        %v2545 = vadd.f32 %v2506, %v2519
        %v2546 = vadd.f32 %v2507, %v2519
        %v2547 = vadd.f32 %v2508, %v2519
        %v2548 = vadd.f32 %v2509, %v2519
        %v2549 = vadd.f32 %v2510, %v2519
        %v2550 = vadd.f32 %v2511, %v2519
        %v2551 = vadd.f32 %v2512, %v2519
        %v2552 = vadd.f32 %v2513, %v2519
        %v2553 = vmax.f32 %v2521, 0.0
        %v2554 = vmax.f32 %v2522, 0.0
        %v2555 = vmax.f32 %v2523, 0.0
        %v2556 = vmax.f32 %v2524, 0.0
        %v2557 = vmax.f32 %v2525, 0.0
        %v2558 = vmax.f32 %v2526, 0.0
        %v2559 = vmax.f32 %v2527, 0.0
        %v2560 = vmax.f32 %v2528, 0.0
        %v2561 = vmax.f32 %v2529, 0.0
        %v2562 = vmax.f32 %v2530, 0.0
        %v2563 = vmax.f32 %v2531, 0.0
        %v2564 = vmax.f32 %v2532, 0.0
        %v2565 = vmax.f32 %v2533, 0.0
        %v2566 = vmax.f32 %v2534, 0.0
        %v2567 = vmax.f32 %v2535, 0.0
        %v2568 = vmax.f32 %v2536, 0.0
        %v2569 = vmax.f32 %v2537, 0.0
        %v2570 = vmax.f32 %v2538, 0.0
        %v2571 = vmax.f32 %v2539, 0.0
        %v2572 = vmax.f32 %v2540, 0.0
        %v2573 = vmax.f32 %v2541, 0.0
        %v2574 = vmax.f32 %v2542, 0.0
        %v2575 = vmax.f32 %v2543, 0.0
        %v2576 = vmax.f32 %v2544, 0.0
        %v2577 = vmax.f32 %v2545, 0.0
        %v2578 = vmax.f32 %v2546, 0.0
        %v2579 = vmax.f32 %v2547, 0.0
        %v2580 = vmax.f32 %v2548, 0.0
        %v2581 = vmax.f32 %v2549, 0.0
        %v2582 = vmax.f32 %v2550, 0.0
        %v2583 = vmax.f32 %v2551, 0.0
        %v2584 = vmax.f32 %v2552, 0.0
        %2585 = vst [vmem:[#allocation2] sm:$0xf] 0
        %2586 = vst [vmem:[#allocation2 + $0x4] sm:$0xf] 0
        %2587 = vst [vmem:[#allocation2 + $0x8] sm:$0xf] 0
        %2588 = vst [vmem:[#allocation2 + $0xc] sm:$0xf] 0
        %2589 = vst [vmem:[#allocation2 + $0x10] sm:$0xf] 0
        %2590 = vst [vmem:[#allocation2 + $0x14] sm:$0xf] 0
        %s2591 = scalar_lea.vmem [#allocation2], 408
        %2592 = vst [vmem:[%s2591] sm:$0xf] 0
        %2593 = vst [vmem:[%s2591 + $0x4] sm:$0xf] 0
        %2594 = vst [vmem:[%s2591 + $0x8] sm:$0xf] 0
        %2595 = vst [vmem:[%s2591 + $0xc] sm:$0xf] 0
        %2596 = vst [vmem:[%s2591 + $0x10] sm:$0xf] 0
        %2597 = vst [vmem:[%s2591 + $0x14] sm:$0xf] 0
        %vm2598 = vcmask 1043459
        %vm2599 = vsmask.f32 7950
        %vm2600 = vmand %vm2598, %vm2599
        %v2601 = vld [vmem:[#allocation2 + $0x4] sm:$0x8]
        %v2602 = vsel %vm2600, 0, %v2601
        %2603 = vst [vmem:[#allocation2 + $0x4] sm:$0x8] %v2602
        %v2604 = vld [vmem:[#allocation2 + $0x1c] sm:$0x8]
        %v2605 = vsel %vm2600, 0, %v2604
        %2606 = vst [vmem:[#allocation2 + $0x1c] sm:$0x8] %v2605
        %v2607 = vld [vmem:[#allocation2 + $0x34] sm:$0x8]
        %v2608 = vsel %vm2600, 0, %v2607
        %2609 = vst [vmem:[#allocation2 + $0x34] sm:$0x8] %v2608
        %v2610 = vld [vmem:[#allocation2 + $0x4c] sm:$0x8]
        %v2611 = vsel %vm2600, 0, %v2610
        %2612 = vst [vmem:[#allocation2 + $0x4c] sm:$0x8] %v2611
        %v2613 = vld [vmem:[#allocation2 + $0x64] sm:$0x8]
        %v2614 = vsel %vm2600, 0, %v2613
        %2615 = vst [vmem:[#allocation2 + $0x64] sm:$0x8] %v2614
        %v2616 = vld [vmem:[#allocation2 + $0x7c] sm:$0x8]
        %v2617 = vsel %vm2600, 0, %v2616
        %2618 = vst [vmem:[#allocation2 + $0x7c] sm:$0x8] %v2617
        %v2619 = vld [vmem:[#allocation2 + $0x94] sm:$0x8]
        %v2620 = vsel %vm2600, 0, %v2619
        %2621 = vst [vmem:[#allocation2 + $0x94] sm:$0x8] %v2620
        %v2622 = vld [vmem:[#allocation2 + $0xac] sm:$0x8]
        %v2623 = vsel %vm2600, 0, %v2622
        %2624 = vst [vmem:[#allocation2 + $0xac] sm:$0x8] %v2623
        %v2625 = vld [vmem:[#allocation2 + $0xc4] sm:$0x8]
        %v2626 = vsel %vm2600, 0, %v2625
        %2627 = vst [vmem:[#allocation2 + $0xc4] sm:$0x8] %v2626
        %v2628 = vld [vmem:[#allocation2 + $0xdc] sm:$0x8]
        %v2629 = vsel %vm2600, 0, %v2628
        %2630 = vst [vmem:[#allocation2 + $0xdc] sm:$0x8] %v2629
        %v2631 = vld [vmem:[#allocation2 + $0xf4] sm:$0x8]
        %v2632 = vsel %vm2600, 0, %v2631
        %2633 = vst [vmem:[#allocation2 + $0xf4] sm:$0x8] %v2632
        %v2634 = vld [vmem:[#allocation2 + $0x10c] sm:$0x8]
        %v2635 = vsel %vm2600, 0, %v2634
        %2636 = vst [vmem:[#allocation2 + $0x10c] sm:$0x8] %v2635
        %v2637 = vld [vmem:[#allocation2 + $0x124] sm:$0x8]
        %v2638 = vsel %vm2600, 0, %v2637
        %2639 = vst [vmem:[#allocation2 + $0x124] sm:$0x8] %v2638
        %v2640 = vld [vmem:[#allocation2 + $0x13c] sm:$0x8]
        %v2641 = vsel %vm2600, 0, %v2640
        %2642 = vst [vmem:[#allocation2 + $0x13c] sm:$0x8] %v2641
        %v2643 = vld [vmem:[#allocation2 + $0x154] sm:$0x8]
        %v2644 = vsel %vm2600, 0, %v2643
        %2645 = vst [vmem:[#allocation2 + $0x154] sm:$0x8] %v2644
        %v2646 = vld [vmem:[#allocation2 + $0x16c] sm:$0x8]
        %v2647 = vsel %vm2600, 0, %v2646
        %2648 = vst [vmem:[#allocation2 + $0x16c] sm:$0x8] %v2647
        %v2649 = vld [vmem:[#allocation2 + $0x184] sm:$0x8]
        %v2650 = vsel %vm2600, 0, %v2649
        %2651 = vst [vmem:[#allocation2 + $0x184] sm:$0x8] %v2650
        %v2652 = vld [vmem:[#allocation2 + $0x19c] sm:$0x8]
        %v2653 = vsel %vm2600, 0, %v2652
        %2654 = vst [vmem:[#allocation2 + $0x19c] sm:$0x8] %v2653
        %vm2655 = vcmask 1040384
        %vm2656 = vsmask.f32 256
        %vm2657 = vmand %vm2655, %vm2656
        %v2658 = vld [vmem:[#allocation2 + $0x10] sm:$0x1]
        %v2659 = vsel %vm2657, 0, %v2658
        %2660 = vst [vmem:[#allocation2 + $0x10] sm:$0x1] %v2659
        %v2661 = vld [vmem:[#allocation2 + $0x28] sm:$0x1]
        %v2662 = vsel %vm2657, 0, %v2661
        %2663 = vst [vmem:[#allocation2 + $0x28] sm:$0x1] %v2662
        %v2664 = vld [vmem:[#allocation2 + $0x40] sm:$0x1]
        %v2665 = vsel %vm2657, 0, %v2664
        %2666 = vst [vmem:[#allocation2 + $0x40] sm:$0x1] %v2665
        %v2667 = vld [vmem:[#allocation2 + $0x58] sm:$0x1]
        %v2668 = vsel %vm2657, 0, %v2667
        %2669 = vst [vmem:[#allocation2 + $0x58] sm:$0x1] %v2668
        %v2670 = vld [vmem:[#allocation2 + $0x70] sm:$0x1]
        %v2671 = vsel %vm2657, 0, %v2670
        %2672 = vst [vmem:[#allocation2 + $0x70] sm:$0x1] %v2671
        %v2673 = vld [vmem:[#allocation2 + $0x88] sm:$0x1]
        %v2674 = vsel %vm2657, 0, %v2673
        %2675 = vst [vmem:[#allocation2 + $0x88] sm:$0x1] %v2674
        %v2676 = vld [vmem:[#allocation2 + $0xa0] sm:$0x1]
        %v2677 = vsel %vm2657, 0, %v2676
        %2678 = vst [vmem:[#allocation2 + $0xa0] sm:$0x1] %v2677
        %v2679 = vld [vmem:[#allocation2 + $0xb8] sm:$0x1]
        %v2680 = vsel %vm2657, 0, %v2679
        %2681 = vst [vmem:[#allocation2 + $0xb8] sm:$0x1] %v2680
        %v2682 = vld [vmem:[#allocation2 + $0xd0] sm:$0x1]
        %v2683 = vsel %vm2657, 0, %v2682
        %2684 = vst [vmem:[#allocation2 + $0xd0] sm:$0x1] %v2683
        %v2685 = vld [vmem:[#allocation2 + $0xe8] sm:$0x1]
        %v2686 = vsel %vm2657, 0, %v2685
        %2687 = vst [vmem:[#allocation2 + $0xe8] sm:$0x1] %v2686
        %v2688 = vld [vmem:[#allocation2 + $0x100] sm:$0x1]
        %v2689 = vsel %vm2657, 0, %v2688
        %2690 = vst [vmem:[#allocation2 + $0x100] sm:$0x1] %v2689
        %v2691 = vld [vmem:[#allocation2 + $0x118] sm:$0x1]
        %v2692 = vsel %vm2657, 0, %v2691
        %2693 = vst [vmem:[#allocation2 + $0x118] sm:$0x1] %v2692
        %v2694 = vld [vmem:[#allocation2 + $0x130] sm:$0x1]
        %v2695 = vsel %vm2657, 0, %v2694
        %2696 = vst [vmem:[#allocation2 + $0x130] sm:$0x1] %v2695
        %v2697 = vld [vmem:[#allocation2 + $0x148] sm:$0x1]
        %v2698 = vsel %vm2657, 0, %v2697
        %2699 = vst [vmem:[#allocation2 + $0x148] sm:$0x1] %v2698
        %v2700 = vld [vmem:[#allocation2 + $0x160] sm:$0x1]
        %v2701 = vsel %vm2657, 0, %v2700
        %2702 = vst [vmem:[#allocation2 + $0x160] sm:$0x1] %v2701
        %v2703 = vld [vmem:[#allocation2 + $0x178] sm:$0x1]
        %v2704 = vsel %vm2657, 0, %v2703
        %2705 = vst [vmem:[#allocation2 + $0x178] sm:$0x1] %v2704
        %v2706 = vld [vmem:[#allocation2 + $0x190] sm:$0x1]
        %v2707 = vsel %vm2657, 0, %v2706
        %2708 = vst [vmem:[#allocation2 + $0x190] sm:$0x1] %v2707
        %v2709 = vld [vmem:[#allocation2 + $0x1a8] sm:$0x1]
        %v2710 = vsel %vm2657, 0, %v2709
        %2711 = vst [vmem:[#allocation2 + $0x1a8] sm:$0x1] %v2710
        %v2712 = vpack.c.bf16 %v2554, %v2553
        %v2713 = vpack.c.bf16 %v2556, %v2555
        %v2714 = vpack.c.bf16 %v2558, %v2557
        %v2715 = vpack.c.bf16 %v2560, %v2559
        %v2716 = vpack.c.bf16 %v2562, %v2561
        %v2717 = vpack.c.bf16 %v2564, %v2563
        %v2718 = vpack.c.bf16 %v2566, %v2565
        %v2719 = vpack.c.bf16 %v2568, %v2567
        %v2720 = vpack.c.bf16 %v2570, %v2569
        %v2721 = vpack.c.bf16 %v2572, %v2571
        %v2722 = vpack.c.bf16 %v2574, %v2573
        %v2723 = vpack.c.bf16 %v2576, %v2575
        %v2724 = vpack.c.bf16 %v2578, %v2577
        %v2725 = vpack.c.bf16 %v2580, %v2579
        %v2726 = vpack.c.bf16 %v2582, %v2581
        %v2727 = vpack.c.bf16 %v2584, %v2583
        %v2744 = vunpack.c.l.b16 %v2712
        %v2745 = vunpack.c.h.b16 %v2712
        %v2746 = vunpack.c.l.b16 %v2713
        %v2747 = vunpack.c.h.b16 %v2713
        %v2748 = vunpack.c.l.b16 %v2714
        %v2749 = vunpack.c.h.b16 %v2714
        %v2750 = vunpack.c.l.b16 %v2715
        %v2751 = vunpack.c.h.b16 %v2715
        %v2752 = vunpack.c.l.b16 %v2716
        %v2753 = vunpack.c.h.b16 %v2716
        %v2754 = vunpack.c.l.b16 %v2717
        %v2755 = vunpack.c.h.b16 %v2717
        %v2756 = vunpack.c.l.b16 %v2718
        %v2757 = vunpack.c.h.b16 %v2718
        %v2758 = vunpack.c.l.b16 %v2719
        %v2759 = vunpack.c.h.b16 %v2719
        %v2760 = vunpack.c.l.b16 %v2720
        %v2761 = vunpack.c.h.b16 %v2720
        %v2762 = vunpack.c.l.b16 %v2721
        %v2763 = vunpack.c.h.b16 %v2721
        %v2764 = vunpack.c.l.b16 %v2722
        %v2765 = vunpack.c.h.b16 %v2722
        %v2766 = vunpack.c.l.b16 %v2723
        %v2767 = vunpack.c.h.b16 %v2723
        %v2768 = vunpack.c.l.b16 %v2724
        %v2769 = vunpack.c.h.b16 %v2724
        %v2770 = vunpack.c.l.b16 %v2725
        %v2771 = vunpack.c.h.b16 %v2725
        %v2772 = vunpack.c.l.b16 %v2726
        %v2773 = vunpack.c.h.b16 %v2726
        %v2774 = vunpack.c.l.b16 %v2727
        %v2775 = vunpack.c.h.b16 %v2727
        %v2776 = vpack.c.b16 %v2744, %v2744
        %v2777 = vpack.c.b16 %v2745, %v2745
        %v2778 = vpack.c.b16 %v2746, %v2746
        %v2779 = vpack.c.b16 %v2747, %v2747
        %v2780 = vpack.c.b16 %v2748, %v2748
        %v2781 = vpack.c.b16 %v2749, %v2749
        %v2782 = vpack.c.b16 %v2750, %v2750
        %v2783 = vpack.c.b16 %v2751, %v2751
        %v2784 = vpack.c.b16 %v2752, %v2752
        %v2785 = vpack.c.b16 %v2753, %v2753
        %v2786 = vpack.c.b16 %v2754, %v2754
        %v2787 = vpack.c.b16 %v2755, %v2755
        %v2788 = vpack.c.b16 %v2756, %v2756
        %v2789 = vpack.c.b16 %v2757, %v2757
        %v2790 = vpack.c.b16 %v2758, %v2758
        %v2791 = vpack.c.b16 %v2759, %v2759
        %v2792 = vpack.c.b16 %v2760, %v2760
        %v2793 = vpack.c.b16 %v2761, %v2761
        %v2794 = vpack.c.b16 %v2762, %v2762
        %v2795 = vpack.c.b16 %v2763, %v2763
        %v2796 = vpack.c.b16 %v2764, %v2764
        %v2797 = vpack.c.b16 %v2765, %v2765
        %v2798 = vpack.c.b16 %v2766, %v2766
        %v2799 = vpack.c.b16 %v2767, %v2767
        %v2800 = vpack.c.b16 %v2768, %v2768
        %v2801 = vpack.c.b16 %v2769, %v2769
        %v2802 = vpack.c.b16 %v2770, %v2770
        %v2803 = vpack.c.b16 %v2771, %v2771
        %v2804 = vpack.c.b16 %v2772, %v2772
        %v2805 = vpack.c.b16 %v2773, %v2773
        %v2806 = vpack.c.b16 %v2774, %v2774
        %v2807 = vpack.c.b16 %v2775, %v2775
        %s2840 = scalar_lea.vmem [#allocation2], 24
        %2841 = vst [vmem:[%s2840 + $0x8] sm:$0xf] %v2776
        %2842 = vst [vmem:[%s2840 + $0xc] sm:$0xf] %v2777
        %2843 = vst [vmem:[%s2840 + $0x20] sm:$0xf] %v2778
        %2844 = vst [vmem:[%s2840 + $0x24] sm:$0xf] %v2779
        %2845 = vst [vmem:[%s2840 + $0x38] sm:$0xf] %v2780
        %2846 = vst [vmem:[%s2840 + $0x3c] sm:$0xf] %v2781
        %2847 = vst [vmem:[%s2840 + $0x50] sm:$0xf] %v2782
        %2848 = vst [vmem:[%s2840 + $0x54] sm:$0xf] %v2783
        %2849 = vst [vmem:[%s2840 + $0x68] sm:$0xf] %v2784
        %2850 = vst [vmem:[%s2840 + $0x6c] sm:$0xf] %v2785
        %2851 = vst [vmem:[%s2840 + $0x80] sm:$0xf] %v2786
        %2852 = vst [vmem:[%s2840 + $0x84] sm:$0xf] %v2787
        %2853 = vst [vmem:[%s2840 + $0x98] sm:$0xf] %v2788
        %2854 = vst [vmem:[%s2840 + $0x9c] sm:$0xf] %v2789
        %2855 = vst [vmem:[%s2840 + $0xb0] sm:$0xf] %v2790
        %2856 = vst [vmem:[%s2840 + $0xb4] sm:$0xf] %v2791
        %2857 = vst [vmem:[%s2840 + $0xc8] sm:$0xf] %v2792
        %2858 = vst [vmem:[%s2840 + $0xcc] sm:$0xf] %v2793
        %2859 = vst [vmem:[%s2840 + $0xe0] sm:$0xf] %v2794
        %2860 = vst [vmem:[%s2840 + $0xe4] sm:$0xf] %v2795
        %2861 = vst [vmem:[%s2840 + $0xf8] sm:$0xf] %v2796
        %2862 = vst [vmem:[%s2840 + $0xfc] sm:$0xf] %v2797
        %2863 = vst [vmem:[%s2840 + $0x110] sm:$0xf] %v2798
        %2864 = vst [vmem:[%s2840 + $0x114] sm:$0xf] %v2799
        %2865 = vst [vmem:[%s2840 + $0x128] sm:$0xf] %v2800
        %2866 = vst [vmem:[%s2840 + $0x12c] sm:$0xf] %v2801
        %2867 = vst [vmem:[%s2840 + $0x140] sm:$0xf] %v2802
        %2868 = vst [vmem:[%s2840 + $0x144] sm:$0xf] %v2803
        %2869 = vst [vmem:[%s2840 + $0x158] sm:$0xf] %v2804
        %2870 = vst [vmem:[%s2840 + $0x15c] sm:$0xf] %v2805
        %2871 = vst [vmem:[%s2840 + $0x170] sm:$0xf] %v2806
        %2872 = vst [vmem:[%s2840 + $0x174] sm:$0xf] %v2807
        %v2873 = vld [vmem:[#allocation2 + $0x4] sm:$0x8]
        %v2874 = vld [vmem:[#allocation2 + $0x8] sm:$0xf]
        %v2875 = vld [vmem:[#allocation2 + $0xc] sm:$0xf]
        %v2876 = vld [vmem:[#allocation2 + $0x1c] sm:$0x8]
        %v2877 = vld [vmem:[#allocation2 + $0x20] sm:$0xf]
        %v2878 = vld [vmem:[#allocation2 + $0x24] sm:$0xf]
        %v2879 = vld [vmem:[#allocation2 + $0x34] sm:$0x8]
        %v2880 = vld [vmem:[#allocation2 + $0x38] sm:$0xf]
        %v2881 = vld [vmem:[#allocation2 + $0x3c] sm:$0xf]
        %v2882 = vld [vmem:[#allocation2 + $0x4c] sm:$0x8]
        %v2883 = vld [vmem:[#allocation2 + $0x50] sm:$0xf]
        %v2884 = vld [vmem:[#allocation2 + $0x54] sm:$0xf]
        %v2885 = vld [vmem:[#allocation2 + $0x64] sm:$0x8]
        %v2886 = vld [vmem:[#allocation2 + $0x68] sm:$0xf]
        %v2887 = vld [vmem:[#allocation2 + $0x6c] sm:$0xf]
        %v2888 = vld [vmem:[#allocation2 + $0x7c] sm:$0x8]
        %v2889 = vld [vmem:[#allocation2 + $0x80] sm:$0xf]
        %v2890 = vld [vmem:[#allocation2 + $0x84] sm:$0xf]
        %v2891 = vld [vmem:[#allocation2 + $0x94] sm:$0x8]
        %v2892 = vld [vmem:[#allocation2 + $0x98] sm:$0xf]
        %v2893 = vld [vmem:[#allocation2 + $0x9c] sm:$0xf]
        %v2894 = vld [vmem:[#allocation2 + $0xac] sm:$0x8]
        %v2895 = vld [vmem:[#allocation2 + $0xb0] sm:$0xf]
        %v2896 = vld [vmem:[#allocation2 + $0xb4] sm:$0xf]
        %v2897 = vld [vmem:[#allocation2 + $0xc4] sm:$0x8]
        %v2898 = vld [vmem:[#allocation2 + $0xc8] sm:$0xf]
        %v2899 = vld [vmem:[#allocation2 + $0xcc] sm:$0xf]
        %v2900 = vld [vmem:[#allocation2 + $0xdc] sm:$0x8]
        %v2901 = vld [vmem:[#allocation2 + $0xe0] sm:$0xf]
        %v2902 = vld [vmem:[#allocation2 + $0xe4] sm:$0xf]
        %v2903 = vld [vmem:[#allocation2 + $0xf4] sm:$0x8]
        %v2904 = vld [vmem:[#allocation2 + $0xf8] sm:$0xf]
        %v2905 = vld [vmem:[#allocation2 + $0xfc] sm:$0xf]
        %v2906 = vld [vmem:[#allocation2 + $0x10c] sm:$0x8]
        %v2907 = vld [vmem:[#allocation2 + $0x110] sm:$0xf]
        %v2908 = vld [vmem:[#allocation2 + $0x114] sm:$0xf]
        %v2909 = vld [vmem:[#allocation2 + $0x124] sm:$0x8]
        %v2910 = vld [vmem:[#allocation2 + $0x128] sm:$0xf]
        %v2911 = vld [vmem:[#allocation2 + $0x12c] sm:$0xf]
        %v2912 = vld [vmem:[#allocation2 + $0x13c] sm:$0x8]
        %v2913 = vld [vmem:[#allocation2 + $0x140] sm:$0xf]
        %v2914 = vld [vmem:[#allocation2 + $0x144] sm:$0xf]
        %v2915 = vld [vmem:[#allocation2 + $0x154] sm:$0x8]
        %v2916 = vld [vmem:[#allocation2 + $0x158] sm:$0xf]
        %v2917 = vld [vmem:[#allocation2 + $0x15c] sm:$0xf]
        %v2918 = vld [vmem:[#allocation2 + $0x16c] sm:$0x8]
        %v2919 = vld [vmem:[#allocation2 + $0x170] sm:$0xf]
        %v2920 = vld [vmem:[#allocation2 + $0x174] sm:$0xf]
        %v2921 = vld [vmem:[#allocation2 + $0x10] sm:$0x1]
        %v2922 = vld [vmem:[#allocation2 + $0x28] sm:$0x1]
        %v2923 = vld [vmem:[#allocation2 + $0x40] sm:$0x1]
        %v2924 = vld [vmem:[#allocation2 + $0x58] sm:$0x1]
        %v2925 = vld [vmem:[#allocation2 + $0x70] sm:$0x1]
        %v2926 = vld [vmem:[#allocation2 + $0x88] sm:$0x1]
        %v2927 = vld [vmem:[#allocation2 + $0xa0] sm:$0x1]
        %v2928 = vld [vmem:[#allocation2 + $0xb8] sm:$0x1]
        %v2929 = vld [vmem:[#allocation2 + $0xd0] sm:$0x1]
        %v2930 = vld [vmem:[#allocation2 + $0xe8] sm:$0x1]
        %v2931 = vld [vmem:[#allocation2 + $0x100] sm:$0x1]
        %v2932 = vld [vmem:[#allocation2 + $0x118] sm:$0x1]
        %v2933 = vld [vmem:[#allocation2 + $0x130] sm:$0x1]
        %v2934 = vld [vmem:[#allocation2 + $0x148] sm:$0x1]
        %v2935 = vld [vmem:[#allocation2 + $0x160] sm:$0x1]
        %v2936 = vld [vmem:[#allocation2 + $0x178] sm:$0x1]
        %v2937 = vld [vmem:[%s2840 + $0x4] sm:$0x8]
        %v2938 = vld [vmem:[%s2840 + $0x8] sm:$0xf]
        %v2939 = vld [vmem:[%s2840 + $0xc] sm:$0xf]
        %v2940 = vld [vmem:[%s2840 + $0x1c] sm:$0x8]
        %v2941 = vld [vmem:[%s2840 + $0x20] sm:$0xf]
        %v2942 = vld [vmem:[%s2840 + $0x24] sm:$0xf]
        %v2943 = vld [vmem:[%s2840 + $0x34] sm:$0x8]
        %v2944 = vld [vmem:[%s2840 + $0x38] sm:$0xf]
        %v2945 = vld [vmem:[%s2840 + $0x3c] sm:$0xf]
        %v2946 = vld [vmem:[%s2840 + $0x4c] sm:$0x8]
        %v2947 = vld [vmem:[%s2840 + $0x50] sm:$0xf]
        %v2948 = vld [vmem:[%s2840 + $0x54] sm:$0xf]
        %v2949 = vld [vmem:[%s2840 + $0x64] sm:$0x8]
        %v2950 = vld [vmem:[%s2840 + $0x68] sm:$0xf]
        %v2951 = vld [vmem:[%s2840 + $0x6c] sm:$0xf]
        %v2952 = vld [vmem:[%s2840 + $0x7c] sm:$0x8]
        %v2953 = vld [vmem:[%s2840 + $0x80] sm:$0xf]
        %v2954 = vld [vmem:[%s2840 + $0x84] sm:$0xf]
        %v2955 = vld [vmem:[%s2840 + $0x94] sm:$0x8]
        %v2956 = vld [vmem:[%s2840 + $0x98] sm:$0xf]
        %v2957 = vld [vmem:[%s2840 + $0x9c] sm:$0xf]
        %v2958 = vld [vmem:[%s2840 + $0xac] sm:$0x8]
        %v2959 = vld [vmem:[%s2840 + $0xb0] sm:$0xf]
        %v2960 = vld [vmem:[%s2840 + $0xb4] sm:$0xf]
        %v2961 = vld [vmem:[%s2840 + $0xc4] sm:$0x8]
        %v2962 = vld [vmem:[%s2840 + $0xc8] sm:$0xf]
        %v2963 = vld [vmem:[%s2840 + $0xcc] sm:$0xf]
        %v2964 = vld [vmem:[%s2840 + $0xdc] sm:$0x8]
        %v2965 = vld [vmem:[%s2840 + $0xe0] sm:$0xf]
        %v2966 = vld [vmem:[%s2840 + $0xe4] sm:$0xf]
        %v2967 = vld [vmem:[%s2840 + $0xf4] sm:$0x8]
        %v2968 = vld [vmem:[%s2840 + $0xf8] sm:$0xf]
        %v2969 = vld [vmem:[%s2840 + $0xfc] sm:$0xf]
        %v2970 = vld [vmem:[%s2840 + $0x10c] sm:$0x8]
        %v2971 = vld [vmem:[%s2840 + $0x110] sm:$0xf]
        %v2972 = vld [vmem:[%s2840 + $0x114] sm:$0xf]
        %v2973 = vld [vmem:[%s2840 + $0x124] sm:$0x8]
        %v2974 = vld [vmem:[%s2840 + $0x128] sm:$0xf]
        %v2975 = vld [vmem:[%s2840 + $0x12c] sm:$0xf]
        %v2976 = vld [vmem:[%s2840 + $0x13c] sm:$0x8]
        %v2977 = vld [vmem:[%s2840 + $0x140] sm:$0xf]
        %v2978 = vld [vmem:[%s2840 + $0x144] sm:$0xf]
        %v2979 = vld [vmem:[%s2840 + $0x154] sm:$0x8]
        %v2980 = vld [vmem:[%s2840 + $0x158] sm:$0xf]
        %v2981 = vld [vmem:[%s2840 + $0x15c] sm:$0xf]
        %v2982 = vld [vmem:[%s2840 + $0x16c] sm:$0x8]
        %v2983 = vld [vmem:[%s2840 + $0x170] sm:$0xf]
        %v2984 = vld [vmem:[%s2840 + $0x174] sm:$0xf]
        %v2985 = vld [vmem:[%s2840 + $0x10] sm:$0x1]
        %v2986 = vld [vmem:[%s2840 + $0x28] sm:$0x1]
        %v2987 = vld [vmem:[%s2840 + $0x40] sm:$0x1]
        %v2988 = vld [vmem:[%s2840 + $0x58] sm:$0x1]
        %v2989 = vld [vmem:[%s2840 + $0x70] sm:$0x1]
        %v2990 = vld [vmem:[%s2840 + $0x88] sm:$0x1]
        %v2991 = vld [vmem:[%s2840 + $0xa0] sm:$0x1]
        %v2992 = vld [vmem:[%s2840 + $0xb8] sm:$0x1]
        %v2993 = vld [vmem:[%s2840 + $0xd0] sm:$0x1]
        %v2994 = vld [vmem:[%s2840 + $0xe8] sm:$0x1]
        %v2995 = vld [vmem:[%s2840 + $0x100] sm:$0x1]
        %v2996 = vld [vmem:[%s2840 + $0x118] sm:$0x1]
        %v2997 = vld [vmem:[%s2840 + $0x130] sm:$0x1]
        %v2998 = vld [vmem:[%s2840 + $0x148] sm:$0x1]
        %v2999 = vld [vmem:[%s2840 + $0x160] sm:$0x1]
        %v3000 = vld [vmem:[%s2840 + $0x178] sm:$0x1]
        %s3001 = scalar_lea.vmem [#allocation2], 48
        %v3002 = vld [vmem:[%s3001 + $0x4] sm:$0x8]
        %v3003 = vld [vmem:[%s3001 + $0x8] sm:$0xf]
        %v3004 = vld [vmem:[%s3001 + $0xc] sm:$0xf]
        %v3005 = vld [vmem:[%s3001 + $0x1c] sm:$0x8]
        %v3006 = vld [vmem:[%s3001 + $0x20] sm:$0xf]
        %v3007 = vld [vmem:[%s3001 + $0x24] sm:$0xf]
        %v3008 = vld [vmem:[%s3001 + $0x34] sm:$0x8]
        %v3009 = vld [vmem:[%s3001 + $0x38] sm:$0xf]
        %v3010 = vld [vmem:[%s3001 + $0x3c] sm:$0xf]
        %v3011 = vld [vmem:[%s3001 + $0x4c] sm:$0x8]
        %v3012 = vld [vmem:[%s3001 + $0x50] sm:$0xf]
        %v3013 = vld [vmem:[%s3001 + $0x54] sm:$0xf]
        %v3014 = vld [vmem:[%s3001 + $0x64] sm:$0x8]
        %v3015 = vld [vmem:[%s3001 + $0x68] sm:$0xf]
        %v3016 = vld [vmem:[%s3001 + $0x6c] sm:$0xf]
        %v3017 = vld [vmem:[%s3001 + $0x7c] sm:$0x8]
        %v3018 = vld [vmem:[%s3001 + $0x80] sm:$0xf]
        %v3019 = vld [vmem:[%s3001 + $0x84] sm:$0xf]
        %v3020 = vld [vmem:[%s3001 + $0x94] sm:$0x8]
        %v3021 = vld [vmem:[%s3001 + $0x98] sm:$0xf]
        %v3022 = vld [vmem:[%s3001 + $0x9c] sm:$0xf]
        %v3023 = vld [vmem:[%s3001 + $0xac] sm:$0x8]
        %v3024 = vld [vmem:[%s3001 + $0xb0] sm:$0xf]
        %v3025 = vld [vmem:[%s3001 + $0xb4] sm:$0xf]
        %v3026 = vld [vmem:[%s3001 + $0xc4] sm:$0x8]
        %v3027 = vld [vmem:[%s3001 + $0xc8] sm:$0xf]
        %v3028 = vld [vmem:[%s3001 + $0xcc] sm:$0xf]
        %v3029 = vld [vmem:[%s3001 + $0xdc] sm:$0x8]
        %v3030 = vld [vmem:[%s3001 + $0xe0] sm:$0xf]
        %v3031 = vld [vmem:[%s3001 + $0xe4] sm:$0xf]
        %v3032 = vld [vmem:[%s3001 + $0xf4] sm:$0x8]
        %v3033 = vld [vmem:[%s3001 + $0xf8] sm:$0xf]
        %v3034 = vld [vmem:[%s3001 + $0xfc] sm:$0xf]
        %v3035 = vld [vmem:[%s3001 + $0x10c] sm:$0x8]
        %v3036 = vld [vmem:[%s3001 + $0x110] sm:$0xf]
        %v3037 = vld [vmem:[%s3001 + $0x114] sm:$0xf]
        %v3038 = vld [vmem:[%s3001 + $0x124] sm:$0x8]
        %v3039 = vld [vmem:[%s3001 + $0x128] sm:$0xf]
        %v3040 = vld [vmem:[%s3001 + $0x12c] sm:$0xf]
        %v3041 = vld [vmem:[%s3001 + $0x13c] sm:$0x8]
        %v3042 = vld [vmem:[%s3001 + $0x140] sm:$0xf]
        %v3043 = vld [vmem:[%s3001 + $0x144] sm:$0xf]
        %v3044 = vld [vmem:[%s3001 + $0x154] sm:$0x8]
        %v3045 = vld [vmem:[%s3001 + $0x158] sm:$0xf]
        %v3046 = vld [vmem:[%s3001 + $0x15c] sm:$0xf]
        %v3047 = vld [vmem:[%s3001 + $0x16c] sm:$0x8]
        %v3048 = vld [vmem:[%s3001 + $0x170] sm:$0xf]
        %v3049 = vld [vmem:[%s3001 + $0x174] sm:$0xf]
        %v3050 = vld [vmem:[%s3001 + $0x10] sm:$0x1]
        %v3051 = vld [vmem:[%s3001 + $0x28] sm:$0x1]
        %v3052 = vld [vmem:[%s3001 + $0x40] sm:$0x1]
        %v3053 = vld [vmem:[%s3001 + $0x58] sm:$0x1]
        %v3054 = vld [vmem:[%s3001 + $0x70] sm:$0x1]
        %v3055 = vld [vmem:[%s3001 + $0x88] sm:$0x1]
        %v3056 = vld [vmem:[%s3001 + $0xa0] sm:$0x1]
        %v3057 = vld [vmem:[%s3001 + $0xb8] sm:$0x1]
        %v3058 = vld [vmem:[%s3001 + $0xd0] sm:$0x1]
        %v3059 = vld [vmem:[%s3001 + $0xe8] sm:$0x1]
        %v3060 = vld [vmem:[%s3001 + $0x100] sm:$0x1]
        %v3061 = vld [vmem:[%s3001 + $0x118] sm:$0x1]
        %v3062 = vld [vmem:[%s3001 + $0x130] sm:$0x1]
        %v3063 = vld [vmem:[%s3001 + $0x148] sm:$0x1]
        %v3064 = vld [vmem:[%s3001 + $0x160] sm:$0x1]
        %v3065 = vld [vmem:[%s3001 + $0x178] sm:$0x1]
        %v3114 = vunpack.c.l.b16 %v2873
        %v3115 = vunpack.c.l.b16 %v2874
        %v3116 = vunpack.c.l.b16 %v2875
        %v3117 = vunpack.c.l.b16 %v2876
        %v3118 = vunpack.c.l.b16 %v2877
        %v3119 = vunpack.c.l.b16 %v2878
        %v3120 = vunpack.c.l.b16 %v2879
        %v3121 = vunpack.c.l.b16 %v2880
        %v3122 = vunpack.c.l.b16 %v2881
        %v3123 = vunpack.c.l.b16 %v2882
        %v3124 = vunpack.c.l.b16 %v2883
        %v3125 = vunpack.c.l.b16 %v2884
        %v3126 = vunpack.c.l.b16 %v2885
        %v3127 = vunpack.c.l.b16 %v2886
        %v3128 = vunpack.c.l.b16 %v2887
        %v3129 = vunpack.c.l.b16 %v2888
        %v3130 = vunpack.c.l.b16 %v2889
        %v3131 = vunpack.c.l.b16 %v2890
        %v3132 = vunpack.c.l.b16 %v2891
        %v3133 = vunpack.c.l.b16 %v2892
        %v3134 = vunpack.c.l.b16 %v2893
        %v3135 = vunpack.c.l.b16 %v2894
        %v3136 = vunpack.c.l.b16 %v2895
        %v3137 = vunpack.c.l.b16 %v2896
        %v3138 = vunpack.c.l.b16 %v2897
        %v3139 = vunpack.c.l.b16 %v2898
        %v3140 = vunpack.c.l.b16 %v2899
        %v3141 = vunpack.c.l.b16 %v2900
        %v3142 = vunpack.c.l.b16 %v2901
        %v3143 = vunpack.c.l.b16 %v2902
        %v3144 = vunpack.c.l.b16 %v2903
        %v3145 = vunpack.c.l.b16 %v2904
        %v3146 = vunpack.c.l.b16 %v2905
        %v3147 = vunpack.c.l.b16 %v2906
        %v3148 = vunpack.c.l.b16 %v2907
        %v3149 = vunpack.c.l.b16 %v2908
        %v3150 = vunpack.c.l.b16 %v2909
        %v3151 = vunpack.c.l.b16 %v2910
        %v3152 = vunpack.c.l.b16 %v2911
        %v3153 = vunpack.c.l.b16 %v2912
        %v3154 = vunpack.c.l.b16 %v2913
        %v3155 = vunpack.c.l.b16 %v2914
        %v3156 = vunpack.c.l.b16 %v2915
        %v3157 = vunpack.c.l.b16 %v2916
        %v3158 = vunpack.c.l.b16 %v2917
        %v3159 = vunpack.c.l.b16 %v2918
        %v3160 = vunpack.c.l.b16 %v2919
        %v3161 = vunpack.c.l.b16 %v2920
        %v3162 = vpack.c.b16 %v3115, %v3114
        %v3163 = vpack.c.b16 %v3116, %v3116
        %v3164 = vpack.c.b16 %v3118, %v3117
        %v3165 = vpack.c.b16 %v3119, %v3119
        %v3166 = vpack.c.b16 %v3121, %v3120
        %v3167 = vpack.c.b16 %v3122, %v3122
        %v3168 = vpack.c.b16 %v3124, %v3123
        %v3169 = vpack.c.b16 %v3125, %v3125
        %v3170 = vpack.c.b16 %v3127, %v3126
        %v3171 = vpack.c.b16 %v3128, %v3128
        %v3172 = vpack.c.b16 %v3130, %v3129
        %v3173 = vpack.c.b16 %v3131, %v3131
        %v3174 = vpack.c.b16 %v3133, %v3132
        %v3175 = vpack.c.b16 %v3134, %v3134
        %v3176 = vpack.c.b16 %v3136, %v3135
        %v3177 = vpack.c.b16 %v3137, %v3137
        %v3178 = vpack.c.b16 %v3139, %v3138
        %v3179 = vpack.c.b16 %v3140, %v3140
        %v3180 = vpack.c.b16 %v3142, %v3141
        %v3181 = vpack.c.b16 %v3143, %v3143
        %v3182 = vpack.c.b16 %v3145, %v3144
        %v3183 = vpack.c.b16 %v3146, %v3146
        %v3184 = vpack.c.b16 %v3148, %v3147
        %v3185 = vpack.c.b16 %v3149, %v3149
        %v3186 = vpack.c.b16 %v3151, %v3150
        %v3187 = vpack.c.b16 %v3152, %v3152
        %v3188 = vpack.c.b16 %v3154, %v3153
        %v3189 = vpack.c.b16 %v3155, %v3155
        %v3190 = vpack.c.b16 %v3157, %v3156
        %v3191 = vpack.c.b16 %v3158, %v3158
        %v3192 = vpack.c.b16 %v3160, %v3159
        %v3193 = vpack.c.b16 %v3161, %v3161
        %v3194 = vpack.c.b16 %v3116, %v3115
        %v3195 = vpack.c.b16 %v3119, %v3118
        %v3196 = vpack.c.b16 %v3122, %v3121
        %v3197 = vpack.c.b16 %v3125, %v3124
        %v3198 = vpack.c.b16 %v3128, %v3127
        %v3199 = vpack.c.b16 %v3131, %v3130
        %v3200 = vpack.c.b16 %v3134, %v3133
        %v3201 = vpack.c.b16 %v3137, %v3136
        %v3202 = vpack.c.b16 %v3140, %v3139
        %v3203 = vpack.c.b16 %v3143, %v3142
        %v3204 = vpack.c.b16 %v3146, %v3145
        %v3205 = vpack.c.b16 %v3149, %v3148
        %v3206 = vpack.c.b16 %v3152, %v3151
        %v3207 = vpack.c.b16 %v3155, %v3154
        %v3208 = vpack.c.b16 %v3158, %v3157
        %v3209 = vpack.c.b16 %v3161, %v3160
        %v3211 = vshrl.u32 %v3194, 16
        %v3213 = vrot.slane %v3211, 4
        %v3214 = vshll.u32 %v3194, 16
        %v3216 = vrot.slane %v3214, 5
        %v3217 = vor.u32 %v3213, %v3216
        %v3219 = vshrl.u32 %v3195, 16
        %v3221 = vrot.slane %v3219, 4
        %v3222 = vshll.u32 %v3195, 16
        %v3224 = vrot.slane %v3222, 5
        %v3225 = vor.u32 %v3221, %v3224
        %v3227 = vshrl.u32 %v3196, 16
        %v3229 = vrot.slane %v3227, 4
        %v3230 = vshll.u32 %v3196, 16
        %v3232 = vrot.slane %v3230, 5
        %v3233 = vor.u32 %v3229, %v3232
        %v3235 = vshrl.u32 %v3197, 16
        %v3237 = vrot.slane %v3235, 4
        %v3238 = vshll.u32 %v3197, 16
        %v3240 = vrot.slane %v3238, 5
        %v3241 = vor.u32 %v3237, %v3240
        %v3243 = vshrl.u32 %v3198, 16
        %v3245 = vrot.slane %v3243, 4
        %v3246 = vshll.u32 %v3198, 16
        %v3248 = vrot.slane %v3246, 5
        %v3249 = vor.u32 %v3245, %v3248
        %v3251 = vshrl.u32 %v3199, 16
        %v3253 = vrot.slane %v3251, 4
        %v3254 = vshll.u32 %v3199, 16
        %v3256 = vrot.slane %v3254, 5
        %v3257 = vor.u32 %v3253, %v3256
        %v3259 = vshrl.u32 %v3200, 16
        %v3261 = vrot.slane %v3259, 4
        %v3262 = vshll.u32 %v3200, 16
        %v3264 = vrot.slane %v3262, 5
        %v3265 = vor.u32 %v3261, %v3264
        %v3267 = vshrl.u32 %v3201, 16
        %v3269 = vrot.slane %v3267, 4
        %v3270 = vshll.u32 %v3201, 16
        %v3272 = vrot.slane %v3270, 5
        %v3273 = vor.u32 %v3269, %v3272
        %v3275 = vshrl.u32 %v3202, 16
        %v3277 = vrot.slane %v3275, 4
        %v3278 = vshll.u32 %v3202, 16
        %v3280 = vrot.slane %v3278, 5
        %v3281 = vor.u32 %v3277, %v3280
        %v3283 = vshrl.u32 %v3203, 16
        %v3285 = vrot.slane %v3283, 4
        %v3286 = vshll.u32 %v3203, 16
        %v3288 = vrot.slane %v3286, 5
        %v3289 = vor.u32 %v3285, %v3288
        %v3291 = vshrl.u32 %v3204, 16
        %v3293 = vrot.slane %v3291, 4
        %v3294 = vshll.u32 %v3204, 16
        %v3296 = vrot.slane %v3294, 5
        %v3297 = vor.u32 %v3293, %v3296
        %v3299 = vshrl.u32 %v3205, 16
        %v3301 = vrot.slane %v3299, 4
        %v3302 = vshll.u32 %v3205, 16
        %v3304 = vrot.slane %v3302, 5
        %v3305 = vor.u32 %v3301, %v3304
        %v3307 = vshrl.u32 %v3206, 16
        %v3309 = vrot.slane %v3307, 4
        %v3310 = vshll.u32 %v3206, 16
        %v3312 = vrot.slane %v3310, 5
        %v3313 = vor.u32 %v3309, %v3312
        %v3315 = vshrl.u32 %v3207, 16
        %v3317 = vrot.slane %v3315, 4
        %v3318 = vshll.u32 %v3207, 16
        %v3320 = vrot.slane %v3318, 5
        %v3321 = vor.u32 %v3317, %v3320
        %v3323 = vshrl.u32 %v3208, 16
        %v3325 = vrot.slane %v3323, 4
        %v3326 = vshll.u32 %v3208, 16
        %v3328 = vrot.slane %v3326, 5
        %v3329 = vor.u32 %v3325, %v3328
        %v3331 = vshrl.u32 %v3209, 16
        %v3333 = vrot.slane %v3331, 4
        %v3334 = vshll.u32 %v3209, 16
        %v3336 = vrot.slane %v3334, 5
        %v3337 = vor.u32 %v3333, %v3336
        %v3354 = vunpack.c.l.b16 %v2921
        %v3355 = vunpack.c.l.b16 %v2922
        %v3356 = vunpack.c.l.b16 %v2923
        %v3357 = vunpack.c.l.b16 %v2924
        %v3358 = vunpack.c.l.b16 %v2925
        %v3359 = vunpack.c.l.b16 %v2926
        %v3360 = vunpack.c.l.b16 %v2927
        %v3361 = vunpack.c.l.b16 %v2928
        %v3362 = vunpack.c.l.b16 %v2929
        %v3363 = vunpack.c.l.b16 %v2930
        %v3364 = vunpack.c.l.b16 %v2931
        %v3365 = vunpack.c.l.b16 %v2932
        %v3366 = vunpack.c.l.b16 %v2933
        %v3367 = vunpack.c.l.b16 %v2934
        %v3368 = vunpack.c.l.b16 %v2935
        %v3369 = vunpack.c.l.b16 %v2936
        %v3370 = vpack.c.b16 %v3354, %v3354
        %v3371 = vpack.c.b16 %v3355, %v3355
        %v3372 = vpack.c.b16 %v3356, %v3356
        %v3373 = vpack.c.b16 %v3357, %v3357
        %v3374 = vpack.c.b16 %v3358, %v3358
        %v3375 = vpack.c.b16 %v3359, %v3359
        %v3376 = vpack.c.b16 %v3360, %v3360
        %v3377 = vpack.c.b16 %v3361, %v3361
        %v3378 = vpack.c.b16 %v3362, %v3362
        %v3379 = vpack.c.b16 %v3363, %v3363
        %v3380 = vpack.c.b16 %v3364, %v3364
        %v3381 = vpack.c.b16 %v3365, %v3365
        %v3382 = vpack.c.b16 %v3366, %v3366
        %v3383 = vpack.c.b16 %v3367, %v3367
        %v3384 = vpack.c.b16 %v3368, %v3368
        %v3385 = vpack.c.b16 %v3369, %v3369
        %vm3386 = vcmask 1042432
        %v3387 = vrot.slane %v3194, 5
        %v3388 = vrot.slane %v3370, 5
        %v3389 = vsel %vm3386, %v3387, %v3388
        %v3390 = vrot.slane %v3195, 5
        %v3391 = vrot.slane %v3371, 5
        %v3392 = vsel %vm3386, %v3390, %v3391
        %v3393 = vrot.slane %v3196, 5
        %v3394 = vrot.slane %v3372, 5
        %v3395 = vsel %vm3386, %v3393, %v3394
        %v3396 = vrot.slane %v3197, 5
        %v3397 = vrot.slane %v3373, 5
        %v3398 = vsel %vm3386, %v3396, %v3397
        %v3399 = vrot.slane %v3198, 5
        %v3400 = vrot.slane %v3374, 5
        %v3401 = vsel %vm3386, %v3399, %v3400
        %v3402 = vrot.slane %v3199, 5
        %v3403 = vrot.slane %v3375, 5
        %v3404 = vsel %vm3386, %v3402, %v3403
        %v3405 = vrot.slane %v3200, 5
        %v3406 = vrot.slane %v3376, 5
        %v3407 = vsel %vm3386, %v3405, %v3406
        %v3408 = vrot.slane %v3201, 5
        %v3409 = vrot.slane %v3377, 5
        %v3410 = vsel %vm3386, %v3408, %v3409
        %v3411 = vrot.slane %v3202, 5
        %v3412 = vrot.slane %v3378, 5
        %v3413 = vsel %vm3386, %v3411, %v3412
        %v3414 = vrot.slane %v3203, 5
        %v3415 = vrot.slane %v3379, 5
        %v3416 = vsel %vm3386, %v3414, %v3415
        %v3417 = vrot.slane %v3204, 5
        %v3418 = vrot.slane %v3380, 5
        %v3419 = vsel %vm3386, %v3417, %v3418
        %v3420 = vrot.slane %v3205, 5
        %v3421 = vrot.slane %v3381, 5
        %v3422 = vsel %vm3386, %v3420, %v3421
        %v3423 = vrot.slane %v3206, 5
        %v3424 = vrot.slane %v3382, 5
        %v3425 = vsel %vm3386, %v3423, %v3424
        %v3426 = vrot.slane %v3207, 5
        %v3427 = vrot.slane %v3383, 5
        %v3428 = vsel %vm3386, %v3426, %v3427
        %v3429 = vrot.slane %v3208, 5
        %v3430 = vrot.slane %v3384, 5
        %v3431 = vsel %vm3386, %v3429, %v3430
        %v3432 = vrot.slane %v3209, 5
        %v3433 = vrot.slane %v3385, 5
        %v3434 = vsel %vm3386, %v3432, %v3433
        %v3483 = vunpack.c.l.b16 %v2937
        %v3484 = vunpack.c.l.b16 %v2938
        %v3485 = vunpack.c.l.b16 %v2939
        %v3486 = vunpack.c.l.b16 %v2940
        %v3487 = vunpack.c.l.b16 %v2941
        %v3488 = vunpack.c.l.b16 %v2942
        %v3489 = vunpack.c.l.b16 %v2943
        %v3490 = vunpack.c.l.b16 %v2944
        %v3491 = vunpack.c.l.b16 %v2945
        %v3492 = vunpack.c.l.b16 %v2946
        %v3493 = vunpack.c.l.b16 %v2947
        %v3494 = vunpack.c.l.b16 %v2948
        %v3495 = vunpack.c.l.b16 %v2949
        %v3496 = vunpack.c.l.b16 %v2950
        %v3497 = vunpack.c.l.b16 %v2951
        %v3498 = vunpack.c.l.b16 %v2952
        %v3499 = vunpack.c.l.b16 %v2953
        %v3500 = vunpack.c.l.b16 %v2954
        %v3501 = vunpack.c.l.b16 %v2955
        %v3502 = vunpack.c.l.b16 %v2956
        %v3503 = vunpack.c.l.b16 %v2957
        %v3504 = vunpack.c.l.b16 %v2958
        %v3505 = vunpack.c.l.b16 %v2959
        %v3506 = vunpack.c.l.b16 %v2960
        %v3507 = vunpack.c.l.b16 %v2961
        %v3508 = vunpack.c.l.b16 %v2962
        %v3509 = vunpack.c.l.b16 %v2963
        %v3510 = vunpack.c.l.b16 %v2964
        %v3511 = vunpack.c.l.b16 %v2965
        %v3512 = vunpack.c.l.b16 %v2966
        %v3513 = vunpack.c.l.b16 %v2967
        %v3514 = vunpack.c.l.b16 %v2968
        %v3515 = vunpack.c.l.b16 %v2969
        %v3516 = vunpack.c.l.b16 %v2970
        %v3517 = vunpack.c.l.b16 %v2971
        %v3518 = vunpack.c.l.b16 %v2972
        %v3519 = vunpack.c.l.b16 %v2973
        %v3520 = vunpack.c.l.b16 %v2974
        %v3521 = vunpack.c.l.b16 %v2975
        %v3522 = vunpack.c.l.b16 %v2976
        %v3523 = vunpack.c.l.b16 %v2977
        %v3524 = vunpack.c.l.b16 %v2978
        %v3525 = vunpack.c.l.b16 %v2979
        %v3526 = vunpack.c.l.b16 %v2980
        %v3527 = vunpack.c.l.b16 %v2981
        %v3528 = vunpack.c.l.b16 %v2982
        %v3529 = vunpack.c.l.b16 %v2983
        %v3530 = vunpack.c.l.b16 %v2984
        %v3531 = vpack.c.b16 %v3484, %v3483
        %v3532 = vpack.c.b16 %v3485, %v3485
        %v3533 = vpack.c.b16 %v3487, %v3486
        %v3534 = vpack.c.b16 %v3488, %v3488
        %v3535 = vpack.c.b16 %v3490, %v3489
        %v3536 = vpack.c.b16 %v3491, %v3491
        %v3537 = vpack.c.b16 %v3493, %v3492
        %v3538 = vpack.c.b16 %v3494, %v3494
        %v3539 = vpack.c.b16 %v3496, %v3495
        %v3540 = vpack.c.b16 %v3497, %v3497
        %v3541 = vpack.c.b16 %v3499, %v3498
        %v3542 = vpack.c.b16 %v3500, %v3500
        %v3543 = vpack.c.b16 %v3502, %v3501
        %v3544 = vpack.c.b16 %v3503, %v3503
        %v3545 = vpack.c.b16 %v3505, %v3504
        %v3546 = vpack.c.b16 %v3506, %v3506
        %v3547 = vpack.c.b16 %v3508, %v3507
        %v3548 = vpack.c.b16 %v3509, %v3509
        %v3549 = vpack.c.b16 %v3511, %v3510
        %v3550 = vpack.c.b16 %v3512, %v3512
        %v3551 = vpack.c.b16 %v3514, %v3513
        %v3552 = vpack.c.b16 %v3515, %v3515
        %v3553 = vpack.c.b16 %v3517, %v3516
        %v3554 = vpack.c.b16 %v3518, %v3518
        %v3555 = vpack.c.b16 %v3520, %v3519
        %v3556 = vpack.c.b16 %v3521, %v3521
        %v3557 = vpack.c.b16 %v3523, %v3522
        %v3558 = vpack.c.b16 %v3524, %v3524
        %v3559 = vpack.c.b16 %v3526, %v3525
        %v3560 = vpack.c.b16 %v3527, %v3527
        %v3561 = vpack.c.b16 %v3529, %v3528
        %v3562 = vpack.c.b16 %v3530, %v3530
        %v3563 = vpack.c.b16 %v3485, %v3484
        %v3564 = vpack.c.b16 %v3488, %v3487
        %v3565 = vpack.c.b16 %v3491, %v3490
        %v3566 = vpack.c.b16 %v3494, %v3493
        %v3567 = vpack.c.b16 %v3497, %v3496
        %v3568 = vpack.c.b16 %v3500, %v3499
        %v3569 = vpack.c.b16 %v3503, %v3502
        %v3570 = vpack.c.b16 %v3506, %v3505
        %v3571 = vpack.c.b16 %v3509, %v3508
        %v3572 = vpack.c.b16 %v3512, %v3511
        %v3573 = vpack.c.b16 %v3515, %v3514
        %v3574 = vpack.c.b16 %v3518, %v3517
        %v3575 = vpack.c.b16 %v3521, %v3520
        %v3576 = vpack.c.b16 %v3524, %v3523
        %v3577 = vpack.c.b16 %v3527, %v3526
        %v3578 = vpack.c.b16 %v3530, %v3529
        %v3580 = vshrl.u32 %v3563, 16
        %v3582 = vrot.slane %v3580, 4
        %v3583 = vshll.u32 %v3563, 16
        %v3585 = vrot.slane %v3583, 5
        %v3586 = vor.u32 %v3582, %v3585
        %v3588 = vshrl.u32 %v3564, 16
        %v3590 = vrot.slane %v3588, 4
        %v3591 = vshll.u32 %v3564, 16
        %v3593 = vrot.slane %v3591, 5
        %v3594 = vor.u32 %v3590, %v3593
        %v3596 = vshrl.u32 %v3565, 16
        %v3598 = vrot.slane %v3596, 4
        %v3599 = vshll.u32 %v3565, 16
        %v3601 = vrot.slane %v3599, 5
        %v3602 = vor.u32 %v3598, %v3601
        %v3604 = vshrl.u32 %v3566, 16
        %v3606 = vrot.slane %v3604, 4
        %v3607 = vshll.u32 %v3566, 16
        %v3609 = vrot.slane %v3607, 5
        %v3610 = vor.u32 %v3606, %v3609
        %v3612 = vshrl.u32 %v3567, 16
        %v3614 = vrot.slane %v3612, 4
        %v3615 = vshll.u32 %v3567, 16
        %v3617 = vrot.slane %v3615, 5
        %v3618 = vor.u32 %v3614, %v3617
        %v3620 = vshrl.u32 %v3568, 16
        %v3622 = vrot.slane %v3620, 4
        %v3623 = vshll.u32 %v3568, 16
        %v3625 = vrot.slane %v3623, 5
        %v3626 = vor.u32 %v3622, %v3625
        %v3628 = vshrl.u32 %v3569, 16
        %v3630 = vrot.slane %v3628, 4
        %v3631 = vshll.u32 %v3569, 16
        %v3633 = vrot.slane %v3631, 5
        %v3634 = vor.u32 %v3630, %v3633
        %v3636 = vshrl.u32 %v3570, 16
        %v3638 = vrot.slane %v3636, 4
        %v3639 = vshll.u32 %v3570, 16
        %v3641 = vrot.slane %v3639, 5
        %v3642 = vor.u32 %v3638, %v3641
        %v3644 = vshrl.u32 %v3571, 16
        %v3646 = vrot.slane %v3644, 4
        %v3647 = vshll.u32 %v3571, 16
        %v3649 = vrot.slane %v3647, 5
        %v3650 = vor.u32 %v3646, %v3649
        %v3652 = vshrl.u32 %v3572, 16
        %v3654 = vrot.slane %v3652, 4
        %v3655 = vshll.u32 %v3572, 16
        %v3657 = vrot.slane %v3655, 5
        %v3658 = vor.u32 %v3654, %v3657
        %v3660 = vshrl.u32 %v3573, 16
        %v3662 = vrot.slane %v3660, 4
        %v3663 = vshll.u32 %v3573, 16
        %v3665 = vrot.slane %v3663, 5
        %v3666 = vor.u32 %v3662, %v3665
        %v3668 = vshrl.u32 %v3574, 16
        %v3670 = vrot.slane %v3668, 4
        %v3671 = vshll.u32 %v3574, 16
        %v3673 = vrot.slane %v3671, 5
        %v3674 = vor.u32 %v3670, %v3673
        %v3676 = vshrl.u32 %v3575, 16
        %v3678 = vrot.slane %v3676, 4
        %v3679 = vshll.u32 %v3575, 16
        %v3681 = vrot.slane %v3679, 5
        %v3682 = vor.u32 %v3678, %v3681
        %v3684 = vshrl.u32 %v3576, 16
        %v3686 = vrot.slane %v3684, 4
        %v3687 = vshll.u32 %v3576, 16
        %v3689 = vrot.slane %v3687, 5
        %v3690 = vor.u32 %v3686, %v3689
        %v3692 = vshrl.u32 %v3577, 16
        %v3694 = vrot.slane %v3692, 4
        %v3695 = vshll.u32 %v3577, 16
        %v3697 = vrot.slane %v3695, 5
        %v3698 = vor.u32 %v3694, %v3697
        %v3700 = vshrl.u32 %v3578, 16
        %v3702 = vrot.slane %v3700, 4
        %v3703 = vshll.u32 %v3578, 16
        %v3705 = vrot.slane %v3703, 5
        %v3706 = vor.u32 %v3702, %v3705
        %v3723 = vunpack.c.l.b16 %v2985
        %v3724 = vunpack.c.l.b16 %v2986
        %v3725 = vunpack.c.l.b16 %v2987
        %v3726 = vunpack.c.l.b16 %v2988
        %v3727 = vunpack.c.l.b16 %v2989
        %v3728 = vunpack.c.l.b16 %v2990
        %v3729 = vunpack.c.l.b16 %v2991
        %v3730 = vunpack.c.l.b16 %v2992
        %v3731 = vunpack.c.l.b16 %v2993
        %v3732 = vunpack.c.l.b16 %v2994
        %v3733 = vunpack.c.l.b16 %v2995
        %v3734 = vunpack.c.l.b16 %v2996
        %v3735 = vunpack.c.l.b16 %v2997
        %v3736 = vunpack.c.l.b16 %v2998
        %v3737 = vunpack.c.l.b16 %v2999
        %v3738 = vunpack.c.l.b16 %v3000
        %v3739 = vpack.c.b16 %v3723, %v3723
        %v3740 = vpack.c.b16 %v3724, %v3724
        %v3741 = vpack.c.b16 %v3725, %v3725
        %v3742 = vpack.c.b16 %v3726, %v3726
        %v3743 = vpack.c.b16 %v3727, %v3727
        %v3744 = vpack.c.b16 %v3728, %v3728
        %v3745 = vpack.c.b16 %v3729, %v3729
        %v3746 = vpack.c.b16 %v3730, %v3730
        %v3747 = vpack.c.b16 %v3731, %v3731
        %v3748 = vpack.c.b16 %v3732, %v3732
        %v3749 = vpack.c.b16 %v3733, %v3733
        %v3750 = vpack.c.b16 %v3734, %v3734
        %v3751 = vpack.c.b16 %v3735, %v3735
        %v3752 = vpack.c.b16 %v3736, %v3736
        %v3753 = vpack.c.b16 %v3737, %v3737
        %v3754 = vpack.c.b16 %v3738, %v3738
        %v3755 = vrot.slane %v3563, 5
        %v3756 = vrot.slane %v3739, 5
        %v3757 = vsel %vm3386, %v3755, %v3756
        %v3758 = vrot.slane %v3564, 5
        %v3759 = vrot.slane %v3740, 5
        %v3760 = vsel %vm3386, %v3758, %v3759
        %v3761 = vrot.slane %v3565, 5
        %v3762 = vrot.slane %v3741, 5
        %v3763 = vsel %vm3386, %v3761, %v3762
        %v3764 = vrot.slane %v3566, 5
        %v3765 = vrot.slane %v3742, 5
        %v3766 = vsel %vm3386, %v3764, %v3765
        %v3767 = vrot.slane %v3567, 5
        %v3768 = vrot.slane %v3743, 5
        %v3769 = vsel %vm3386, %v3767, %v3768
        %v3770 = vrot.slane %v3568, 5
        %v3771 = vrot.slane %v3744, 5
        %v3772 = vsel %vm3386, %v3770, %v3771
        %v3773 = vrot.slane %v3569, 5
        %v3774 = vrot.slane %v3745, 5
        %v3775 = vsel %vm3386, %v3773, %v3774
        %v3776 = vrot.slane %v3570, 5
        %v3777 = vrot.slane %v3746, 5
        %v3778 = vsel %vm3386, %v3776, %v3777
        %v3779 = vrot.slane %v3571, 5
        %v3780 = vrot.slane %v3747, 5
        %v3781 = vsel %vm3386, %v3779, %v3780
        %v3782 = vrot.slane %v3572, 5
        %v3783 = vrot.slane %v3748, 5
        %v3784 = vsel %vm3386, %v3782, %v3783
        %v3785 = vrot.slane %v3573, 5
        %v3786 = vrot.slane %v3749, 5
        %v3787 = vsel %vm3386, %v3785, %v3786
        %v3788 = vrot.slane %v3574, 5
        %v3789 = vrot.slane %v3750, 5
        %v3790 = vsel %vm3386, %v3788, %v3789
        %v3791 = vrot.slane %v3575, 5
        %v3792 = vrot.slane %v3751, 5
        %v3793 = vsel %vm3386, %v3791, %v3792
        %v3794 = vrot.slane %v3576, 5
        %v3795 = vrot.slane %v3752, 5
        %v3796 = vsel %vm3386, %v3794, %v3795
        %v3797 = vrot.slane %v3577, 5
        %v3798 = vrot.slane %v3753, 5
        %v3799 = vsel %vm3386, %v3797, %v3798
        %v3800 = vrot.slane %v3578, 5
        %v3801 = vrot.slane %v3754, 5
        %v3802 = vsel %vm3386, %v3800, %v3801
        %v3851 = vunpack.c.l.b16 %v3002
        %v3852 = vunpack.c.l.b16 %v3003
        %v3853 = vunpack.c.l.b16 %v3004
        %v3854 = vunpack.c.l.b16 %v3005
        %v3855 = vunpack.c.l.b16 %v3006
        %v3856 = vunpack.c.l.b16 %v3007
        %v3857 = vunpack.c.l.b16 %v3008
        %v3858 = vunpack.c.l.b16 %v3009
        %v3859 = vunpack.c.l.b16 %v3010
        %v3860 = vunpack.c.l.b16 %v3011
        %v3861 = vunpack.c.l.b16 %v3012
        %v3862 = vunpack.c.l.b16 %v3013
        %v3863 = vunpack.c.l.b16 %v3014
        %v3864 = vunpack.c.l.b16 %v3015
        %v3865 = vunpack.c.l.b16 %v3016
        %v3866 = vunpack.c.l.b16 %v3017
        %v3867 = vunpack.c.l.b16 %v3018
        %v3868 = vunpack.c.l.b16 %v3019
        %v3869 = vunpack.c.l.b16 %v3020
        %v3870 = vunpack.c.l.b16 %v3021
        %v3871 = vunpack.c.l.b16 %v3022
        %v3872 = vunpack.c.l.b16 %v3023
        %v3873 = vunpack.c.l.b16 %v3024
        %v3874 = vunpack.c.l.b16 %v3025
        %v3875 = vunpack.c.l.b16 %v3026
        %v3876 = vunpack.c.l.b16 %v3027
        %v3877 = vunpack.c.l.b16 %v3028
        %v3878 = vunpack.c.l.b16 %v3029
        %v3879 = vunpack.c.l.b16 %v3030
        %v3880 = vunpack.c.l.b16 %v3031
        %v3881 = vunpack.c.l.b16 %v3032
        %v3882 = vunpack.c.l.b16 %v3033
        %v3883 = vunpack.c.l.b16 %v3034
        %v3884 = vunpack.c.l.b16 %v3035
        %v3885 = vunpack.c.l.b16 %v3036
        %v3886 = vunpack.c.l.b16 %v3037
        %v3887 = vunpack.c.l.b16 %v3038
        %v3888 = vunpack.c.l.b16 %v3039
        %v3889 = vunpack.c.l.b16 %v3040
        %v3890 = vunpack.c.l.b16 %v3041
        %v3891 = vunpack.c.l.b16 %v3042
        %v3892 = vunpack.c.l.b16 %v3043
        %v3893 = vunpack.c.l.b16 %v3044
        %v3894 = vunpack.c.l.b16 %v3045
        %v3895 = vunpack.c.l.b16 %v3046
        %v3896 = vunpack.c.l.b16 %v3047
        %v3897 = vunpack.c.l.b16 %v3048
        %v3898 = vunpack.c.l.b16 %v3049
        %v3899 = vpack.c.b16 %v3852, %v3851
        %v3900 = vpack.c.b16 %v3853, %v3853
        %v3901 = vpack.c.b16 %v3855, %v3854
        %v3902 = vpack.c.b16 %v3856, %v3856
        %v3903 = vpack.c.b16 %v3858, %v3857
        %v3904 = vpack.c.b16 %v3859, %v3859
        %v3905 = vpack.c.b16 %v3861, %v3860
        %v3906 = vpack.c.b16 %v3862, %v3862
        %v3907 = vpack.c.b16 %v3864, %v3863
        %v3908 = vpack.c.b16 %v3865, %v3865
        %v3909 = vpack.c.b16 %v3867, %v3866
        %v3910 = vpack.c.b16 %v3868, %v3868
        %v3911 = vpack.c.b16 %v3870, %v3869
        %v3912 = vpack.c.b16 %v3871, %v3871
        %v3913 = vpack.c.b16 %v3873, %v3872
        %v3914 = vpack.c.b16 %v3874, %v3874
        %v3915 = vpack.c.b16 %v3876, %v3875
        %v3916 = vpack.c.b16 %v3877, %v3877
        %v3917 = vpack.c.b16 %v3879, %v3878
        %v3918 = vpack.c.b16 %v3880, %v3880
        %v3919 = vpack.c.b16 %v3882, %v3881
        %v3920 = vpack.c.b16 %v3883, %v3883
        %v3921 = vpack.c.b16 %v3885, %v3884
        %v3922 = vpack.c.b16 %v3886, %v3886
        %v3923 = vpack.c.b16 %v3888, %v3887
        %v3924 = vpack.c.b16 %v3889, %v3889
        %v3925 = vpack.c.b16 %v3891, %v3890
        %v3926 = vpack.c.b16 %v3892, %v3892
        %v3927 = vpack.c.b16 %v3894, %v3893
        %v3928 = vpack.c.b16 %v3895, %v3895
        %v3929 = vpack.c.b16 %v3897, %v3896
        %v3930 = vpack.c.b16 %v3898, %v3898
        %v3931 = vpack.c.b16 %v3853, %v3852
        %v3932 = vpack.c.b16 %v3856, %v3855
        %v3933 = vpack.c.b16 %v3859, %v3858
        %v3934 = vpack.c.b16 %v3862, %v3861
        %v3935 = vpack.c.b16 %v3865, %v3864
        %v3936 = vpack.c.b16 %v3868, %v3867
        %v3937 = vpack.c.b16 %v3871, %v3870
        %v3938 = vpack.c.b16 %v3874, %v3873
        %v3939 = vpack.c.b16 %v3877, %v3876
        %v3940 = vpack.c.b16 %v3880, %v3879
        %v3941 = vpack.c.b16 %v3883, %v3882
        %v3942 = vpack.c.b16 %v3886, %v3885
        %v3943 = vpack.c.b16 %v3889, %v3888
        %v3944 = vpack.c.b16 %v3892, %v3891
        %v3945 = vpack.c.b16 %v3895, %v3894
        %v3946 = vpack.c.b16 %v3898, %v3897
        %v3948 = vshrl.u32 %v3931, 16
        %v3950 = vrot.slane %v3948, 4
        %v3951 = vshll.u32 %v3931, 16
        %v3953 = vrot.slane %v3951, 5
        %v3954 = vor.u32 %v3950, %v3953
        %v3956 = vshrl.u32 %v3932, 16
        %v3958 = vrot.slane %v3956, 4
        %v3959 = vshll.u32 %v3932, 16
        %v3961 = vrot.slane %v3959, 5
        %v3962 = vor.u32 %v3958, %v3961
        %v3964 = vshrl.u32 %v3933, 16
        %v3966 = vrot.slane %v3964, 4
        %v3967 = vshll.u32 %v3933, 16
        %v3969 = vrot.slane %v3967, 5
        %v3970 = vor.u32 %v3966, %v3969
        %v3972 = vshrl.u32 %v3934, 16
        %v3974 = vrot.slane %v3972, 4
        %v3975 = vshll.u32 %v3934, 16
        %v3977 = vrot.slane %v3975, 5
        %v3978 = vor.u32 %v3974, %v3977
        %v3980 = vshrl.u32 %v3935, 16
        %v3982 = vrot.slane %v3980, 4
        %v3983 = vshll.u32 %v3935, 16
        %v3985 = vrot.slane %v3983, 5
        %v3986 = vor.u32 %v3982, %v3985
        %v3988 = vshrl.u32 %v3936, 16
        %v3990 = vrot.slane %v3988, 4
        %v3991 = vshll.u32 %v3936, 16
        %v3993 = vrot.slane %v3991, 5
        %v3994 = vor.u32 %v3990, %v3993
        %v3996 = vshrl.u32 %v3937, 16
        %v3998 = vrot.slane %v3996, 4
        %v3999 = vshll.u32 %v3937, 16
        %v4001 = vrot.slane %v3999, 5
        %v4002 = vor.u32 %v3998, %v4001
        %v4004 = vshrl.u32 %v3938, 16
        %v4006 = vrot.slane %v4004, 4
        %v4007 = vshll.u32 %v3938, 16
        %v4009 = vrot.slane %v4007, 5
        %v4010 = vor.u32 %v4006, %v4009
        %v4012 = vshrl.u32 %v3939, 16
        %v4014 = vrot.slane %v4012, 4
        %v4015 = vshll.u32 %v3939, 16
        %v4017 = vrot.slane %v4015, 5
        %v4018 = vor.u32 %v4014, %v4017
        %v4020 = vshrl.u32 %v3940, 16
        %v4022 = vrot.slane %v4020, 4
        %v4023 = vshll.u32 %v3940, 16
        %v4025 = vrot.slane %v4023, 5
        %v4026 = vor.u32 %v4022, %v4025
        %v4028 = vshrl.u32 %v3941, 16
        %v4030 = vrot.slane %v4028, 4
        %v4031 = vshll.u32 %v3941, 16
        %v4033 = vrot.slane %v4031, 5
        %v4034 = vor.u32 %v4030, %v4033
        %v4036 = vshrl.u32 %v3942, 16
        %v4038 = vrot.slane %v4036, 4
        %v4039 = vshll.u32 %v3942, 16
        %v4041 = vrot.slane %v4039, 5
        %v4042 = vor.u32 %v4038, %v4041
        %v4044 = vshrl.u32 %v3943, 16
        %v4046 = vrot.slane %v4044, 4
        %v4047 = vshll.u32 %v3943, 16
        %v4049 = vrot.slane %v4047, 5
        %v4050 = vor.u32 %v4046, %v4049
        %v4052 = vshrl.u32 %v3944, 16
        %v4054 = vrot.slane %v4052, 4
        %v4055 = vshll.u32 %v3944, 16
        %v4057 = vrot.slane %v4055, 5
        %v4058 = vor.u32 %v4054, %v4057
        %v4060 = vshrl.u32 %v3945, 16
        %v4062 = vrot.slane %v4060, 4
        %v4063 = vshll.u32 %v3945, 16
        %v4065 = vrot.slane %v4063, 5
        %v4066 = vor.u32 %v4062, %v4065
        %v4068 = vshrl.u32 %v3946, 16
        %v4070 = vrot.slane %v4068, 4
        %v4071 = vshll.u32 %v3946, 16
        %v4073 = vrot.slane %v4071, 5
        %v4074 = vor.u32 %v4070, %v4073
        %v4091 = vunpack.c.l.b16 %v3050
        %v4092 = vunpack.c.l.b16 %v3051
        %v4093 = vunpack.c.l.b16 %v3052
        %v4094 = vunpack.c.l.b16 %v3053
        %v4095 = vunpack.c.l.b16 %v3054
        %v4096 = vunpack.c.l.b16 %v3055
        %v4097 = vunpack.c.l.b16 %v3056
        %v4098 = vunpack.c.l.b16 %v3057
        %v4099 = vunpack.c.l.b16 %v3058
        %v4100 = vunpack.c.l.b16 %v3059
        %v4101 = vunpack.c.l.b16 %v3060
        %v4102 = vunpack.c.l.b16 %v3061
        %v4103 = vunpack.c.l.b16 %v3062
        %v4104 = vunpack.c.l.b16 %v3063
        %v4105 = vunpack.c.l.b16 %v3064
        %v4106 = vunpack.c.l.b16 %v3065
        %v4107 = vpack.c.b16 %v4091, %v4091
        %v4108 = vpack.c.b16 %v4092, %v4092
        %v4109 = vpack.c.b16 %v4093, %v4093
        %v4110 = vpack.c.b16 %v4094, %v4094
        %v4111 = vpack.c.b16 %v4095, %v4095
        %v4112 = vpack.c.b16 %v4096, %v4096
        %v4113 = vpack.c.b16 %v4097, %v4097
        %v4114 = vpack.c.b16 %v4098, %v4098
        %v4115 = vpack.c.b16 %v4099, %v4099
        %v4116 = vpack.c.b16 %v4100, %v4100
        %v4117 = vpack.c.b16 %v4101, %v4101
        %v4118 = vpack.c.b16 %v4102, %v4102
        %v4119 = vpack.c.b16 %v4103, %v4103
        %v4120 = vpack.c.b16 %v4104, %v4104
        %v4121 = vpack.c.b16 %v4105, %v4105
        %v4122 = vpack.c.b16 %v4106, %v4106
        %v4123 = vrot.slane %v3931, 5
        %v4124 = vrot.slane %v4107, 5
        %v4125 = vsel %vm3386, %v4123, %v4124
        %v4126 = vrot.slane %v3932, 5
        %v4127 = vrot.slane %v4108, 5
        %v4128 = vsel %vm3386, %v4126, %v4127
        %v4129 = vrot.slane %v3933, 5
        %v4130 = vrot.slane %v4109, 5
        %v4131 = vsel %vm3386, %v4129, %v4130
        %v4132 = vrot.slane %v3934, 5
        %v4133 = vrot.slane %v4110, 5
        %v4134 = vsel %vm3386, %v4132, %v4133
        %v4135 = vrot.slane %v3935, 5
        %v4136 = vrot.slane %v4111, 5
        %v4137 = vsel %vm3386, %v4135, %v4136
        %v4138 = vrot.slane %v3936, 5
        %v4139 = vrot.slane %v4112, 5
        %v4140 = vsel %vm3386, %v4138, %v4139
        %v4141 = vrot.slane %v3937, 5
        %v4142 = vrot.slane %v4113, 5
        %v4143 = vsel %vm3386, %v4141, %v4142
        %v4144 = vrot.slane %v3938, 5
        %v4145 = vrot.slane %v4114, 5
        %v4146 = vsel %vm3386, %v4144, %v4145
        %v4147 = vrot.slane %v3939, 5
        %v4148 = vrot.slane %v4115, 5
        %v4149 = vsel %vm3386, %v4147, %v4148
        %v4150 = vrot.slane %v3940, 5
        %v4151 = vrot.slane %v4116, 5
        %v4152 = vsel %vm3386, %v4150, %v4151
        %v4153 = vrot.slane %v3941, 5
        %v4154 = vrot.slane %v4117, 5
        %v4155 = vsel %vm3386, %v4153, %v4154
        %v4156 = vrot.slane %v3942, 5
        %v4157 = vrot.slane %v4118, 5
        %v4158 = vsel %vm3386, %v4156, %v4157
        %v4159 = vrot.slane %v3943, 5
        %v4160 = vrot.slane %v4119, 5
        %v4161 = vsel %vm3386, %v4159, %v4160
        %v4162 = vrot.slane %v3944, 5
        %v4163 = vrot.slane %v4120, 5
        %v4164 = vsel %vm3386, %v4162, %v4163
        %v4165 = vrot.slane %v3945, 5
        %v4166 = vrot.slane %v4121, 5
        %v4167 = vsel %vm3386, %v4165, %v4166
        %v4168 = vrot.slane %v3946, 5
        %v4169 = vrot.slane %v4122, 5
        %v4170 = vsel %vm3386, %v4168, %v4169
        %vm4171 = vsmask.f32 4352
        %v4173 = vshrl.u32 %v3162, 16
        %v4175 = vrot.slane %v4173, 3
        %v4176 = vshll.u32 %v3162, 16
        %v4178 = vrot.slane %v4176, 4
        %v4179 = vor.u32 %v4175, %v4178
        %v4181 = vshrl.u32 %v3163, 16
        %v4183 = vrot.slane %v4181, 3
        %v4184 = vshll.u32 %v3163, 16
        %v4186 = vrot.slane %v4184, 4
        %v4187 = vor.u32 %v4183, %v4186
        %v4188 = vsel %vm4171, %v4179, %v4187
        %v4190 = vshrl.u32 %v3217, 16
        %v4192 = vrot.slane %v4190, 3
        %v4193 = vshll.u32 %v3217, 16
        %v4195 = vrot.slane %v4193, 4
        %v4196 = vor.u32 %v4192, %v4195
        %v4197 = vsel %vm4171, %v4196, %v4196
        %v4199 = vshrl.u32 %v3387, 16
        %v4201 = vrot.slane %v4199, 3
        %v4202 = vshll.u32 %v3387, 16
        %v4204 = vrot.slane %v4202, 4
        %v4205 = vor.u32 %v4201, %v4204
        %v4207 = vshrl.u32 %v3389, 16
        %v4209 = vrot.slane %v4207, 3
        %v4210 = vshll.u32 %v3389, 16
        %v4212 = vrot.slane %v4210, 4
        %v4213 = vor.u32 %v4209, %v4212
        %v4214 = vsel %vm4171, %v4205, %v4213
        %v4216 = vshrl.u32 %v3531, 16
        %v4218 = vrot.slane %v4216, 3
        %v4219 = vshll.u32 %v3531, 16
        %v4221 = vrot.slane %v4219, 4
        %v4222 = vor.u32 %v4218, %v4221
        %v4224 = vshrl.u32 %v3532, 16
        %v4226 = vrot.slane %v4224, 3
        %v4227 = vshll.u32 %v3532, 16
        %v4229 = vrot.slane %v4227, 4
        %v4230 = vor.u32 %v4226, %v4229
        %v4231 = vsel %vm4171, %v4222, %v4230
        %v4233 = vshrl.u32 %v3586, 16
        %v4235 = vrot.slane %v4233, 3
        %v4236 = vshll.u32 %v3586, 16
        %v4238 = vrot.slane %v4236, 4
        %v4239 = vor.u32 %v4235, %v4238
        %v4240 = vsel %vm4171, %v4239, %v4239
        %v4242 = vshrl.u32 %v3755, 16
        %v4244 = vrot.slane %v4242, 3
        %v4245 = vshll.u32 %v3755, 16
        %v4247 = vrot.slane %v4245, 4
        %v4248 = vor.u32 %v4244, %v4247
        %v4250 = vshrl.u32 %v3757, 16
        %v4252 = vrot.slane %v4250, 3
        %v4253 = vshll.u32 %v3757, 16
        %v4255 = vrot.slane %v4253, 4
        %v4256 = vor.u32 %v4252, %v4255
        %v4257 = vsel %vm4171, %v4248, %v4256
        %v4259 = vshrl.u32 %v3899, 16
        %v4261 = vrot.slane %v4259, 3
        %v4262 = vshll.u32 %v3899, 16
        %v4264 = vrot.slane %v4262, 4
        %v4265 = vor.u32 %v4261, %v4264
        %v4267 = vshrl.u32 %v3900, 16
        %v4269 = vrot.slane %v4267, 3
        %v4270 = vshll.u32 %v3900, 16
        %v4272 = vrot.slane %v4270, 4
        %v4273 = vor.u32 %v4269, %v4272
        %v4274 = vsel %vm4171, %v4265, %v4273
        %v4276 = vshrl.u32 %v3954, 16
        %v4278 = vrot.slane %v4276, 3
        %v4279 = vshll.u32 %v3954, 16
        %v4281 = vrot.slane %v4279, 4
        %v4282 = vor.u32 %v4278, %v4281
        %v4283 = vsel %vm4171, %v4282, %v4282
        %v4285 = vshrl.u32 %v4123, 16
        %v4287 = vrot.slane %v4285, 3
        %v4288 = vshll.u32 %v4123, 16
        %v4290 = vrot.slane %v4288, 4
        %v4291 = vor.u32 %v4287, %v4290
        %v4293 = vshrl.u32 %v4125, 16
        %v4295 = vrot.slane %v4293, 3
        %v4296 = vshll.u32 %v4125, 16
        %v4298 = vrot.slane %v4296, 4
        %v4299 = vor.u32 %v4295, %v4298
        %v4300 = vsel %vm4171, %v4291, %v4299
        %v4302 = vshrl.u32 %v3164, 16
        %v4304 = vrot.slane %v4302, 3
        %v4305 = vshll.u32 %v3164, 16
        %v4307 = vrot.slane %v4305, 4
        %v4308 = vor.u32 %v4304, %v4307
        %v4310 = vshrl.u32 %v3165, 16
        %v4312 = vrot.slane %v4310, 3
        %v4313 = vshll.u32 %v3165, 16
        %v4315 = vrot.slane %v4313, 4
        %v4316 = vor.u32 %v4312, %v4315
        %v4317 = vsel %vm4171, %v4308, %v4316
        %v4319 = vshrl.u32 %v3225, 16
        %v4321 = vrot.slane %v4319, 3
        %v4322 = vshll.u32 %v3225, 16
        %v4324 = vrot.slane %v4322, 4
        %v4325 = vor.u32 %v4321, %v4324
        %v4326 = vsel %vm4171, %v4325, %v4325
        %v4328 = vshrl.u32 %v3390, 16
        %v4330 = vrot.slane %v4328, 3
        %v4331 = vshll.u32 %v3390, 16
        %v4333 = vrot.slane %v4331, 4
        %v4334 = vor.u32 %v4330, %v4333
        %v4336 = vshrl.u32 %v3392, 16
        %v4338 = vrot.slane %v4336, 3
        %v4339 = vshll.u32 %v3392, 16
        %v4341 = vrot.slane %v4339, 4
        %v4342 = vor.u32 %v4338, %v4341
        %v4343 = vsel %vm4171, %v4334, %v4342
        %v4345 = vshrl.u32 %v3533, 16
        %v4347 = vrot.slane %v4345, 3
        %v4348 = vshll.u32 %v3533, 16
        %v4350 = vrot.slane %v4348, 4
        %v4351 = vor.u32 %v4347, %v4350
        %v4353 = vshrl.u32 %v3534, 16
        %v4355 = vrot.slane %v4353, 3
        %v4356 = vshll.u32 %v3534, 16
        %v4358 = vrot.slane %v4356, 4
        %v4359 = vor.u32 %v4355, %v4358
        %v4360 = vsel %vm4171, %v4351, %v4359
        %v4362 = vshrl.u32 %v3594, 16
        %v4364 = vrot.slane %v4362, 3
        %v4365 = vshll.u32 %v3594, 16
        %v4367 = vrot.slane %v4365, 4
        %v4368 = vor.u32 %v4364, %v4367
        %v4369 = vsel %vm4171, %v4368, %v4368
        %v4371 = vshrl.u32 %v3758, 16
        %v4373 = vrot.slane %v4371, 3
        %v4374 = vshll.u32 %v3758, 16
        %v4376 = vrot.slane %v4374, 4
        %v4377 = vor.u32 %v4373, %v4376
        %v4379 = vshrl.u32 %v3760, 16
        %v4381 = vrot.slane %v4379, 3
        %v4382 = vshll.u32 %v3760, 16
        %v4384 = vrot.slane %v4382, 4
        %v4385 = vor.u32 %v4381, %v4384
        %v4386 = vsel %vm4171, %v4377, %v4385
        %v4388 = vshrl.u32 %v3901, 16
        %v4390 = vrot.slane %v4388, 3
        %v4391 = vshll.u32 %v3901, 16
        %v4393 = vrot.slane %v4391, 4
        %v4394 = vor.u32 %v4390, %v4393
        %v4396 = vshrl.u32 %v3902, 16
        %v4398 = vrot.slane %v4396, 3
        %v4399 = vshll.u32 %v3902, 16
        %v4401 = vrot.slane %v4399, 4
        %v4402 = vor.u32 %v4398, %v4401
        %v4403 = vsel %vm4171, %v4394, %v4402
        %v4405 = vshrl.u32 %v3962, 16
        %v4407 = vrot.slane %v4405, 3
        %v4408 = vshll.u32 %v3962, 16
        %v4410 = vrot.slane %v4408, 4
        %v4411 = vor.u32 %v4407, %v4410
        %v4412 = vsel %vm4171, %v4411, %v4411
        %v4414 = vshrl.u32 %v4126, 16
        %v4416 = vrot.slane %v4414, 3
        %v4417 = vshll.u32 %v4126, 16
        %v4419 = vrot.slane %v4417, 4
        %v4420 = vor.u32 %v4416, %v4419
        %v4422 = vshrl.u32 %v4128, 16
        %v4424 = vrot.slane %v4422, 3
        %v4425 = vshll.u32 %v4128, 16
        %v4427 = vrot.slane %v4425, 4
        %v4428 = vor.u32 %v4424, %v4427
        %v4429 = vsel %vm4171, %v4420, %v4428
        %v4431 = vshrl.u32 %v3166, 16
        %v4433 = vrot.slane %v4431, 3
        %v4434 = vshll.u32 %v3166, 16
        %v4436 = vrot.slane %v4434, 4
        %v4437 = vor.u32 %v4433, %v4436
        %v4439 = vshrl.u32 %v3167, 16
        %v4441 = vrot.slane %v4439, 3
        %v4442 = vshll.u32 %v3167, 16
        %v4444 = vrot.slane %v4442, 4
        %v4445 = vor.u32 %v4441, %v4444
        %v4446 = vsel %vm4171, %v4437, %v4445
        %v4448 = vshrl.u32 %v3233, 16
        %v4450 = vrot.slane %v4448, 3
        %v4451 = vshll.u32 %v3233, 16
        %v4453 = vrot.slane %v4451, 4
        %v4454 = vor.u32 %v4450, %v4453
        %v4455 = vsel %vm4171, %v4454, %v4454
        %v4457 = vshrl.u32 %v3393, 16
        %v4459 = vrot.slane %v4457, 3
        %v4460 = vshll.u32 %v3393, 16
        %v4462 = vrot.slane %v4460, 4
        %v4463 = vor.u32 %v4459, %v4462
        %v4465 = vshrl.u32 %v3395, 16
        %v4467 = vrot.slane %v4465, 3
        %v4468 = vshll.u32 %v3395, 16
        %v4470 = vrot.slane %v4468, 4
        %v4471 = vor.u32 %v4467, %v4470
        %v4472 = vsel %vm4171, %v4463, %v4471
        %v4474 = vshrl.u32 %v3535, 16
        %v4476 = vrot.slane %v4474, 3
        %v4477 = vshll.u32 %v3535, 16
        %v4479 = vrot.slane %v4477, 4
        %v4480 = vor.u32 %v4476, %v4479
        %v4482 = vshrl.u32 %v3536, 16
        %v4484 = vrot.slane %v4482, 3
        %v4485 = vshll.u32 %v3536, 16
        %v4487 = vrot.slane %v4485, 4
        %v4488 = vor.u32 %v4484, %v4487
        %v4489 = vsel %vm4171, %v4480, %v4488
        %v4491 = vshrl.u32 %v3602, 16
        %v4493 = vrot.slane %v4491, 3
        %v4494 = vshll.u32 %v3602, 16
        %v4496 = vrot.slane %v4494, 4
        %v4497 = vor.u32 %v4493, %v4496
        %v4498 = vsel %vm4171, %v4497, %v4497
        %v4500 = vshrl.u32 %v3761, 16
        %v4502 = vrot.slane %v4500, 3
        %v4503 = vshll.u32 %v3761, 16
        %v4505 = vrot.slane %v4503, 4
        %v4506 = vor.u32 %v4502, %v4505
        %v4508 = vshrl.u32 %v3763, 16
        %v4510 = vrot.slane %v4508, 3
        %v4511 = vshll.u32 %v3763, 16
        %v4513 = vrot.slane %v4511, 4
        %v4514 = vor.u32 %v4510, %v4513
        %v4515 = vsel %vm4171, %v4506, %v4514
        %v4517 = vshrl.u32 %v3903, 16
        %v4519 = vrot.slane %v4517, 3
        %v4520 = vshll.u32 %v3903, 16
        %v4522 = vrot.slane %v4520, 4
        %v4523 = vor.u32 %v4519, %v4522
        %v4525 = vshrl.u32 %v3904, 16
        %v4527 = vrot.slane %v4525, 3
        %v4528 = vshll.u32 %v3904, 16
        %v4530 = vrot.slane %v4528, 4
        %v4531 = vor.u32 %v4527, %v4530
        %v4532 = vsel %vm4171, %v4523, %v4531
        %v4534 = vshrl.u32 %v3970, 16
        %v4536 = vrot.slane %v4534, 3
        %v4537 = vshll.u32 %v3970, 16
        %v4539 = vrot.slane %v4537, 4
        %v4540 = vor.u32 %v4536, %v4539
        %v4541 = vsel %vm4171, %v4540, %v4540
        %v4543 = vshrl.u32 %v4129, 16
        %v4545 = vrot.slane %v4543, 3
        %v4546 = vshll.u32 %v4129, 16
        %v4548 = vrot.slane %v4546, 4
        %v4549 = vor.u32 %v4545, %v4548
        %v4551 = vshrl.u32 %v4131, 16
        %v4553 = vrot.slane %v4551, 3
        %v4554 = vshll.u32 %v4131, 16
        %v4556 = vrot.slane %v4554, 4
        %v4557 = vor.u32 %v4553, %v4556
        %v4558 = vsel %vm4171, %v4549, %v4557
        %v4560 = vshrl.u32 %v3168, 16
        %v4562 = vrot.slane %v4560, 3
        %v4563 = vshll.u32 %v3168, 16
        %v4565 = vrot.slane %v4563, 4
        %v4566 = vor.u32 %v4562, %v4565
        %v4568 = vshrl.u32 %v3169, 16
        %v4570 = vrot.slane %v4568, 3
        %v4571 = vshll.u32 %v3169, 16
        %v4573 = vrot.slane %v4571, 4
        %v4574 = vor.u32 %v4570, %v4573
        %v4575 = vsel %vm4171, %v4566, %v4574
        %v4577 = vshrl.u32 %v3241, 16
        %v4579 = vrot.slane %v4577, 3
        %v4580 = vshll.u32 %v3241, 16
        %v4582 = vrot.slane %v4580, 4
        %v4583 = vor.u32 %v4579, %v4582
        %v4584 = vsel %vm4171, %v4583, %v4583
        %v4586 = vshrl.u32 %v3396, 16
        %v4588 = vrot.slane %v4586, 3
        %v4589 = vshll.u32 %v3396, 16
        %v4591 = vrot.slane %v4589, 4
        %v4592 = vor.u32 %v4588, %v4591
        %v4594 = vshrl.u32 %v3398, 16
        %v4596 = vrot.slane %v4594, 3
        %v4597 = vshll.u32 %v3398, 16
        %v4599 = vrot.slane %v4597, 4
        %v4600 = vor.u32 %v4596, %v4599
        %v4601 = vsel %vm4171, %v4592, %v4600
        %v4603 = vshrl.u32 %v3537, 16
        %v4605 = vrot.slane %v4603, 3
        %v4606 = vshll.u32 %v3537, 16
        %v4608 = vrot.slane %v4606, 4
        %v4609 = vor.u32 %v4605, %v4608
        %v4611 = vshrl.u32 %v3538, 16
        %v4613 = vrot.slane %v4611, 3
        %v4614 = vshll.u32 %v3538, 16
        %v4616 = vrot.slane %v4614, 4
        %v4617 = vor.u32 %v4613, %v4616
        %v4618 = vsel %vm4171, %v4609, %v4617
        %v4620 = vshrl.u32 %v3610, 16
        %v4622 = vrot.slane %v4620, 3
        %v4623 = vshll.u32 %v3610, 16
        %v4625 = vrot.slane %v4623, 4
        %v4626 = vor.u32 %v4622, %v4625
        %v4627 = vsel %vm4171, %v4626, %v4626
        %v4629 = vshrl.u32 %v3764, 16
        %v4631 = vrot.slane %v4629, 3
        %v4632 = vshll.u32 %v3764, 16
        %v4634 = vrot.slane %v4632, 4
        %v4635 = vor.u32 %v4631, %v4634
        %v4637 = vshrl.u32 %v3766, 16
        %v4639 = vrot.slane %v4637, 3
        %v4640 = vshll.u32 %v3766, 16
        %v4642 = vrot.slane %v4640, 4
        %v4643 = vor.u32 %v4639, %v4642
        %v4644 = vsel %vm4171, %v4635, %v4643
        %v4646 = vshrl.u32 %v3905, 16
        %v4648 = vrot.slane %v4646, 3
        %v4649 = vshll.u32 %v3905, 16
        %v4651 = vrot.slane %v4649, 4
        %v4652 = vor.u32 %v4648, %v4651
        %v4654 = vshrl.u32 %v3906, 16
        %v4656 = vrot.slane %v4654, 3
        %v4657 = vshll.u32 %v3906, 16
        %v4659 = vrot.slane %v4657, 4
        %v4660 = vor.u32 %v4656, %v4659
        %v4661 = vsel %vm4171, %v4652, %v4660
        %v4663 = vshrl.u32 %v3978, 16
        %v4665 = vrot.slane %v4663, 3
        %v4666 = vshll.u32 %v3978, 16
        %v4668 = vrot.slane %v4666, 4
        %v4669 = vor.u32 %v4665, %v4668
        %v4670 = vsel %vm4171, %v4669, %v4669
        %v4672 = vshrl.u32 %v4132, 16
        %v4674 = vrot.slane %v4672, 3
        %v4675 = vshll.u32 %v4132, 16
        %v4677 = vrot.slane %v4675, 4
        %v4678 = vor.u32 %v4674, %v4677
        %v4680 = vshrl.u32 %v4134, 16
        %v4682 = vrot.slane %v4680, 3
        %v4683 = vshll.u32 %v4134, 16
        %v4685 = vrot.slane %v4683, 4
        %v4686 = vor.u32 %v4682, %v4685
        %v4687 = vsel %vm4171, %v4678, %v4686
        %v4689 = vshrl.u32 %v3170, 16
        %v4691 = vrot.slane %v4689, 3
        %v4692 = vshll.u32 %v3170, 16
        %v4694 = vrot.slane %v4692, 4
        %v4695 = vor.u32 %v4691, %v4694
        %v4697 = vshrl.u32 %v3171, 16
        %v4699 = vrot.slane %v4697, 3
        %v4700 = vshll.u32 %v3171, 16
        %v4702 = vrot.slane %v4700, 4
        %v4703 = vor.u32 %v4699, %v4702
        %v4704 = vsel %vm4171, %v4695, %v4703
        %v4706 = vshrl.u32 %v3249, 16
        %v4708 = vrot.slane %v4706, 3
        %v4709 = vshll.u32 %v3249, 16
        %v4711 = vrot.slane %v4709, 4
        %v4712 = vor.u32 %v4708, %v4711
        %v4713 = vsel %vm4171, %v4712, %v4712
        %v4715 = vshrl.u32 %v3399, 16
        %v4717 = vrot.slane %v4715, 3
        %v4718 = vshll.u32 %v3399, 16
        %v4720 = vrot.slane %v4718, 4
        %v4721 = vor.u32 %v4717, %v4720
        %v4723 = vshrl.u32 %v3401, 16
        %v4725 = vrot.slane %v4723, 3
        %v4726 = vshll.u32 %v3401, 16
        %v4728 = vrot.slane %v4726, 4
        %v4729 = vor.u32 %v4725, %v4728
        %v4730 = vsel %vm4171, %v4721, %v4729
        %v4732 = vshrl.u32 %v3539, 16
        %v4734 = vrot.slane %v4732, 3
        %v4735 = vshll.u32 %v3539, 16
        %v4737 = vrot.slane %v4735, 4
        %v4738 = vor.u32 %v4734, %v4737
        %v4740 = vshrl.u32 %v3540, 16
        %v4742 = vrot.slane %v4740, 3
        %v4743 = vshll.u32 %v3540, 16
        %v4745 = vrot.slane %v4743, 4
        %v4746 = vor.u32 %v4742, %v4745
        %v4747 = vsel %vm4171, %v4738, %v4746
        %v4749 = vshrl.u32 %v3618, 16
        %v4751 = vrot.slane %v4749, 3
        %v4752 = vshll.u32 %v3618, 16
        %v4754 = vrot.slane %v4752, 4
        %v4755 = vor.u32 %v4751, %v4754
        %v4756 = vsel %vm4171, %v4755, %v4755
        %v4758 = vshrl.u32 %v3767, 16
        %v4760 = vrot.slane %v4758, 3
        %v4761 = vshll.u32 %v3767, 16
        %v4763 = vrot.slane %v4761, 4
        %v4764 = vor.u32 %v4760, %v4763
        %v4766 = vshrl.u32 %v3769, 16
        %v4768 = vrot.slane %v4766, 3
        %v4769 = vshll.u32 %v3769, 16
        %v4771 = vrot.slane %v4769, 4
        %v4772 = vor.u32 %v4768, %v4771
        %v4773 = vsel %vm4171, %v4764, %v4772
        %v4775 = vshrl.u32 %v3907, 16
        %v4777 = vrot.slane %v4775, 3
        %v4778 = vshll.u32 %v3907, 16
        %v4780 = vrot.slane %v4778, 4
        %v4781 = vor.u32 %v4777, %v4780
        %v4783 = vshrl.u32 %v3908, 16
        %v4785 = vrot.slane %v4783, 3
        %v4786 = vshll.u32 %v3908, 16
        %v4788 = vrot.slane %v4786, 4
        %v4789 = vor.u32 %v4785, %v4788
        %v4790 = vsel %vm4171, %v4781, %v4789
        %v4792 = vshrl.u32 %v3986, 16
        %v4794 = vrot.slane %v4792, 3
        %v4795 = vshll.u32 %v3986, 16
        %v4797 = vrot.slane %v4795, 4
        %v4798 = vor.u32 %v4794, %v4797
        %v4799 = vsel %vm4171, %v4798, %v4798
        %v4801 = vshrl.u32 %v4135, 16
        %v4803 = vrot.slane %v4801, 3
        %v4804 = vshll.u32 %v4135, 16
        %v4806 = vrot.slane %v4804, 4
        %v4807 = vor.u32 %v4803, %v4806
        %v4809 = vshrl.u32 %v4137, 16
        %v4811 = vrot.slane %v4809, 3
        %v4812 = vshll.u32 %v4137, 16
        %v4814 = vrot.slane %v4812, 4
        %v4815 = vor.u32 %v4811, %v4814
        %v4816 = vsel %vm4171, %v4807, %v4815
        %v4818 = vshrl.u32 %v3172, 16
        %v4820 = vrot.slane %v4818, 3
        %v4821 = vshll.u32 %v3172, 16
        %v4823 = vrot.slane %v4821, 4
        %v4824 = vor.u32 %v4820, %v4823
        %v4826 = vshrl.u32 %v3173, 16
        %v4828 = vrot.slane %v4826, 3
        %v4829 = vshll.u32 %v3173, 16
        %v4831 = vrot.slane %v4829, 4
        %v4832 = vor.u32 %v4828, %v4831
        %v4833 = vsel %vm4171, %v4824, %v4832
        %v4835 = vshrl.u32 %v3257, 16
        %v4837 = vrot.slane %v4835, 3
        %v4838 = vshll.u32 %v3257, 16
        %v4840 = vrot.slane %v4838, 4
        %v4841 = vor.u32 %v4837, %v4840
        %v4842 = vsel %vm4171, %v4841, %v4841
        %v4844 = vshrl.u32 %v3402, 16
        %v4846 = vrot.slane %v4844, 3
        %v4847 = vshll.u32 %v3402, 16
        %v4849 = vrot.slane %v4847, 4
        %v4850 = vor.u32 %v4846, %v4849
        %v4852 = vshrl.u32 %v3404, 16
        %v4854 = vrot.slane %v4852, 3
        %v4855 = vshll.u32 %v3404, 16
        %v4857 = vrot.slane %v4855, 4
        %v4858 = vor.u32 %v4854, %v4857
        %v4859 = vsel %vm4171, %v4850, %v4858
        %v4861 = vshrl.u32 %v3541, 16
        %v4863 = vrot.slane %v4861, 3
        %v4864 = vshll.u32 %v3541, 16
        %v4866 = vrot.slane %v4864, 4
        %v4867 = vor.u32 %v4863, %v4866
        %v4869 = vshrl.u32 %v3542, 16
        %v4871 = vrot.slane %v4869, 3
        %v4872 = vshll.u32 %v3542, 16
        %v4874 = vrot.slane %v4872, 4
        %v4875 = vor.u32 %v4871, %v4874
        %v4876 = vsel %vm4171, %v4867, %v4875
        %v4878 = vshrl.u32 %v3626, 16
        %v4880 = vrot.slane %v4878, 3
        %v4881 = vshll.u32 %v3626, 16
        %v4883 = vrot.slane %v4881, 4
        %v4884 = vor.u32 %v4880, %v4883
        %v4885 = vsel %vm4171, %v4884, %v4884
        %v4887 = vshrl.u32 %v3770, 16
        %v4889 = vrot.slane %v4887, 3
        %v4890 = vshll.u32 %v3770, 16
        %v4892 = vrot.slane %v4890, 4
        %v4893 = vor.u32 %v4889, %v4892
        %v4895 = vshrl.u32 %v3772, 16
        %v4897 = vrot.slane %v4895, 3
        %v4898 = vshll.u32 %v3772, 16
        %v4900 = vrot.slane %v4898, 4
        %v4901 = vor.u32 %v4897, %v4900
        %v4902 = vsel %vm4171, %v4893, %v4901
        %v4904 = vshrl.u32 %v3909, 16
        %v4906 = vrot.slane %v4904, 3
        %v4907 = vshll.u32 %v3909, 16
        %v4909 = vrot.slane %v4907, 4
        %v4910 = vor.u32 %v4906, %v4909
        %v4912 = vshrl.u32 %v3910, 16
        %v4914 = vrot.slane %v4912, 3
        %v4915 = vshll.u32 %v3910, 16
        %v4917 = vrot.slane %v4915, 4
        %v4918 = vor.u32 %v4914, %v4917
        %v4919 = vsel %vm4171, %v4910, %v4918
        %v4921 = vshrl.u32 %v3994, 16
        %v4923 = vrot.slane %v4921, 3
        %v4924 = vshll.u32 %v3994, 16
        %v4926 = vrot.slane %v4924, 4
        %v4927 = vor.u32 %v4923, %v4926
        %v4928 = vsel %vm4171, %v4927, %v4927
        %v4930 = vshrl.u32 %v4138, 16
        %v4932 = vrot.slane %v4930, 3
        %v4933 = vshll.u32 %v4138, 16
        %v4935 = vrot.slane %v4933, 4
        %v4936 = vor.u32 %v4932, %v4935
        %v4938 = vshrl.u32 %v4140, 16
        %v4940 = vrot.slane %v4938, 3
        %v4941 = vshll.u32 %v4140, 16
        %v4943 = vrot.slane %v4941, 4
        %v4944 = vor.u32 %v4940, %v4943
        %v4945 = vsel %vm4171, %v4936, %v4944
        %v4947 = vshrl.u32 %v3174, 16
        %v4949 = vrot.slane %v4947, 3
        %v4950 = vshll.u32 %v3174, 16
        %v4952 = vrot.slane %v4950, 4
        %v4953 = vor.u32 %v4949, %v4952
        %v4955 = vshrl.u32 %v3175, 16
        %v4957 = vrot.slane %v4955, 3
        %v4958 = vshll.u32 %v3175, 16
        %v4960 = vrot.slane %v4958, 4
        %v4961 = vor.u32 %v4957, %v4960
        %v4962 = vsel %vm4171, %v4953, %v4961
        %v4964 = vshrl.u32 %v3265, 16
        %v4966 = vrot.slane %v4964, 3
        %v4967 = vshll.u32 %v3265, 16
        %v4969 = vrot.slane %v4967, 4
        %v4970 = vor.u32 %v4966, %v4969
        %v4971 = vsel %vm4171, %v4970, %v4970
        %v4973 = vshrl.u32 %v3405, 16
        %v4975 = vrot.slane %v4973, 3
        %v4976 = vshll.u32 %v3405, 16
        %v4978 = vrot.slane %v4976, 4
        %v4979 = vor.u32 %v4975, %v4978
        %v4981 = vshrl.u32 %v3407, 16
        %v4983 = vrot.slane %v4981, 3
        %v4984 = vshll.u32 %v3407, 16
        %v4986 = vrot.slane %v4984, 4
        %v4987 = vor.u32 %v4983, %v4986
        %v4988 = vsel %vm4171, %v4979, %v4987
        %v4990 = vshrl.u32 %v3543, 16
        %v4992 = vrot.slane %v4990, 3
        %v4993 = vshll.u32 %v3543, 16
        %v4995 = vrot.slane %v4993, 4
        %v4996 = vor.u32 %v4992, %v4995
        %v4998 = vshrl.u32 %v3544, 16
        %v5000 = vrot.slane %v4998, 3
        %v5001 = vshll.u32 %v3544, 16
        %v5003 = vrot.slane %v5001, 4
        %v5004 = vor.u32 %v5000, %v5003
        %v5005 = vsel %vm4171, %v4996, %v5004
        %v5007 = vshrl.u32 %v3634, 16
        %v5009 = vrot.slane %v5007, 3
        %v5010 = vshll.u32 %v3634, 16
        %v5012 = vrot.slane %v5010, 4
        %v5013 = vor.u32 %v5009, %v5012
        %v5014 = vsel %vm4171, %v5013, %v5013
        %v5016 = vshrl.u32 %v3773, 16
        %v5018 = vrot.slane %v5016, 3
        %v5019 = vshll.u32 %v3773, 16
        %v5021 = vrot.slane %v5019, 4
        %v5022 = vor.u32 %v5018, %v5021
        %v5024 = vshrl.u32 %v3775, 16
        %v5026 = vrot.slane %v5024, 3
        %v5027 = vshll.u32 %v3775, 16
        %v5029 = vrot.slane %v5027, 4
        %v5030 = vor.u32 %v5026, %v5029
        %v5031 = vsel %vm4171, %v5022, %v5030
        %v5033 = vshrl.u32 %v3911, 16
        %v5035 = vrot.slane %v5033, 3
        %v5036 = vshll.u32 %v3911, 16
        %v5038 = vrot.slane %v5036, 4
        %v5039 = vor.u32 %v5035, %v5038
        %v5041 = vshrl.u32 %v3912, 16
        %v5043 = vrot.slane %v5041, 3
        %v5044 = vshll.u32 %v3912, 16
        %v5046 = vrot.slane %v5044, 4
        %v5047 = vor.u32 %v5043, %v5046
        %v5048 = vsel %vm4171, %v5039, %v5047
        %v5050 = vshrl.u32 %v4002, 16
        %v5052 = vrot.slane %v5050, 3
        %v5053 = vshll.u32 %v4002, 16
        %v5055 = vrot.slane %v5053, 4
        %v5056 = vor.u32 %v5052, %v5055
        %v5057 = vsel %vm4171, %v5056, %v5056
        %v5059 = vshrl.u32 %v4141, 16
        %v5061 = vrot.slane %v5059, 3
        %v5062 = vshll.u32 %v4141, 16
        %v5064 = vrot.slane %v5062, 4
        %v5065 = vor.u32 %v5061, %v5064
        %v5067 = vshrl.u32 %v4143, 16
        %v5069 = vrot.slane %v5067, 3
        %v5070 = vshll.u32 %v4143, 16
        %v5072 = vrot.slane %v5070, 4
        %v5073 = vor.u32 %v5069, %v5072
        %v5074 = vsel %vm4171, %v5065, %v5073
        %v5076 = vshrl.u32 %v3176, 16
        %v5078 = vrot.slane %v5076, 3
        %v5079 = vshll.u32 %v3176, 16
        %v5081 = vrot.slane %v5079, 4
        %v5082 = vor.u32 %v5078, %v5081
        %v5084 = vshrl.u32 %v3177, 16
        %v5086 = vrot.slane %v5084, 3
        %v5087 = vshll.u32 %v3177, 16
        %v5089 = vrot.slane %v5087, 4
        %v5090 = vor.u32 %v5086, %v5089
        %v5091 = vsel %vm4171, %v5082, %v5090
        %v5093 = vshrl.u32 %v3273, 16
        %v5095 = vrot.slane %v5093, 3
        %v5096 = vshll.u32 %v3273, 16
        %v5098 = vrot.slane %v5096, 4
        %v5099 = vor.u32 %v5095, %v5098
        %v5100 = vsel %vm4171, %v5099, %v5099
        %v5102 = vshrl.u32 %v3408, 16
        %v5104 = vrot.slane %v5102, 3
        %v5105 = vshll.u32 %v3408, 16
        %v5107 = vrot.slane %v5105, 4
        %v5108 = vor.u32 %v5104, %v5107
        %v5110 = vshrl.u32 %v3410, 16
        %v5112 = vrot.slane %v5110, 3
        %v5113 = vshll.u32 %v3410, 16
        %v5115 = vrot.slane %v5113, 4
        %v5116 = vor.u32 %v5112, %v5115
        %v5117 = vsel %vm4171, %v5108, %v5116
        %v5119 = vshrl.u32 %v3545, 16
        %v5121 = vrot.slane %v5119, 3
        %v5122 = vshll.u32 %v3545, 16
        %v5124 = vrot.slane %v5122, 4
        %v5125 = vor.u32 %v5121, %v5124
        %v5127 = vshrl.u32 %v3546, 16
        %v5129 = vrot.slane %v5127, 3
        %v5130 = vshll.u32 %v3546, 16
        %v5132 = vrot.slane %v5130, 4
        %v5133 = vor.u32 %v5129, %v5132
        %v5134 = vsel %vm4171, %v5125, %v5133
        %v5136 = vshrl.u32 %v3642, 16
        %v5138 = vrot.slane %v5136, 3
        %v5139 = vshll.u32 %v3642, 16
        %v5141 = vrot.slane %v5139, 4
        %v5142 = vor.u32 %v5138, %v5141
        %v5143 = vsel %vm4171, %v5142, %v5142
        %v5145 = vshrl.u32 %v3776, 16
        %v5147 = vrot.slane %v5145, 3
        %v5148 = vshll.u32 %v3776, 16
        %v5150 = vrot.slane %v5148, 4
        %v5151 = vor.u32 %v5147, %v5150
        %v5153 = vshrl.u32 %v3778, 16
        %v5155 = vrot.slane %v5153, 3
        %v5156 = vshll.u32 %v3778, 16
        %v5158 = vrot.slane %v5156, 4
        %v5159 = vor.u32 %v5155, %v5158
        %v5160 = vsel %vm4171, %v5151, %v5159
        %v5162 = vshrl.u32 %v3913, 16
        %v5164 = vrot.slane %v5162, 3
        %v5165 = vshll.u32 %v3913, 16
        %v5167 = vrot.slane %v5165, 4
        %v5168 = vor.u32 %v5164, %v5167
        %v5170 = vshrl.u32 %v3914, 16
        %v5172 = vrot.slane %v5170, 3
        %v5173 = vshll.u32 %v3914, 16
        %v5175 = vrot.slane %v5173, 4
        %v5176 = vor.u32 %v5172, %v5175
        %v5177 = vsel %vm4171, %v5168, %v5176
        %v5179 = vshrl.u32 %v4010, 16
        %v5181 = vrot.slane %v5179, 3
        %v5182 = vshll.u32 %v4010, 16
        %v5184 = vrot.slane %v5182, 4
        %v5185 = vor.u32 %v5181, %v5184
        %v5186 = vsel %vm4171, %v5185, %v5185
        %v5188 = vshrl.u32 %v4144, 16
        %v5190 = vrot.slane %v5188, 3
        %v5191 = vshll.u32 %v4144, 16
        %v5193 = vrot.slane %v5191, 4
        %v5194 = vor.u32 %v5190, %v5193
        %v5196 = vshrl.u32 %v4146, 16
        %v5198 = vrot.slane %v5196, 3
        %v5199 = vshll.u32 %v4146, 16
        %v5201 = vrot.slane %v5199, 4
        %v5202 = vor.u32 %v5198, %v5201
        %v5203 = vsel %vm4171, %v5194, %v5202
        %v5205 = vshrl.u32 %v3178, 16
        %v5207 = vrot.slane %v5205, 3
        %v5208 = vshll.u32 %v3178, 16
        %v5210 = vrot.slane %v5208, 4
        %v5211 = vor.u32 %v5207, %v5210
        %v5213 = vshrl.u32 %v3179, 16
        %v5215 = vrot.slane %v5213, 3
        %v5216 = vshll.u32 %v3179, 16
        %v5218 = vrot.slane %v5216, 4
        %v5219 = vor.u32 %v5215, %v5218
        %v5220 = vsel %vm4171, %v5211, %v5219
        %v5222 = vshrl.u32 %v3281, 16
        %v5224 = vrot.slane %v5222, 3
        %v5225 = vshll.u32 %v3281, 16
        %v5227 = vrot.slane %v5225, 4
        %v5228 = vor.u32 %v5224, %v5227
        %v5229 = vsel %vm4171, %v5228, %v5228
        %v5231 = vshrl.u32 %v3411, 16
        %v5233 = vrot.slane %v5231, 3
        %v5234 = vshll.u32 %v3411, 16
        %v5236 = vrot.slane %v5234, 4
        %v5237 = vor.u32 %v5233, %v5236
        %v5239 = vshrl.u32 %v3413, 16
        %v5241 = vrot.slane %v5239, 3
        %v5242 = vshll.u32 %v3413, 16
        %v5244 = vrot.slane %v5242, 4
        %v5245 = vor.u32 %v5241, %v5244
        %v5246 = vsel %vm4171, %v5237, %v5245
        %v5248 = vshrl.u32 %v3547, 16
        %v5250 = vrot.slane %v5248, 3
        %v5251 = vshll.u32 %v3547, 16
        %v5253 = vrot.slane %v5251, 4
        %v5254 = vor.u32 %v5250, %v5253
        %v5256 = vshrl.u32 %v3548, 16
        %v5258 = vrot.slane %v5256, 3
        %v5259 = vshll.u32 %v3548, 16
        %v5261 = vrot.slane %v5259, 4
        %v5262 = vor.u32 %v5258, %v5261
        %v5263 = vsel %vm4171, %v5254, %v5262
        %v5265 = vshrl.u32 %v3650, 16
        %v5267 = vrot.slane %v5265, 3
        %v5268 = vshll.u32 %v3650, 16
        %v5270 = vrot.slane %v5268, 4
        %v5271 = vor.u32 %v5267, %v5270
        %v5272 = vsel %vm4171, %v5271, %v5271
        %v5274 = vshrl.u32 %v3779, 16
        %v5276 = vrot.slane %v5274, 3
        %v5277 = vshll.u32 %v3779, 16
        %v5279 = vrot.slane %v5277, 4
        %v5280 = vor.u32 %v5276, %v5279
        %v5282 = vshrl.u32 %v3781, 16
        %v5284 = vrot.slane %v5282, 3
        %v5285 = vshll.u32 %v3781, 16
        %v5287 = vrot.slane %v5285, 4
        %v5288 = vor.u32 %v5284, %v5287
        %v5289 = vsel %vm4171, %v5280, %v5288
        %v5291 = vshrl.u32 %v3915, 16
        %v5293 = vrot.slane %v5291, 3
        %v5294 = vshll.u32 %v3915, 16
        %v5296 = vrot.slane %v5294, 4
        %v5297 = vor.u32 %v5293, %v5296
        %v5299 = vshrl.u32 %v3916, 16
        %v5301 = vrot.slane %v5299, 3
        %v5302 = vshll.u32 %v3916, 16
        %v5304 = vrot.slane %v5302, 4
        %v5305 = vor.u32 %v5301, %v5304
        %v5306 = vsel %vm4171, %v5297, %v5305
        %v5308 = vshrl.u32 %v4018, 16
        %v5310 = vrot.slane %v5308, 3
        %v5311 = vshll.u32 %v4018, 16
        %v5313 = vrot.slane %v5311, 4
        %v5314 = vor.u32 %v5310, %v5313
        %v5315 = vsel %vm4171, %v5314, %v5314
        %v5317 = vshrl.u32 %v4147, 16
        %v5319 = vrot.slane %v5317, 3
        %v5320 = vshll.u32 %v4147, 16
        %v5322 = vrot.slane %v5320, 4
        %v5323 = vor.u32 %v5319, %v5322
        %v5325 = vshrl.u32 %v4149, 16
        %v5327 = vrot.slane %v5325, 3
        %v5328 = vshll.u32 %v4149, 16
        %v5330 = vrot.slane %v5328, 4
        %v5331 = vor.u32 %v5327, %v5330
        %v5332 = vsel %vm4171, %v5323, %v5331
        %v5334 = vshrl.u32 %v3180, 16
        %v5336 = vrot.slane %v5334, 3
        %v5337 = vshll.u32 %v3180, 16
        %v5339 = vrot.slane %v5337, 4
        %v5340 = vor.u32 %v5336, %v5339
        %v5342 = vshrl.u32 %v3181, 16
        %v5344 = vrot.slane %v5342, 3
        %v5345 = vshll.u32 %v3181, 16
        %v5347 = vrot.slane %v5345, 4
        %v5348 = vor.u32 %v5344, %v5347
        %v5349 = vsel %vm4171, %v5340, %v5348
        %v5351 = vshrl.u32 %v3289, 16
        %v5353 = vrot.slane %v5351, 3
        %v5354 = vshll.u32 %v3289, 16
        %v5356 = vrot.slane %v5354, 4
        %v5357 = vor.u32 %v5353, %v5356
        %v5358 = vsel %vm4171, %v5357, %v5357
        %v5360 = vshrl.u32 %v3414, 16
        %v5362 = vrot.slane %v5360, 3
        %v5363 = vshll.u32 %v3414, 16
        %v5365 = vrot.slane %v5363, 4
        %v5366 = vor.u32 %v5362, %v5365
        %v5368 = vshrl.u32 %v3416, 16
        %v5370 = vrot.slane %v5368, 3
        %v5371 = vshll.u32 %v3416, 16
        %v5373 = vrot.slane %v5371, 4
        %v5374 = vor.u32 %v5370, %v5373
        %v5375 = vsel %vm4171, %v5366, %v5374
        %v5377 = vshrl.u32 %v3549, 16
        %v5379 = vrot.slane %v5377, 3
        %v5380 = vshll.u32 %v3549, 16
        %v5382 = vrot.slane %v5380, 4
        %v5383 = vor.u32 %v5379, %v5382
        %v5385 = vshrl.u32 %v3550, 16
        %v5387 = vrot.slane %v5385, 3
        %v5388 = vshll.u32 %v3550, 16
        %v5390 = vrot.slane %v5388, 4
        %v5391 = vor.u32 %v5387, %v5390
        %v5392 = vsel %vm4171, %v5383, %v5391
        %v5394 = vshrl.u32 %v3658, 16
        %v5396 = vrot.slane %v5394, 3
        %v5397 = vshll.u32 %v3658, 16
        %v5399 = vrot.slane %v5397, 4
        %v5400 = vor.u32 %v5396, %v5399
        %v5401 = vsel %vm4171, %v5400, %v5400
        %v5403 = vshrl.u32 %v3782, 16
        %v5405 = vrot.slane %v5403, 3
        %v5406 = vshll.u32 %v3782, 16
        %v5408 = vrot.slane %v5406, 4
        %v5409 = vor.u32 %v5405, %v5408
        %v5411 = vshrl.u32 %v3784, 16
        %v5413 = vrot.slane %v5411, 3
        %v5414 = vshll.u32 %v3784, 16
        %v5416 = vrot.slane %v5414, 4
        %v5417 = vor.u32 %v5413, %v5416
        %v5418 = vsel %vm4171, %v5409, %v5417
        %v5420 = vshrl.u32 %v3917, 16
        %v5422 = vrot.slane %v5420, 3
        %v5423 = vshll.u32 %v3917, 16
        %v5425 = vrot.slane %v5423, 4
        %v5426 = vor.u32 %v5422, %v5425
        %v5428 = vshrl.u32 %v3918, 16
        %v5430 = vrot.slane %v5428, 3
        %v5431 = vshll.u32 %v3918, 16
        %v5433 = vrot.slane %v5431, 4
        %v5434 = vor.u32 %v5430, %v5433
        %v5435 = vsel %vm4171, %v5426, %v5434
        %v5437 = vshrl.u32 %v4026, 16
        %v5439 = vrot.slane %v5437, 3
        %v5440 = vshll.u32 %v4026, 16
        %v5442 = vrot.slane %v5440, 4
        %v5443 = vor.u32 %v5439, %v5442
        %v5444 = vsel %vm4171, %v5443, %v5443
        %v5446 = vshrl.u32 %v4150, 16
        %v5448 = vrot.slane %v5446, 3
        %v5449 = vshll.u32 %v4150, 16
        %v5451 = vrot.slane %v5449, 4
        %v5452 = vor.u32 %v5448, %v5451
        %v5454 = vshrl.u32 %v4152, 16
        %v5456 = vrot.slane %v5454, 3
        %v5457 = vshll.u32 %v4152, 16
        %v5459 = vrot.slane %v5457, 4
        %v5460 = vor.u32 %v5456, %v5459
        %v5461 = vsel %vm4171, %v5452, %v5460
        %v5463 = vshrl.u32 %v3182, 16
        %v5465 = vrot.slane %v5463, 3
        %v5466 = vshll.u32 %v3182, 16
        %v5468 = vrot.slane %v5466, 4
        %v5469 = vor.u32 %v5465, %v5468
        %v5471 = vshrl.u32 %v3183, 16
        %v5473 = vrot.slane %v5471, 3
        %v5474 = vshll.u32 %v3183, 16
        %v5476 = vrot.slane %v5474, 4
        %v5477 = vor.u32 %v5473, %v5476
        %v5478 = vsel %vm4171, %v5469, %v5477
        %v5480 = vshrl.u32 %v3297, 16
        %v5482 = vrot.slane %v5480, 3
        %v5483 = vshll.u32 %v3297, 16
        %v5485 = vrot.slane %v5483, 4
        %v5486 = vor.u32 %v5482, %v5485
        %v5487 = vsel %vm4171, %v5486, %v5486
        %v5489 = vshrl.u32 %v3417, 16
        %v5491 = vrot.slane %v5489, 3
        %v5492 = vshll.u32 %v3417, 16
        %v5494 = vrot.slane %v5492, 4
        %v5495 = vor.u32 %v5491, %v5494
        %v5497 = vshrl.u32 %v3419, 16
        %v5499 = vrot.slane %v5497, 3
        %v5500 = vshll.u32 %v3419, 16
        %v5502 = vrot.slane %v5500, 4
        %v5503 = vor.u32 %v5499, %v5502
        %v5504 = vsel %vm4171, %v5495, %v5503
        %v5506 = vshrl.u32 %v3551, 16
        %v5508 = vrot.slane %v5506, 3
        %v5509 = vshll.u32 %v3551, 16
        %v5511 = vrot.slane %v5509, 4
        %v5512 = vor.u32 %v5508, %v5511
        %v5514 = vshrl.u32 %v3552, 16
        %v5516 = vrot.slane %v5514, 3
        %v5517 = vshll.u32 %v3552, 16
        %v5519 = vrot.slane %v5517, 4
        %v5520 = vor.u32 %v5516, %v5519
        %v5521 = vsel %vm4171, %v5512, %v5520
        %v5523 = vshrl.u32 %v3666, 16
        %v5525 = vrot.slane %v5523, 3
        %v5526 = vshll.u32 %v3666, 16
        %v5528 = vrot.slane %v5526, 4
        %v5529 = vor.u32 %v5525, %v5528
        %v5530 = vsel %vm4171, %v5529, %v5529
        %v5532 = vshrl.u32 %v3785, 16
        %v5534 = vrot.slane %v5532, 3
        %v5535 = vshll.u32 %v3785, 16
        %v5537 = vrot.slane %v5535, 4
        %v5538 = vor.u32 %v5534, %v5537
        %v5540 = vshrl.u32 %v3787, 16
        %v5542 = vrot.slane %v5540, 3
        %v5543 = vshll.u32 %v3787, 16
        %v5545 = vrot.slane %v5543, 4
        %v5546 = vor.u32 %v5542, %v5545
        %v5547 = vsel %vm4171, %v5538, %v5546
        %v5549 = vshrl.u32 %v3919, 16
        %v5551 = vrot.slane %v5549, 3
        %v5552 = vshll.u32 %v3919, 16
        %v5554 = vrot.slane %v5552, 4
        %v5555 = vor.u32 %v5551, %v5554
        %v5557 = vshrl.u32 %v3920, 16
        %v5559 = vrot.slane %v5557, 3
        %v5560 = vshll.u32 %v3920, 16
        %v5562 = vrot.slane %v5560, 4
        %v5563 = vor.u32 %v5559, %v5562
        %v5564 = vsel %vm4171, %v5555, %v5563
        %v5566 = vshrl.u32 %v4034, 16
        %v5568 = vrot.slane %v5566, 3
        %v5569 = vshll.u32 %v4034, 16
        %v5571 = vrot.slane %v5569, 4
        %v5572 = vor.u32 %v5568, %v5571
        %v5573 = vsel %vm4171, %v5572, %v5572
        %v5575 = vshrl.u32 %v4153, 16
        %v5577 = vrot.slane %v5575, 3
        %v5578 = vshll.u32 %v4153, 16
        %v5580 = vrot.slane %v5578, 4
        %v5581 = vor.u32 %v5577, %v5580
        %v5583 = vshrl.u32 %v4155, 16
        %v5585 = vrot.slane %v5583, 3
        %v5586 = vshll.u32 %v4155, 16
        %v5588 = vrot.slane %v5586, 4
        %v5589 = vor.u32 %v5585, %v5588
        %v5590 = vsel %vm4171, %v5581, %v5589
        %v5592 = vshrl.u32 %v3184, 16
        %v5594 = vrot.slane %v5592, 3
        %v5595 = vshll.u32 %v3184, 16
        %v5597 = vrot.slane %v5595, 4
        %v5598 = vor.u32 %v5594, %v5597
        %v5600 = vshrl.u32 %v3185, 16
        %v5602 = vrot.slane %v5600, 3
        %v5603 = vshll.u32 %v3185, 16
        %v5605 = vrot.slane %v5603, 4
        %v5606 = vor.u32 %v5602, %v5605
        %v5607 = vsel %vm4171, %v5598, %v5606
        %v5609 = vshrl.u32 %v3305, 16
        %v5611 = vrot.slane %v5609, 3
        %v5612 = vshll.u32 %v3305, 16
        %v5614 = vrot.slane %v5612, 4
        %v5615 = vor.u32 %v5611, %v5614
        %v5616 = vsel %vm4171, %v5615, %v5615
        %v5618 = vshrl.u32 %v3420, 16
        %v5620 = vrot.slane %v5618, 3
        %v5621 = vshll.u32 %v3420, 16
        %v5623 = vrot.slane %v5621, 4
        %v5624 = vor.u32 %v5620, %v5623
        %v5626 = vshrl.u32 %v3422, 16
        %v5628 = vrot.slane %v5626, 3
        %v5629 = vshll.u32 %v3422, 16
        %v5631 = vrot.slane %v5629, 4
        %v5632 = vor.u32 %v5628, %v5631
        %v5633 = vsel %vm4171, %v5624, %v5632
        %v5635 = vshrl.u32 %v3553, 16
        %v5637 = vrot.slane %v5635, 3
        %v5638 = vshll.u32 %v3553, 16
        %v5640 = vrot.slane %v5638, 4
        %v5641 = vor.u32 %v5637, %v5640
        %v5643 = vshrl.u32 %v3554, 16
        %v5645 = vrot.slane %v5643, 3
        %v5646 = vshll.u32 %v3554, 16
        %v5648 = vrot.slane %v5646, 4
        %v5649 = vor.u32 %v5645, %v5648
        %v5650 = vsel %vm4171, %v5641, %v5649
        %v5652 = vshrl.u32 %v3674, 16
        %v5654 = vrot.slane %v5652, 3
        %v5655 = vshll.u32 %v3674, 16
        %v5657 = vrot.slane %v5655, 4
        %v5658 = vor.u32 %v5654, %v5657
        %v5659 = vsel %vm4171, %v5658, %v5658
        %v5661 = vshrl.u32 %v3788, 16
        %v5663 = vrot.slane %v5661, 3
        %v5664 = vshll.u32 %v3788, 16
        %v5666 = vrot.slane %v5664, 4
        %v5667 = vor.u32 %v5663, %v5666
        %v5669 = vshrl.u32 %v3790, 16
        %v5671 = vrot.slane %v5669, 3
        %v5672 = vshll.u32 %v3790, 16
        %v5674 = vrot.slane %v5672, 4
        %v5675 = vor.u32 %v5671, %v5674
        %v5676 = vsel %vm4171, %v5667, %v5675
        %v5678 = vshrl.u32 %v3921, 16
        %v5680 = vrot.slane %v5678, 3
        %v5681 = vshll.u32 %v3921, 16
        %v5683 = vrot.slane %v5681, 4
        %v5684 = vor.u32 %v5680, %v5683
        %v5686 = vshrl.u32 %v3922, 16
        %v5688 = vrot.slane %v5686, 3
        %v5689 = vshll.u32 %v3922, 16
        %v5691 = vrot.slane %v5689, 4
        %v5692 = vor.u32 %v5688, %v5691
        %v5693 = vsel %vm4171, %v5684, %v5692
        %v5695 = vshrl.u32 %v4042, 16
        %v5697 = vrot.slane %v5695, 3
        %v5698 = vshll.u32 %v4042, 16
        %v5700 = vrot.slane %v5698, 4
        %v5701 = vor.u32 %v5697, %v5700
        %v5702 = vsel %vm4171, %v5701, %v5701
        %v5704 = vshrl.u32 %v4156, 16
        %v5706 = vrot.slane %v5704, 3
        %v5707 = vshll.u32 %v4156, 16
        %v5709 = vrot.slane %v5707, 4
        %v5710 = vor.u32 %v5706, %v5709
        %v5712 = vshrl.u32 %v4158, 16
        %v5714 = vrot.slane %v5712, 3
        %v5715 = vshll.u32 %v4158, 16
        %v5717 = vrot.slane %v5715, 4
        %v5718 = vor.u32 %v5714, %v5717
        %v5719 = vsel %vm4171, %v5710, %v5718
        %v5721 = vshrl.u32 %v3186, 16
        %v5723 = vrot.slane %v5721, 3
        %v5724 = vshll.u32 %v3186, 16
        %v5726 = vrot.slane %v5724, 4
        %v5727 = vor.u32 %v5723, %v5726
        %v5729 = vshrl.u32 %v3187, 16
        %v5731 = vrot.slane %v5729, 3
        %v5732 = vshll.u32 %v3187, 16
        %v5734 = vrot.slane %v5732, 4
        %v5735 = vor.u32 %v5731, %v5734
        %v5736 = vsel %vm4171, %v5727, %v5735
        %v5738 = vshrl.u32 %v3313, 16
        %v5740 = vrot.slane %v5738, 3
        %v5741 = vshll.u32 %v3313, 16
        %v5743 = vrot.slane %v5741, 4
        %v5744 = vor.u32 %v5740, %v5743
        %v5745 = vsel %vm4171, %v5744, %v5744
        %v5747 = vshrl.u32 %v3423, 16
        %v5749 = vrot.slane %v5747, 3
        %v5750 = vshll.u32 %v3423, 16
        %v5752 = vrot.slane %v5750, 4
        %v5753 = vor.u32 %v5749, %v5752
        %v5755 = vshrl.u32 %v3425, 16
        %v5757 = vrot.slane %v5755, 3
        %v5758 = vshll.u32 %v3425, 16
        %v5760 = vrot.slane %v5758, 4
        %v5761 = vor.u32 %v5757, %v5760
        %v5762 = vsel %vm4171, %v5753, %v5761
        %v5764 = vshrl.u32 %v3555, 16
        %v5766 = vrot.slane %v5764, 3
        %v5767 = vshll.u32 %v3555, 16
        %v5769 = vrot.slane %v5767, 4
        %v5770 = vor.u32 %v5766, %v5769
        %v5772 = vshrl.u32 %v3556, 16
        %v5774 = vrot.slane %v5772, 3
        %v5775 = vshll.u32 %v3556, 16
        %v5777 = vrot.slane %v5775, 4
        %v5778 = vor.u32 %v5774, %v5777
        %v5779 = vsel %vm4171, %v5770, %v5778
        %v5781 = vshrl.u32 %v3682, 16
        %v5783 = vrot.slane %v5781, 3
        %v5784 = vshll.u32 %v3682, 16
        %v5786 = vrot.slane %v5784, 4
        %v5787 = vor.u32 %v5783, %v5786
        %v5788 = vsel %vm4171, %v5787, %v5787
        %v5790 = vshrl.u32 %v3791, 16
        %v5792 = vrot.slane %v5790, 3
        %v5793 = vshll.u32 %v3791, 16
        %v5795 = vrot.slane %v5793, 4
        %v5796 = vor.u32 %v5792, %v5795
        %v5798 = vshrl.u32 %v3793, 16
        %v5800 = vrot.slane %v5798, 3
        %v5801 = vshll.u32 %v3793, 16
        %v5803 = vrot.slane %v5801, 4
        %v5804 = vor.u32 %v5800, %v5803
        %v5805 = vsel %vm4171, %v5796, %v5804
        %v5807 = vshrl.u32 %v3923, 16
        %v5809 = vrot.slane %v5807, 3
        %v5810 = vshll.u32 %v3923, 16
        %v5812 = vrot.slane %v5810, 4
        %v5813 = vor.u32 %v5809, %v5812
        %v5815 = vshrl.u32 %v3924, 16
        %v5817 = vrot.slane %v5815, 3
        %v5818 = vshll.u32 %v3924, 16
        %v5820 = vrot.slane %v5818, 4
        %v5821 = vor.u32 %v5817, %v5820
        %v5822 = vsel %vm4171, %v5813, %v5821
        %v5824 = vshrl.u32 %v4050, 16
        %v5826 = vrot.slane %v5824, 3
        %v5827 = vshll.u32 %v4050, 16
        %v5829 = vrot.slane %v5827, 4
        %v5830 = vor.u32 %v5826, %v5829
        %v5831 = vsel %vm4171, %v5830, %v5830
        %v5833 = vshrl.u32 %v4159, 16
        %v5835 = vrot.slane %v5833, 3
        %v5836 = vshll.u32 %v4159, 16
        %v5838 = vrot.slane %v5836, 4
        %v5839 = vor.u32 %v5835, %v5838
        %v5841 = vshrl.u32 %v4161, 16
        %v5843 = vrot.slane %v5841, 3
        %v5844 = vshll.u32 %v4161, 16
        %v5846 = vrot.slane %v5844, 4
        %v5847 = vor.u32 %v5843, %v5846
        %v5848 = vsel %vm4171, %v5839, %v5847
        %v5850 = vshrl.u32 %v3188, 16
        %v5852 = vrot.slane %v5850, 3
        %v5853 = vshll.u32 %v3188, 16
        %v5855 = vrot.slane %v5853, 4
        %v5856 = vor.u32 %v5852, %v5855
        %v5858 = vshrl.u32 %v3189, 16
        %v5860 = vrot.slane %v5858, 3
        %v5861 = vshll.u32 %v3189, 16
        %v5863 = vrot.slane %v5861, 4
        %v5864 = vor.u32 %v5860, %v5863
        %v5865 = vsel %vm4171, %v5856, %v5864
        %v5867 = vshrl.u32 %v3321, 16
        %v5869 = vrot.slane %v5867, 3
        %v5870 = vshll.u32 %v3321, 16
        %v5872 = vrot.slane %v5870, 4
        %v5873 = vor.u32 %v5869, %v5872
        %v5874 = vsel %vm4171, %v5873, %v5873
        %v5876 = vshrl.u32 %v3426, 16
        %v5878 = vrot.slane %v5876, 3
        %v5879 = vshll.u32 %v3426, 16
        %v5881 = vrot.slane %v5879, 4
        %v5882 = vor.u32 %v5878, %v5881
        %v5884 = vshrl.u32 %v3428, 16
        %v5886 = vrot.slane %v5884, 3
        %v5887 = vshll.u32 %v3428, 16
        %v5889 = vrot.slane %v5887, 4
        %v5890 = vor.u32 %v5886, %v5889
        %v5891 = vsel %vm4171, %v5882, %v5890
        %v5893 = vshrl.u32 %v3557, 16
        %v5895 = vrot.slane %v5893, 3
        %v5896 = vshll.u32 %v3557, 16
        %v5898 = vrot.slane %v5896, 4
        %v5899 = vor.u32 %v5895, %v5898
        %v5901 = vshrl.u32 %v3558, 16
        %v5903 = vrot.slane %v5901, 3
        %v5904 = vshll.u32 %v3558, 16
        %v5906 = vrot.slane %v5904, 4
        %v5907 = vor.u32 %v5903, %v5906
        %v5908 = vsel %vm4171, %v5899, %v5907
        %v5910 = vshrl.u32 %v3690, 16
        %v5912 = vrot.slane %v5910, 3
        %v5913 = vshll.u32 %v3690, 16
        %v5915 = vrot.slane %v5913, 4
        %v5916 = vor.u32 %v5912, %v5915
        %v5917 = vsel %vm4171, %v5916, %v5916
        %v5919 = vshrl.u32 %v3794, 16
        %v5921 = vrot.slane %v5919, 3
        %v5922 = vshll.u32 %v3794, 16
        %v5924 = vrot.slane %v5922, 4
        %v5925 = vor.u32 %v5921, %v5924
        %v5927 = vshrl.u32 %v3796, 16
        %v5929 = vrot.slane %v5927, 3
        %v5930 = vshll.u32 %v3796, 16
        %v5932 = vrot.slane %v5930, 4
        %v5933 = vor.u32 %v5929, %v5932
        %v5934 = vsel %vm4171, %v5925, %v5933
        %v5936 = vshrl.u32 %v3925, 16
        %v5938 = vrot.slane %v5936, 3
        %v5939 = vshll.u32 %v3925, 16
        %v5941 = vrot.slane %v5939, 4
        %v5942 = vor.u32 %v5938, %v5941
        %v5944 = vshrl.u32 %v3926, 16
        %v5946 = vrot.slane %v5944, 3
        %v5947 = vshll.u32 %v3926, 16
        %v5949 = vrot.slane %v5947, 4
        %v5950 = vor.u32 %v5946, %v5949
        %v5951 = vsel %vm4171, %v5942, %v5950
        %v5953 = vshrl.u32 %v4058, 16
        %v5955 = vrot.slane %v5953, 3
        %v5956 = vshll.u32 %v4058, 16
        %v5958 = vrot.slane %v5956, 4
        %v5959 = vor.u32 %v5955, %v5958
        %v5960 = vsel %vm4171, %v5959, %v5959
        %v5962 = vshrl.u32 %v4162, 16
        %v5964 = vrot.slane %v5962, 3
        %v5965 = vshll.u32 %v4162, 16
        %v5967 = vrot.slane %v5965, 4
        %v5968 = vor.u32 %v5964, %v5967
        %v5970 = vshrl.u32 %v4164, 16
        %v5972 = vrot.slane %v5970, 3
        %v5973 = vshll.u32 %v4164, 16
        %v5975 = vrot.slane %v5973, 4
        %v5976 = vor.u32 %v5972, %v5975
        %v5977 = vsel %vm4171, %v5968, %v5976
        %v5979 = vshrl.u32 %v3190, 16
        %v5981 = vrot.slane %v5979, 3
        %v5982 = vshll.u32 %v3190, 16
        %v5984 = vrot.slane %v5982, 4
        %v5985 = vor.u32 %v5981, %v5984
        %v5987 = vshrl.u32 %v3191, 16
        %v5989 = vrot.slane %v5987, 3
        %v5990 = vshll.u32 %v3191, 16
        %v5992 = vrot.slane %v5990, 4
        %v5993 = vor.u32 %v5989, %v5992
        %v5994 = vsel %vm4171, %v5985, %v5993
        %v5996 = vshrl.u32 %v3329, 16
        %v5998 = vrot.slane %v5996, 3
        %v5999 = vshll.u32 %v3329, 16
        %v6001 = vrot.slane %v5999, 4
        %v6002 = vor.u32 %v5998, %v6001
        %v6003 = vsel %vm4171, %v6002, %v6002
        %v6005 = vshrl.u32 %v3429, 16
        %v6007 = vrot.slane %v6005, 3
        %v6008 = vshll.u32 %v3429, 16
        %v6010 = vrot.slane %v6008, 4
        %v6011 = vor.u32 %v6007, %v6010
        %v6013 = vshrl.u32 %v3431, 16
        %v6015 = vrot.slane %v6013, 3
        %v6016 = vshll.u32 %v3431, 16
        %v6018 = vrot.slane %v6016, 4
        %v6019 = vor.u32 %v6015, %v6018
        %v6020 = vsel %vm4171, %v6011, %v6019
        %v6022 = vshrl.u32 %v3559, 16
        %v6024 = vrot.slane %v6022, 3
        %v6025 = vshll.u32 %v3559, 16
        %v6027 = vrot.slane %v6025, 4
        %v6028 = vor.u32 %v6024, %v6027
        %v6030 = vshrl.u32 %v3560, 16
        %v6032 = vrot.slane %v6030, 3
        %v6033 = vshll.u32 %v3560, 16
        %v6035 = vrot.slane %v6033, 4
        %v6036 = vor.u32 %v6032, %v6035
        %v6037 = vsel %vm4171, %v6028, %v6036
        %v6039 = vshrl.u32 %v3698, 16
        %v6041 = vrot.slane %v6039, 3
        %v6042 = vshll.u32 %v3698, 16
        %v6044 = vrot.slane %v6042, 4
        %v6045 = vor.u32 %v6041, %v6044
        %v6046 = vsel %vm4171, %v6045, %v6045
        %v6048 = vshrl.u32 %v3797, 16
        %v6050 = vrot.slane %v6048, 3
        %v6051 = vshll.u32 %v3797, 16
        %v6053 = vrot.slane %v6051, 4
        %v6054 = vor.u32 %v6050, %v6053
        %v6056 = vshrl.u32 %v3799, 16
        %v6058 = vrot.slane %v6056, 3
        %v6059 = vshll.u32 %v3799, 16
        %v6061 = vrot.slane %v6059, 4
        %v6062 = vor.u32 %v6058, %v6061
        %v6063 = vsel %vm4171, %v6054, %v6062
        %v6065 = vshrl.u32 %v3927, 16
        %v6067 = vrot.slane %v6065, 3
        %v6068 = vshll.u32 %v3927, 16
        %v6070 = vrot.slane %v6068, 4
        %v6071 = vor.u32 %v6067, %v6070
        %v6073 = vshrl.u32 %v3928, 16
        %v6075 = vrot.slane %v6073, 3
        %v6076 = vshll.u32 %v3928, 16
        %v6078 = vrot.slane %v6076, 4
        %v6079 = vor.u32 %v6075, %v6078
        %v6080 = vsel %vm4171, %v6071, %v6079
        %v6082 = vshrl.u32 %v4066, 16
        %v6084 = vrot.slane %v6082, 3
        %v6085 = vshll.u32 %v4066, 16
        %v6087 = vrot.slane %v6085, 4
        %v6088 = vor.u32 %v6084, %v6087
        %v6089 = vsel %vm4171, %v6088, %v6088
        %v6091 = vshrl.u32 %v4165, 16
        %v6093 = vrot.slane %v6091, 3
        %v6094 = vshll.u32 %v4165, 16
        %v6096 = vrot.slane %v6094, 4
        %v6097 = vor.u32 %v6093, %v6096
        %v6099 = vshrl.u32 %v4167, 16
        %v6101 = vrot.slane %v6099, 3
        %v6102 = vshll.u32 %v4167, 16
        %v6104 = vrot.slane %v6102, 4
        %v6105 = vor.u32 %v6101, %v6104
        %v6106 = vsel %vm4171, %v6097, %v6105
        %v6108 = vshrl.u32 %v3192, 16
        %v6110 = vrot.slane %v6108, 3
        %v6111 = vshll.u32 %v3192, 16
        %v6113 = vrot.slane %v6111, 4
        %v6114 = vor.u32 %v6110, %v6113
        %v6116 = vshrl.u32 %v3193, 16
        %v6118 = vrot.slane %v6116, 3
        %v6119 = vshll.u32 %v3193, 16
        %v6121 = vrot.slane %v6119, 4
        %v6122 = vor.u32 %v6118, %v6121
        %v6123 = vsel %vm4171, %v6114, %v6122
        %v6125 = vshrl.u32 %v3337, 16
        %v6127 = vrot.slane %v6125, 3
        %v6128 = vshll.u32 %v3337, 16
        %v6130 = vrot.slane %v6128, 4
        %v6131 = vor.u32 %v6127, %v6130
        %v6132 = vsel %vm4171, %v6131, %v6131
        %v6134 = vshrl.u32 %v3432, 16
        %v6136 = vrot.slane %v6134, 3
        %v6137 = vshll.u32 %v3432, 16
        %v6139 = vrot.slane %v6137, 4
        %v6140 = vor.u32 %v6136, %v6139
        %v6142 = vshrl.u32 %v3434, 16
        %v6144 = vrot.slane %v6142, 3
        %v6145 = vshll.u32 %v3434, 16
        %v6147 = vrot.slane %v6145, 4
        %v6148 = vor.u32 %v6144, %v6147
        %v6149 = vsel %vm4171, %v6140, %v6148
        %v6151 = vshrl.u32 %v3561, 16
        %v6153 = vrot.slane %v6151, 3
        %v6154 = vshll.u32 %v3561, 16
        %v6156 = vrot.slane %v6154, 4
        %v6157 = vor.u32 %v6153, %v6156
        %v6159 = vshrl.u32 %v3562, 16
        %v6161 = vrot.slane %v6159, 3
        %v6162 = vshll.u32 %v3562, 16
        %v6164 = vrot.slane %v6162, 4
        %v6165 = vor.u32 %v6161, %v6164
        %v6166 = vsel %vm4171, %v6157, %v6165
        %v6168 = vshrl.u32 %v3706, 16
        %v6170 = vrot.slane %v6168, 3
        %v6171 = vshll.u32 %v3706, 16
        %v6173 = vrot.slane %v6171, 4
        %v6174 = vor.u32 %v6170, %v6173
        %v6175 = vsel %vm4171, %v6174, %v6174
        %v6177 = vshrl.u32 %v3800, 16
        %v6179 = vrot.slane %v6177, 3
        %v6180 = vshll.u32 %v3800, 16
        %v6182 = vrot.slane %v6180, 4
        %v6183 = vor.u32 %v6179, %v6182
        %v6185 = vshrl.u32 %v3802, 16
        %v6187 = vrot.slane %v6185, 3
        %v6188 = vshll.u32 %v3802, 16
        %v6190 = vrot.slane %v6188, 4
        %v6191 = vor.u32 %v6187, %v6190
        %v6192 = vsel %vm4171, %v6183, %v6191
        %v6194 = vshrl.u32 %v3929, 16
        %v6196 = vrot.slane %v6194, 3
        %v6197 = vshll.u32 %v3929, 16
        %v6199 = vrot.slane %v6197, 4
        %v6200 = vor.u32 %v6196, %v6199
        %v6202 = vshrl.u32 %v3930, 16
        %v6204 = vrot.slane %v6202, 3
        %v6205 = vshll.u32 %v3930, 16
        %v6207 = vrot.slane %v6205, 4
        %v6208 = vor.u32 %v6204, %v6207
        %v6209 = vsel %vm4171, %v6200, %v6208
        %v6211 = vshrl.u32 %v4074, 16
        %v6213 = vrot.slane %v6211, 3
        %v6214 = vshll.u32 %v4074, 16
        %v6216 = vrot.slane %v6214, 4
        %v6217 = vor.u32 %v6213, %v6216
        %v6218 = vsel %vm4171, %v6217, %v6217
        %v6220 = vshrl.u32 %v4168, 16
        %v6222 = vrot.slane %v6220, 3
        %v6223 = vshll.u32 %v4168, 16
        %v6225 = vrot.slane %v6223, 4
        %v6226 = vor.u32 %v6222, %v6225
        %v6228 = vshrl.u32 %v4170, 16
        %v6230 = vrot.slane %v6228, 3
        %v6231 = vshll.u32 %v4170, 16
        %v6233 = vrot.slane %v6231, 4
        %v6234 = vor.u32 %v6230, %v6233
        %v6235 = vsel %vm4171, %v6226, %v6234
        %v6380 = vld [vmem:[#allocation3] sm:$0xf]
        %v6381 = vld [vmem:[#allocation3 + $0x4] sm:$0xf]
        %v6382 = vld [vmem:[#allocation3 + $0x8] sm:$0xf]
        %v6383 = vld [vmem:[#allocation3 + $0xc] sm:$0xf]
        %v6384 = vld [vmem:[#allocation3 + $0x10] sm:$0xf]
        %v6385 = vld [vmem:[#allocation3 + $0x14] sm:$0xf]
        %v6386 = vld [vmem:[#allocation3 + $0x18] sm:$0xf]
        %v6387 = vld [vmem:[#allocation3 + $0x1c] sm:$0xf]
        %v6388 = vld [vmem:[#allocation3 + $0x20] sm:$0xf]
        %v6389 = vld [vmem:[#allocation3 + $0x24] sm:$0xf]
        %v6390 = vld [vmem:[#allocation3 + $0x28] sm:$0xf]
        %v6391 = vld [vmem:[#allocation3 + $0x2c] sm:$0xf]
        %v6392 = vld [vmem:[#allocation3 + $0x30] sm:$0xf]
        %v6393 = vld [vmem:[#allocation3 + $0x34] sm:$0xf]
        %v6394 = vld [vmem:[#allocation3 + $0x38] sm:$0xf]
        %v6395 = vld [vmem:[#allocation3 + $0x3c] sm:$0xf]
        %v6396 = vld [vmem:[#allocation3 + $0x40] sm:$0xf]
        %v6397 = vld [vmem:[#allocation3 + $0x44] sm:$0xf]
        %v6398 = vld [vmem:[#allocation3 + $0x48] sm:$0xf]
        %v6399 = vld [vmem:[#allocation3 + $0x4c] sm:$0xf]
        %v6400 = vld [vmem:[#allocation3 + $0x50] sm:$0xf]
        %v6401 = vld [vmem:[#allocation3 + $0x54] sm:$0xf]
        %v6402 = vld [vmem:[#allocation3 + $0x58] sm:$0xf]
        %v6403 = vld [vmem:[#allocation3 + $0x5c] sm:$0xf]
        %v6404 = vld [vmem:[#allocation3 + $0x60] sm:$0xf]
        %v6405 = vld [vmem:[#allocation3 + $0x64] sm:$0xf]
        %v6406 = vld [vmem:[#allocation3 + $0x68] sm:$0xf]
        %v6407 = vld [vmem:[#allocation3 + $0x6c] sm:$0xf]
        %v6408 = vld [vmem:[#allocation3 + $0x70] sm:$0xf]
        %v6409 = vld [vmem:[#allocation3 + $0x74] sm:$0xf]
        %v6410 = vld [vmem:[#allocation3 + $0x78] sm:$0xf]
        %v6411 = vld [vmem:[#allocation3 + $0x7c] sm:$0xf]
        %v6412 = vld [vmem:[#allocation3 + $0x80] sm:$0xf]
        %v6413 = vld [vmem:[#allocation3 + $0x84] sm:$0xf]
        %v6414 = vld [vmem:[#allocation3 + $0x88] sm:$0xf]
        %v6415 = vld [vmem:[#allocation3 + $0x8c] sm:$0xf]
        %v6416 = vld [vmem:[#allocation3 + $0x90] sm:$0xf]
        %v6417 = vld [vmem:[#allocation3 + $0x94] sm:$0xf]
        %v6418 = vld [vmem:[#allocation3 + $0x98] sm:$0xf]
        %v6419 = vld [vmem:[#allocation3 + $0x9c] sm:$0xf]
        %v6420 = vld [vmem:[#allocation3 + $0xa0] sm:$0xf]
        %v6421 = vld [vmem:[#allocation3 + $0xa4] sm:$0xf]
        %v6422 = vld [vmem:[#allocation3 + $0xa8] sm:$0xf]
        %v6423 = vld [vmem:[#allocation3 + $0xac] sm:$0xf]
        %v6424 = vld [vmem:[#allocation3 + $0xb0] sm:$0xf]
        %v6425 = vld [vmem:[#allocation3 + $0xb4] sm:$0xf]
        %v6426 = vld [vmem:[#allocation3 + $0xb8] sm:$0xf]
        %v6427 = vld [vmem:[#allocation3 + $0xbc] sm:$0xf]
        %v6428 = vld [vmem:[#allocation3 + $0xc0] sm:$0xf]
        %v6429 = vld [vmem:[#allocation3 + $0xc4] sm:$0xf]
        %v6430 = vld [vmem:[#allocation3 + $0xc8] sm:$0xf]
        %v6431 = vld [vmem:[#allocation3 + $0xcc] sm:$0xf]
        %v6432 = vld [vmem:[#allocation3 + $0xd0] sm:$0xf]
        %v6433 = vld [vmem:[#allocation3 + $0xd4] sm:$0xf]
        %v6434 = vld [vmem:[#allocation3 + $0xd8] sm:$0xf]
        %v6435 = vld [vmem:[#allocation3 + $0xdc] sm:$0xf]
        %v6436 = vld [vmem:[#allocation3 + $0xe0] sm:$0xf]
        %v6437 = vld [vmem:[#allocation3 + $0xe4] sm:$0xf]
        %v6438 = vld [vmem:[#allocation3 + $0xe8] sm:$0xf]
        %v6439 = vld [vmem:[#allocation3 + $0xec] sm:$0xf]
        %v6440 = vld [vmem:[#allocation3 + $0xf0] sm:$0xf]
        %v6441 = vld [vmem:[#allocation3 + $0xf4] sm:$0xf]
        %v6442 = vld [vmem:[#allocation3 + $0xf8] sm:$0xf]
        %v6443 = vld [vmem:[#allocation3 + $0xfc] sm:$0xf]
        %v6444 = vld [vmem:[#allocation3 + $0x100] sm:$0xf]
        %v6445 = vld [vmem:[#allocation3 + $0x104] sm:$0xf]
        %v6446 = vld [vmem:[#allocation3 + $0x108] sm:$0xf]
        %v6447 = vld [vmem:[#allocation3 + $0x10c] sm:$0xf]
        %v6448 = vld [vmem:[#allocation3 + $0x110] sm:$0xf]
        %v6449 = vld [vmem:[#allocation3 + $0x114] sm:$0xf]
        %v6450 = vld [vmem:[#allocation3 + $0x118] sm:$0xf]
        %v6451 = vld [vmem:[#allocation3 + $0x11c] sm:$0xf]
        %v6452 = vld [vmem:[#allocation3 + $0x120] sm:$0xf]
        %v6453 = vld [vmem:[#allocation3 + $0x124] sm:$0xf]
        %v6454 = vld [vmem:[#allocation3 + $0x128] sm:$0xf]
        %v6455 = vld [vmem:[#allocation3 + $0x12c] sm:$0xf]
        %v6456 = vld [vmem:[#allocation3 + $0x130] sm:$0xf]
        %v6457 = vld [vmem:[#allocation3 + $0x134] sm:$0xf]
        %v6458 = vld [vmem:[#allocation3 + $0x138] sm:$0xf]
        %v6459 = vld [vmem:[#allocation3 + $0x13c] sm:$0xf]
        %v6460 = vld [vmem:[#allocation3 + $0x140] sm:$0xf]
        %v6461 = vld [vmem:[#allocation3 + $0x144] sm:$0xf]
        %v6462 = vld [vmem:[#allocation3 + $0x148] sm:$0xf]
        %v6463 = vld [vmem:[#allocation3 + $0x14c] sm:$0xf]
        %v6464 = vld [vmem:[#allocation3 + $0x150] sm:$0xf]
        %v6465 = vld [vmem:[#allocation3 + $0x154] sm:$0xf]
        %v6466 = vld [vmem:[#allocation3 + $0x158] sm:$0xf]
        %v6467 = vld [vmem:[#allocation3 + $0x15c] sm:$0xf]
        %v6468 = vld [vmem:[#allocation3 + $0x160] sm:$0xf]
        %v6469 = vld [vmem:[#allocation3 + $0x164] sm:$0xf]
        %v6470 = vld [vmem:[#allocation3 + $0x168] sm:$0xf]
        %v6471 = vld [vmem:[#allocation3 + $0x16c] sm:$0xf]
        %v6472 = vld [vmem:[#allocation3 + $0x170] sm:$0xf]
        %v6473 = vld [vmem:[#allocation3 + $0x174] sm:$0xf]
        %v6474 = vld [vmem:[#allocation3 + $0x178] sm:$0xf]
        %v6475 = vld [vmem:[#allocation3 + $0x17c] sm:$0xf]
        %v6476 = vld [vmem:[#allocation3 + $0x180] sm:$0xf]
        %v6477 = vld [vmem:[#allocation3 + $0x184] sm:$0xf]
        %v6478 = vld [vmem:[#allocation3 + $0x188] sm:$0xf]
        %v6479 = vld [vmem:[#allocation3 + $0x18c] sm:$0xf]
        %v6480 = vld [vmem:[#allocation3 + $0x190] sm:$0xf]
        %v6481 = vld [vmem:[#allocation3 + $0x194] sm:$0xf]
        %v6482 = vld [vmem:[#allocation3 + $0x198] sm:$0xf]
        %v6483 = vld [vmem:[#allocation3 + $0x19c] sm:$0xf]
        %v6484 = vld [vmem:[#allocation3 + $0x1a0] sm:$0xf]
        %v6485 = vld [vmem:[#allocation3 + $0x1a4] sm:$0xf]
        %v6486 = vld [vmem:[#allocation3 + $0x1a8] sm:$0xf]
        %v6487 = vld [vmem:[#allocation3 + $0x1ac] sm:$0xf]
        %v6488 = vld [vmem:[#allocation3 + $0x1b0] sm:$0xf]
        %v6489 = vld [vmem:[#allocation3 + $0x1b4] sm:$0xf]
        %v6490 = vld [vmem:[#allocation3 + $0x1b8] sm:$0xf]
        %v6491 = vld [vmem:[#allocation3 + $0x1bc] sm:$0xf]
        %v6492 = vld [vmem:[#allocation3 + $0x1c0] sm:$0xf]
        %v6493 = vld [vmem:[#allocation3 + $0x1c4] sm:$0xf]
        %v6494 = vld [vmem:[#allocation3 + $0x1c8] sm:$0xf]
        %v6495 = vld [vmem:[#allocation3 + $0x1cc] sm:$0xf]
        %v6496 = vld [vmem:[#allocation3 + $0x1d0] sm:$0xf]
        %v6497 = vld [vmem:[#allocation3 + $0x1d4] sm:$0xf]
        %v6498 = vld [vmem:[#allocation3 + $0x1d8] sm:$0xf]
        %v6499 = vld [vmem:[#allocation3 + $0x1dc] sm:$0xf]
        %v6500 = vld [vmem:[#allocation3 + $0x1e0] sm:$0xf]
        %v6501 = vld [vmem:[#allocation3 + $0x1e4] sm:$0xf]
        %v6502 = vld [vmem:[#allocation3 + $0x1e8] sm:$0xf]
        %v6503 = vld [vmem:[#allocation3 + $0x1ec] sm:$0xf]
        %v6504 = vld [vmem:[#allocation3 + $0x1f0] sm:$0xf]
        %v6505 = vld [vmem:[#allocation3 + $0x1f4] sm:$0xf]
        %v6506 = vld [vmem:[#allocation3 + $0x1f8] sm:$0xf]
        %v6507 = vld [vmem:[#allocation3 + $0x1fc] sm:$0xf]
        %v6508 = vld [vmem:[#allocation3 + $0x200] sm:$0xf]
        %v6509 = vld [vmem:[#allocation3 + $0x204] sm:$0xf]
        %v6510 = vld [vmem:[#allocation3 + $0x208] sm:$0xf]
        %v6511 = vld [vmem:[#allocation3 + $0x20c] sm:$0xf]
        %v6512 = vld [vmem:[#allocation3 + $0x210] sm:$0xf]
        %v6513 = vld [vmem:[#allocation3 + $0x214] sm:$0xf]
        %v6514 = vld [vmem:[#allocation3 + $0x218] sm:$0xf]
        %v6515 = vld [vmem:[#allocation3 + $0x21c] sm:$0xf]
        %v6516 = vld [vmem:[#allocation3 + $0x220] sm:$0xf]
        %v6517 = vld [vmem:[#allocation3 + $0x224] sm:$0xf]
        %v6518 = vld [vmem:[#allocation3 + $0x228] sm:$0xf]
        %v6519 = vld [vmem:[#allocation3 + $0x22c] sm:$0xf]
        %v6520 = vld [vmem:[#allocation3 + $0x230] sm:$0xf]
        %v6521 = vld [vmem:[#allocation3 + $0x234] sm:$0xf]
        %v6522 = vld [vmem:[#allocation3 + $0x238] sm:$0xf]
        %v6523 = vld [vmem:[#allocation3 + $0x23c] sm:$0xf]
        %v6668 = vunpack.c.l.b16 %v6380
        %v6669 = vunpack.c.l.b16 %v6381
        %v6670 = vunpack.c.l.b16 %v6382
        %v6671 = vunpack.c.l.b16 %v6383
        %v6672 = vunpack.c.l.b16 %v6384
        %v6673 = vunpack.c.l.b16 %v6385
        %v6674 = vunpack.c.l.b16 %v6386
        %v6675 = vunpack.c.l.b16 %v6387
        %v6676 = vunpack.c.l.b16 %v6388
        %v6677 = vunpack.c.l.b16 %v6389
        %v6678 = vunpack.c.l.b16 %v6390
        %v6679 = vunpack.c.l.b16 %v6391
        %v6680 = vunpack.c.l.b16 %v6392
        %v6681 = vunpack.c.l.b16 %v6393
        %v6682 = vunpack.c.l.b16 %v6394
        %v6683 = vunpack.c.l.b16 %v6395
        %v6684 = vunpack.c.l.b16 %v6396
        %v6685 = vunpack.c.l.b16 %v6397
        %v6686 = vunpack.c.l.b16 %v6398
        %v6687 = vunpack.c.l.b16 %v6399
        %v6688 = vunpack.c.l.b16 %v6400
        %v6689 = vunpack.c.l.b16 %v6401
        %v6690 = vunpack.c.l.b16 %v6402
        %v6691 = vunpack.c.l.b16 %v6403
        %v6692 = vunpack.c.l.b16 %v6404
        %v6693 = vunpack.c.l.b16 %v6405
        %v6694 = vunpack.c.l.b16 %v6406
        %v6695 = vunpack.c.l.b16 %v6407
        %v6696 = vunpack.c.l.b16 %v6408
        %v6697 = vunpack.c.l.b16 %v6409
        %v6698 = vunpack.c.l.b16 %v6410
        %v6699 = vunpack.c.l.b16 %v6411
        %v6700 = vunpack.c.l.b16 %v6412
        %v6701 = vunpack.c.l.b16 %v6413
        %v6702 = vunpack.c.l.b16 %v6414
        %v6703 = vunpack.c.l.b16 %v6415
        %v6704 = vunpack.c.l.b16 %v6416
        %v6705 = vunpack.c.l.b16 %v6417
        %v6706 = vunpack.c.l.b16 %v6418
        %v6707 = vunpack.c.l.b16 %v6419
        %v6708 = vunpack.c.l.b16 %v6420
        %v6709 = vunpack.c.l.b16 %v6421
        %v6710 = vunpack.c.l.b16 %v6422
        %v6711 = vunpack.c.l.b16 %v6423
        %v6712 = vunpack.c.l.b16 %v6424
        %v6713 = vunpack.c.l.b16 %v6425
        %v6714 = vunpack.c.l.b16 %v6426
        %v6715 = vunpack.c.l.b16 %v6427
        %v6716 = vunpack.c.l.b16 %v6428
        %v6717 = vunpack.c.l.b16 %v6429
        %v6718 = vunpack.c.l.b16 %v6430
        %v6719 = vunpack.c.l.b16 %v6431
        %v6720 = vunpack.c.l.b16 %v6432
        %v6721 = vunpack.c.l.b16 %v6433
        %v6722 = vunpack.c.l.b16 %v6434
        %v6723 = vunpack.c.l.b16 %v6435
        %v6724 = vunpack.c.l.b16 %v6436
        %v6725 = vunpack.c.l.b16 %v6437
        %v6726 = vunpack.c.l.b16 %v6438
        %v6727 = vunpack.c.l.b16 %v6439
        %v6728 = vunpack.c.l.b16 %v6440
        %v6729 = vunpack.c.l.b16 %v6441
        %v6730 = vunpack.c.l.b16 %v6442
        %v6731 = vunpack.c.l.b16 %v6443
        %v6732 = vunpack.c.l.b16 %v6444
        %v6733 = vunpack.c.l.b16 %v6445
        %v6734 = vunpack.c.l.b16 %v6446
        %v6735 = vunpack.c.l.b16 %v6447
        %v6736 = vunpack.c.l.b16 %v6448
        %v6737 = vunpack.c.l.b16 %v6449
        %v6738 = vunpack.c.l.b16 %v6450
        %v6739 = vunpack.c.l.b16 %v6451
        %v6740 = vunpack.c.l.b16 %v6452
        %v6741 = vunpack.c.l.b16 %v6453
        %v6742 = vunpack.c.l.b16 %v6454
        %v6743 = vunpack.c.l.b16 %v6455
        %v6744 = vunpack.c.l.b16 %v6456
        %v6745 = vunpack.c.l.b16 %v6457
        %v6746 = vunpack.c.l.b16 %v6458
        %v6747 = vunpack.c.l.b16 %v6459
        %v6748 = vunpack.c.l.b16 %v6460
        %v6749 = vunpack.c.l.b16 %v6461
        %v6750 = vunpack.c.l.b16 %v6462
        %v6751 = vunpack.c.l.b16 %v6463
        %v6752 = vunpack.c.l.b16 %v6464
        %v6753 = vunpack.c.l.b16 %v6465
        %v6754 = vunpack.c.l.b16 %v6466
        %v6755 = vunpack.c.l.b16 %v6467
        %v6756 = vunpack.c.l.b16 %v6468
        %v6757 = vunpack.c.l.b16 %v6469
        %v6758 = vunpack.c.l.b16 %v6470
        %v6759 = vunpack.c.l.b16 %v6471
        %v6760 = vunpack.c.l.b16 %v6472
        %v6761 = vunpack.c.l.b16 %v6473
        %v6762 = vunpack.c.l.b16 %v6474
        %v6763 = vunpack.c.l.b16 %v6475
        %v6764 = vunpack.c.l.b16 %v6476
        %v6765 = vunpack.c.l.b16 %v6477
        %v6766 = vunpack.c.l.b16 %v6478
        %v6767 = vunpack.c.l.b16 %v6479
        %v6768 = vunpack.c.l.b16 %v6480
        %v6769 = vunpack.c.l.b16 %v6481
        %v6770 = vunpack.c.l.b16 %v6482
        %v6771 = vunpack.c.l.b16 %v6483
        %v6772 = vunpack.c.l.b16 %v6484
        %v6773 = vunpack.c.l.b16 %v6485
        %v6774 = vunpack.c.l.b16 %v6486
        %v6775 = vunpack.c.l.b16 %v6487
        %v6776 = vunpack.c.l.b16 %v6488
        %v6777 = vunpack.c.l.b16 %v6489
        %v6778 = vunpack.c.l.b16 %v6490
        %v6779 = vunpack.c.l.b16 %v6491
        %v6780 = vunpack.c.l.b16 %v6492
        %v6781 = vunpack.c.l.b16 %v6493
        %v6782 = vunpack.c.l.b16 %v6494
        %v6783 = vunpack.c.l.b16 %v6495
        %v6784 = vunpack.c.l.b16 %v6496
        %v6785 = vunpack.c.l.b16 %v6497
        %v6786 = vunpack.c.l.b16 %v6498
        %v6787 = vunpack.c.l.b16 %v6499
        %v6788 = vunpack.c.l.b16 %v6500
        %v6789 = vunpack.c.l.b16 %v6501
        %v6790 = vunpack.c.l.b16 %v6502
        %v6791 = vunpack.c.l.b16 %v6503
        %v6792 = vunpack.c.l.b16 %v6504
        %v6793 = vunpack.c.l.b16 %v6505
        %v6794 = vunpack.c.l.b16 %v6506
        %v6795 = vunpack.c.l.b16 %v6507
        %v6796 = vunpack.c.l.b16 %v6508
        %v6797 = vunpack.c.l.b16 %v6509
        %v6798 = vunpack.c.l.b16 %v6510
        %v6799 = vunpack.c.l.b16 %v6511
        %v6800 = vunpack.c.l.b16 %v6512
        %v6801 = vunpack.c.l.b16 %v6513
        %v6802 = vunpack.c.l.b16 %v6514
        %v6803 = vunpack.c.l.b16 %v6515
        %v6804 = vunpack.c.l.b16 %v6516
        %v6805 = vunpack.c.l.b16 %v6517
        %v6806 = vunpack.c.l.b16 %v6518
        %v6807 = vunpack.c.l.b16 %v6519
        %v6808 = vunpack.c.l.b16 %v6520
        %v6809 = vunpack.c.l.b16 %v6521
        %v6810 = vunpack.c.l.b16 %v6522
        %v6811 = vunpack.c.l.b16 %v6523
        %v6812 = vpack.c.b16 %v6669, %v6668
        %v6813 = vpack.c.b16 %v6671, %v6670
        %v6814 = vpack.c.b16 %v6673, %v6672
        %v6815 = vpack.c.b16 %v6675, %v6674
        %v6816 = vpack.c.b16 %v6677, %v6676
        %v6817 = vpack.c.b16 %v6679, %v6678
        %v6818 = vpack.c.b16 %v6681, %v6680
        %v6819 = vpack.c.b16 %v6683, %v6682
        %v6820 = vpack.c.b16 %v6685, %v6684
        %v6821 = vpack.c.b16 %v6687, %v6686
        %v6822 = vpack.c.b16 %v6689, %v6688
        %v6823 = vpack.c.b16 %v6691, %v6690
        %v6824 = vpack.c.b16 %v6693, %v6692
        %v6825 = vpack.c.b16 %v6695, %v6694
        %v6826 = vpack.c.b16 %v6697, %v6696
        %v6827 = vpack.c.b16 %v6699, %v6698
        %v6828 = vpack.c.b16 %v6701, %v6700
        %v6829 = vpack.c.b16 %v6703, %v6702
        %v6830 = vpack.c.b16 %v6705, %v6704
        %v6831 = vpack.c.b16 %v6707, %v6706
        %v6832 = vpack.c.b16 %v6709, %v6708
        %v6833 = vpack.c.b16 %v6711, %v6710
        %v6834 = vpack.c.b16 %v6713, %v6712
        %v6835 = vpack.c.b16 %v6715, %v6714
        %v6836 = vpack.c.b16 %v6717, %v6716
        %v6837 = vpack.c.b16 %v6719, %v6718
        %v6838 = vpack.c.b16 %v6721, %v6720
        %v6839 = vpack.c.b16 %v6723, %v6722
        %v6840 = vpack.c.b16 %v6725, %v6724
        %v6841 = vpack.c.b16 %v6727, %v6726
        %v6842 = vpack.c.b16 %v6729, %v6728
        %v6843 = vpack.c.b16 %v6731, %v6730
        %v6844 = vpack.c.b16 %v6733, %v6732
        %v6845 = vpack.c.b16 %v6735, %v6734
        %v6846 = vpack.c.b16 %v6737, %v6736
        %v6847 = vpack.c.b16 %v6739, %v6738
        %v6848 = vpack.c.b16 %v6741, %v6740
        %v6849 = vpack.c.b16 %v6743, %v6742
        %v6850 = vpack.c.b16 %v6745, %v6744
        %v6851 = vpack.c.b16 %v6747, %v6746
        %v6852 = vpack.c.b16 %v6749, %v6748
        %v6853 = vpack.c.b16 %v6751, %v6750
        %v6854 = vpack.c.b16 %v6753, %v6752
        %v6855 = vpack.c.b16 %v6755, %v6754
        %v6856 = vpack.c.b16 %v6757, %v6756
        %v6857 = vpack.c.b16 %v6759, %v6758
        %v6858 = vpack.c.b16 %v6761, %v6760
        %v6859 = vpack.c.b16 %v6763, %v6762
        %v6860 = vpack.c.b16 %v6765, %v6764
        %v6861 = vpack.c.b16 %v6767, %v6766
        %v6862 = vpack.c.b16 %v6769, %v6768
        %v6863 = vpack.c.b16 %v6771, %v6770
        %v6864 = vpack.c.b16 %v6773, %v6772
        %v6865 = vpack.c.b16 %v6775, %v6774
        %v6866 = vpack.c.b16 %v6777, %v6776
        %v6867 = vpack.c.b16 %v6779, %v6778
        %v6868 = vpack.c.b16 %v6781, %v6780
        %v6869 = vpack.c.b16 %v6783, %v6782
        %v6870 = vpack.c.b16 %v6785, %v6784
        %v6871 = vpack.c.b16 %v6787, %v6786
        %v6872 = vpack.c.b16 %v6789, %v6788
        %v6873 = vpack.c.b16 %v6791, %v6790
        %v6874 = vpack.c.b16 %v6793, %v6792
        %v6875 = vpack.c.b16 %v6795, %v6794
        %v6876 = vpack.c.b16 %v6797, %v6796
        %v6877 = vpack.c.b16 %v6799, %v6798
        %v6878 = vpack.c.b16 %v6801, %v6800
        %v6879 = vpack.c.b16 %v6803, %v6802
        %v6880 = vpack.c.b16 %v6805, %v6804
        %v6881 = vpack.c.b16 %v6807, %v6806
        %v6882 = vpack.c.b16 %v6809, %v6808
        %v6883 = vpack.c.b16 %v6811, %v6810
        %6956 = vmatprep.subr.bf16.mxu0 0
        %6957 = vmatpush1.bf16.msra.mxu0 %v6819
        %6958 = vmatprep.subr.bf16.mxu0 0
        %6959 = vmatpush1.bf16.msra.mxu0 %v6818
        %6960 = vmatprep.subr.bf16.mxu0 0
        %6961 = vmatpush1.bf16.msra.mxu0 %v6817
        %6962 = vmatprep.subr.bf16.mxu0 0
        %6963 = vmatpush1.bf16.msra.mxu0 %v6816
        %6964 = vmatprep.subr.bf16.mxu0 0
        %6965 = vmatpush1.bf16.msra.mxu0 %v6815
        %6966 = vmatprep.subr.bf16.mxu0 0
        %6967 = vmatpush1.bf16.msra.mxu0 %v6814
        %6968 = vmatprep.subr.bf16.mxu0 0
        %6969 = vmatpush1.bf16.msra.mxu0 %v6813
        %6970 = vmatprep.subr.bf16.mxu0 0
        %6971 = vmatpush1.bf16.msra.mxu0 %v6812
        %6972 = vmatprep.subr.bf16.mxu0 0
        %6973 = vmatpush2.bf16.msra.mxu0 %v6827
        %6974 = vmatprep.subr.bf16.mxu0 0
        %6975 = vmatpush2.bf16.msra.mxu0 %v6826
        %6976 = vmatprep.subr.bf16.mxu0 0
        %6977 = vmatpush2.bf16.msra.mxu0 %v6825
        %6978 = vmatprep.subr.bf16.mxu0 0
        %6979 = vmatpush2.bf16.msra.mxu0 %v6824
        %6980 = vmatprep.subr.bf16.mxu0 0
        %6981 = vmatpush2.bf16.msra.mxu0 %v6823
        %6982 = vmatprep.subr.bf16.mxu0 0
        %6983 = vmatpush2.bf16.msra.mxu0 %v6822
        %6984 = vmatprep.subr.bf16.mxu0 0
        %6985 = vmatpush2.bf16.msra.mxu0 %v6821
        %6986 = vmatprep.subr.bf16.mxu0 0
        %6987 = vmatpush2.bf16.msra.mxu0 %v6820
        %6988 = vmatprep.mubr.bf16.mxu0 %v4197
        %6989 = vmatmul.mubr.bf16.gmra.mxu0 %v4188
        %v6990 = vpop.f32.mrf.mxu0
        %v6991 = vadd.f32 0.0, %v6990
        %v6992 = vpop.f32.mrf.mxu0
        %v6993 = vpop.f32.mrf.mxu0
        %v6994 = vadd.f32 0.0, %v6993
        %v6995 = vpop.f32.mrf.mxu0
        %6996 = vmatprep.mubr.bf16.mxu0 %v4326
        %6997 = vmatmul.mubr.bf16.gmra.mxu0 %v4317
        %v6998 = vpop.f32.mrf.mxu0
        %v6999 = vadd.f32 0.0, %v6998
        %v7000 = vpop.f32.mrf.mxu0
        %v7001 = vpop.f32.mrf.mxu0
        %v7002 = vadd.f32 0.0, %v7001
        %v7003 = vpop.f32.mrf.mxu0
        %7004 = vmatprep.mubr.bf16.mxu0 %v4455
        %7005 = vmatmul.mubr.bf16.gmra.mxu0 %v4446
        %v7006 = vpop.f32.mrf.mxu0
        %v7007 = vadd.f32 0.0, %v7006
        %v7008 = vpop.f32.mrf.mxu0
        %v7009 = vpop.f32.mrf.mxu0
        %v7010 = vadd.f32 0.0, %v7009
        %v7011 = vpop.f32.mrf.mxu0
        %7012 = vmatprep.mubr.bf16.mxu0 %v4584
        %7013 = vmatmul.mubr.bf16.gmra.mxu0 %v4575
        %v7014 = vpop.f32.mrf.mxu0
        %v7015 = vadd.f32 0.0, %v7014
        %v7016 = vpop.f32.mrf.mxu0
        %v7017 = vpop.f32.mrf.mxu0
        %v7018 = vadd.f32 0.0, %v7017
        %v7019 = vpop.f32.mrf.mxu0
        %7020 = vmatprep.mubr.bf16.mxu0 %v4713
        %7021 = vmatmul.mubr.bf16.gmra.mxu0 %v4704
        %v7022 = vpop.f32.mrf.mxu0
        %v7023 = vadd.f32 0.0, %v7022
        %v7024 = vpop.f32.mrf.mxu0
        %v7025 = vpop.f32.mrf.mxu0
        %v7026 = vadd.f32 0.0, %v7025
        %v7027 = vpop.f32.mrf.mxu0
        %7028 = vmatprep.mubr.bf16.mxu0 %v4842
        %7029 = vmatmul.mubr.bf16.gmra.mxu0 %v4833
        %v7030 = vpop.f32.mrf.mxu0
        %v7031 = vadd.f32 0.0, %v7030
        %v7032 = vpop.f32.mrf.mxu0
        %v7033 = vpop.f32.mrf.mxu0
        %v7034 = vadd.f32 0.0, %v7033
        %v7035 = vpop.f32.mrf.mxu0
        %7036 = vmatprep.mubr.bf16.mxu0 %v4971
        %7037 = vmatmul.mubr.bf16.gmra.mxu0 %v4962
        %v7038 = vpop.f32.mrf.mxu0
        %v7039 = vadd.f32 0.0, %v7038
        %v7040 = vpop.f32.mrf.mxu0
        %v7041 = vpop.f32.mrf.mxu0
        %v7042 = vadd.f32 0.0, %v7041
        %v7043 = vpop.f32.mrf.mxu0
        %7044 = vmatprep.mubr.bf16.mxu0 %v5100
        %7045 = vmatmul.mubr.bf16.gmra.mxu0 %v5091
        %v7046 = vpop.f32.mrf.mxu0
        %v7047 = vadd.f32 0.0, %v7046
        %v7048 = vpop.f32.mrf.mxu0
        %v7049 = vpop.f32.mrf.mxu0
        %v7050 = vadd.f32 0.0, %v7049
        %v7051 = vpop.f32.mrf.mxu0
        %7052 = vmatprep.mubr.bf16.mxu0 %v5229
        %7053 = vmatmul.mubr.bf16.gmra.mxu0 %v5220
        %v7054 = vpop.f32.mrf.mxu0
        %v7055 = vadd.f32 0.0, %v7054
        %v7056 = vpop.f32.mrf.mxu0
        %v7057 = vpop.f32.mrf.mxu0
        %v7058 = vadd.f32 0.0, %v7057
        %v7059 = vpop.f32.mrf.mxu0
        %7060 = vmatprep.mubr.bf16.mxu0 %v5358
        %7061 = vmatmul.mubr.bf16.gmra.mxu0 %v5349
        %v7062 = vpop.f32.mrf.mxu0
        %v7063 = vadd.f32 0.0, %v7062
        %v7064 = vpop.f32.mrf.mxu0
        %v7065 = vpop.f32.mrf.mxu0
        %v7066 = vadd.f32 0.0, %v7065
        %v7067 = vpop.f32.mrf.mxu0
        %7068 = vmatprep.mubr.bf16.mxu0 %v5487
        %7069 = vmatmul.mubr.bf16.gmra.mxu0 %v5478
        %v7070 = vpop.f32.mrf.mxu0
        %v7071 = vadd.f32 0.0, %v7070
        %v7072 = vpop.f32.mrf.mxu0
        %v7073 = vpop.f32.mrf.mxu0
        %v7074 = vadd.f32 0.0, %v7073
        %v7075 = vpop.f32.mrf.mxu0
        %7076 = vmatprep.mubr.bf16.mxu0 %v5616
        %7077 = vmatmul.mubr.bf16.gmra.mxu0 %v5607
        %v7078 = vpop.f32.mrf.mxu0
        %v7079 = vadd.f32 0.0, %v7078
        %v7080 = vpop.f32.mrf.mxu0
        %v7081 = vpop.f32.mrf.mxu0
        %v7082 = vadd.f32 0.0, %v7081
        %v7083 = vpop.f32.mrf.mxu0
        %7084 = vmatprep.mubr.bf16.mxu0 %v5745
        %7085 = vmatmul.mubr.bf16.gmra.mxu0 %v5736
        %v7086 = vpop.f32.mrf.mxu0
        %v7087 = vadd.f32 0.0, %v7086
        %v7088 = vpop.f32.mrf.mxu0
        %v7089 = vpop.f32.mrf.mxu0
        %v7090 = vadd.f32 0.0, %v7089
        %v7091 = vpop.f32.mrf.mxu0
        %7092 = vmatprep.mubr.bf16.mxu0 %v5874
        %7093 = vmatmul.mubr.bf16.gmra.mxu0 %v5865
        %v7094 = vpop.f32.mrf.mxu0
        %v7095 = vadd.f32 0.0, %v7094
        %v7096 = vpop.f32.mrf.mxu0
        %v7097 = vpop.f32.mrf.mxu0
        %v7098 = vadd.f32 0.0, %v7097
        %v7099 = vpop.f32.mrf.mxu0
        %7100 = vmatprep.mubr.bf16.mxu0 %v6003
        %7101 = vmatmul.mubr.bf16.gmra.mxu0 %v5994
        %v7102 = vpop.f32.mrf.mxu0
        %v7103 = vadd.f32 0.0, %v7102
        %v7104 = vpop.f32.mrf.mxu0
        %v7105 = vpop.f32.mrf.mxu0
        %v7106 = vadd.f32 0.0, %v7105
        %v7107 = vpop.f32.mrf.mxu0
        %7108 = vmatprep.mubr.bf16.mxu0 %v6132
        %7109 = vmatmul.mubr.bf16.gmra.mxu0 %v6123
        %v7110 = vpop.f32.mrf.mxu0
        %v7111 = vadd.f32 0.0, %v7110
        %v7112 = vpop.f32.mrf.mxu0
        %v7113 = vpop.f32.mrf.mxu0
        %v7114 = vadd.f32 0.0, %v7113
        %v7115 = vpop.f32.mrf.mxu0
        %7116 = vdwg.mxu0
        %7117 = vmatprep.subr.bf16.mxu0 0
        %7118 = vmatpush1.bf16.msra.mxu0 %v6835
        %7119 = vmatprep.subr.bf16.mxu0 0
        %7120 = vmatpush1.bf16.msra.mxu0 %v6834
        %7121 = vmatprep.subr.bf16.mxu0 0
        %7122 = vmatpush1.bf16.msra.mxu0 %v6833
        %7123 = vmatprep.subr.bf16.mxu0 0
        %7124 = vmatpush1.bf16.msra.mxu0 %v6832
        %7125 = vmatprep.subr.bf16.mxu0 0
        %7126 = vmatpush1.bf16.msra.mxu0 %v6831
        %7127 = vmatprep.subr.bf16.mxu0 0
        %7128 = vmatpush1.bf16.msra.mxu0 %v6830
        %7129 = vmatprep.subr.bf16.mxu0 0
        %7130 = vmatpush1.bf16.msra.mxu0 %v6829
        %7131 = vmatprep.subr.bf16.mxu0 0
        %7132 = vmatpush1.bf16.msra.mxu0 %v6828
        %7133 = vmatprep.subr.bf16.mxu0 0
        %7134 = vmatpush2.bf16.msra.mxu0 %v6843
        %7135 = vmatprep.subr.bf16.mxu0 0
        %7136 = vmatpush2.bf16.msra.mxu0 %v6842
        %7137 = vmatprep.subr.bf16.mxu0 0
        %7138 = vmatpush2.bf16.msra.mxu0 %v6841
        %7139 = vmatprep.subr.bf16.mxu0 0
        %7140 = vmatpush2.bf16.msra.mxu0 %v6840
        %7141 = vmatprep.subr.bf16.mxu0 0
        %7142 = vmatpush2.bf16.msra.mxu0 %v6839
        %7143 = vmatprep.subr.bf16.mxu0 0
        %7144 = vmatpush2.bf16.msra.mxu0 %v6838
        %7145 = vmatprep.subr.bf16.mxu0 0
        %7146 = vmatpush2.bf16.msra.mxu0 %v6837
        %7147 = vmatprep.subr.bf16.mxu0 0
        %7148 = vmatpush2.bf16.msra.mxu0 %v6836
        %7149 = vmatprep.mubr.bf16.mxu0 %v4231
        %7150 = vmatmul.mubr.bf16.gmra.mxu0 %v4214
        %v7151 = vpop.f32.mrf.mxu0
        %v7152 = vadd.f32 %v6991, %v7151
        %v7153 = vpop.f32.mrf.mxu0
        %v7154 = vpop.f32.mrf.mxu0
        %v7155 = vadd.f32 %v6994, %v7154
        %v7156 = vpop.f32.mrf.mxu0
        %7157 = vmatprep.mubr.bf16.mxu0 %v4360
        %7158 = vmatmul.mubr.bf16.gmra.mxu0 %v4343
        %v7159 = vpop.f32.mrf.mxu0
        %v7160 = vadd.f32 %v6999, %v7159
        %v7161 = vpop.f32.mrf.mxu0
        %v7162 = vpop.f32.mrf.mxu0
        %v7163 = vadd.f32 %v7002, %v7162
        %v7164 = vpop.f32.mrf.mxu0
        %7165 = vmatprep.mubr.bf16.mxu0 %v4489
        %7166 = vmatmul.mubr.bf16.gmra.mxu0 %v4472
        %v7167 = vpop.f32.mrf.mxu0
        %v7168 = vadd.f32 %v7007, %v7167
        %v7169 = vpop.f32.mrf.mxu0
        %v7170 = vpop.f32.mrf.mxu0
        %v7171 = vadd.f32 %v7010, %v7170
        %v7172 = vpop.f32.mrf.mxu0
        %7173 = vmatprep.mubr.bf16.mxu0 %v4618
        %7174 = vmatmul.mubr.bf16.gmra.mxu0 %v4601
        %v7175 = vpop.f32.mrf.mxu0
        %v7176 = vadd.f32 %v7015, %v7175
        %v7177 = vpop.f32.mrf.mxu0
        %v7178 = vpop.f32.mrf.mxu0
        %v7179 = vadd.f32 %v7018, %v7178
        %v7180 = vpop.f32.mrf.mxu0
        %7181 = vmatprep.mubr.bf16.mxu0 %v4747
        %7182 = vmatmul.mubr.bf16.gmra.mxu0 %v4730
        %v7183 = vpop.f32.mrf.mxu0
        %v7184 = vadd.f32 %v7023, %v7183
        %v7185 = vpop.f32.mrf.mxu0
        %v7186 = vpop.f32.mrf.mxu0
        %v7187 = vadd.f32 %v7026, %v7186
        %v7188 = vpop.f32.mrf.mxu0
        %7189 = vmatprep.mubr.bf16.mxu0 %v4876
        %7190 = vmatmul.mubr.bf16.gmra.mxu0 %v4859
        %v7191 = vpop.f32.mrf.mxu0
        %v7192 = vadd.f32 %v7031, %v7191
        %v7193 = vpop.f32.mrf.mxu0
        %v7194 = vpop.f32.mrf.mxu0
        %v7195 = vadd.f32 %v7034, %v7194
        %v7196 = vpop.f32.mrf.mxu0
        %7197 = vmatprep.mubr.bf16.mxu0 %v5005
        %7198 = vmatmul.mubr.bf16.gmra.mxu0 %v4988
        %v7199 = vpop.f32.mrf.mxu0
        %v7200 = vadd.f32 %v7039, %v7199
        %v7201 = vpop.f32.mrf.mxu0
        %v7202 = vpop.f32.mrf.mxu0
        %v7203 = vadd.f32 %v7042, %v7202
        %v7204 = vpop.f32.mrf.mxu0
        %7205 = vmatprep.mubr.bf16.mxu0 %v5134
        %7206 = vmatmul.mubr.bf16.gmra.mxu0 %v5117
        %v7207 = vpop.f32.mrf.mxu0
        %v7208 = vadd.f32 %v7047, %v7207
        %v7209 = vpop.f32.mrf.mxu0
        %v7210 = vpop.f32.mrf.mxu0
        %v7211 = vadd.f32 %v7050, %v7210
        %v7212 = vpop.f32.mrf.mxu0
        %7213 = vmatprep.mubr.bf16.mxu0 %v5263
        %7214 = vmatmul.mubr.bf16.gmra.mxu0 %v5246
        %v7215 = vpop.f32.mrf.mxu0
        %v7216 = vadd.f32 %v7055, %v7215
        %v7217 = vpop.f32.mrf.mxu0
        %v7218 = vpop.f32.mrf.mxu0
        %v7219 = vadd.f32 %v7058, %v7218
        %v7220 = vpop.f32.mrf.mxu0
        %7221 = vmatprep.mubr.bf16.mxu0 %v5392
        %7222 = vmatmul.mubr.bf16.gmra.mxu0 %v5375
        %v7223 = vpop.f32.mrf.mxu0
        %v7224 = vadd.f32 %v7063, %v7223
        %v7225 = vpop.f32.mrf.mxu0
        %v7226 = vpop.f32.mrf.mxu0
        %v7227 = vadd.f32 %v7066, %v7226
        %v7228 = vpop.f32.mrf.mxu0
        %7229 = vmatprep.mubr.bf16.mxu0 %v5521
        %7230 = vmatmul.mubr.bf16.gmra.mxu0 %v5504
        %v7231 = vpop.f32.mrf.mxu0
        %v7232 = vadd.f32 %v7071, %v7231
        %v7233 = vpop.f32.mrf.mxu0
        %v7234 = vpop.f32.mrf.mxu0
        %v7235 = vadd.f32 %v7074, %v7234
        %v7236 = vpop.f32.mrf.mxu0
        %7237 = vmatprep.mubr.bf16.mxu0 %v5650
        %7238 = vmatmul.mubr.bf16.gmra.mxu0 %v5633
        %v7239 = vpop.f32.mrf.mxu0
        %v7240 = vadd.f32 %v7079, %v7239
        %v7241 = vpop.f32.mrf.mxu0
        %v7242 = vpop.f32.mrf.mxu0
        %v7243 = vadd.f32 %v7082, %v7242
        %v7244 = vpop.f32.mrf.mxu0
        %7245 = vmatprep.mubr.bf16.mxu0 %v5779
        %7246 = vmatmul.mubr.bf16.gmra.mxu0 %v5762
        %v7247 = vpop.f32.mrf.mxu0
        %v7248 = vadd.f32 %v7087, %v7247
        %v7249 = vpop.f32.mrf.mxu0
        %v7250 = vpop.f32.mrf.mxu0
        %v7251 = vadd.f32 %v7090, %v7250
        %v7252 = vpop.f32.mrf.mxu0
        %7253 = vmatprep.mubr.bf16.mxu0 %v5908
        %7254 = vmatmul.mubr.bf16.gmra.mxu0 %v5891
        %v7255 = vpop.f32.mrf.mxu0
        %v7256 = vadd.f32 %v7095, %v7255
        %v7257 = vpop.f32.mrf.mxu0
        %v7258 = vpop.f32.mrf.mxu0
        %v7259 = vadd.f32 %v7098, %v7258
        %v7260 = vpop.f32.mrf.mxu0
        %7261 = vmatprep.mubr.bf16.mxu0 %v6037
        %7262 = vmatmul.mubr.bf16.gmra.mxu0 %v6020
        %v7263 = vpop.f32.mrf.mxu0
        %v7264 = vadd.f32 %v7103, %v7263
        %v7265 = vpop.f32.mrf.mxu0
        %v7266 = vpop.f32.mrf.mxu0
        %v7267 = vadd.f32 %v7106, %v7266
        %v7268 = vpop.f32.mrf.mxu0
        %7269 = vmatprep.mubr.bf16.mxu0 %v6166
        %7270 = vmatmul.mubr.bf16.gmra.mxu0 %v6149
        %v7271 = vpop.f32.mrf.mxu0
        %v7272 = vadd.f32 %v7111, %v7271
        %v7273 = vpop.f32.mrf.mxu0
        %v7274 = vpop.f32.mrf.mxu0
        %v7275 = vadd.f32 %v7114, %v7274
        %v7276 = vpop.f32.mrf.mxu0
        %7277 = vdwg.mxu0
        %7278 = vmatprep.subr.bf16.mxu0 0
        %7279 = vmatpush1.bf16.msra.mxu0 %v6851
        %7280 = vmatprep.subr.bf16.mxu0 0
        %7281 = vmatpush1.bf16.msra.mxu0 %v6850
        %7282 = vmatprep.subr.bf16.mxu0 0
        %7283 = vmatpush1.bf16.msra.mxu0 %v6849
        %7284 = vmatprep.subr.bf16.mxu0 0
        %7285 = vmatpush1.bf16.msra.mxu0 %v6848
        %7286 = vmatprep.subr.bf16.mxu0 0
        %7287 = vmatpush1.bf16.msra.mxu0 %v6847
        %7288 = vmatprep.subr.bf16.mxu0 0
        %7289 = vmatpush1.bf16.msra.mxu0 %v6846
        %7290 = vmatprep.subr.bf16.mxu0 0
        %7291 = vmatpush1.bf16.msra.mxu0 %v6845
        %7292 = vmatprep.subr.bf16.mxu0 0
        %7293 = vmatpush1.bf16.msra.mxu0 %v6844
        %7294 = vmatprep.subr.bf16.mxu0 0
        %7295 = vmatpush2.bf16.msra.mxu0 %v6859
        %7296 = vmatprep.subr.bf16.mxu0 0
        %7297 = vmatpush2.bf16.msra.mxu0 %v6858
        %7298 = vmatprep.subr.bf16.mxu0 0
        %7299 = vmatpush2.bf16.msra.mxu0 %v6857
        %7300 = vmatprep.subr.bf16.mxu0 0
        %7301 = vmatpush2.bf16.msra.mxu0 %v6856
        %7302 = vmatprep.subr.bf16.mxu0 0
        %7303 = vmatpush2.bf16.msra.mxu0 %v6855
        %7304 = vmatprep.subr.bf16.mxu0 0
        %7305 = vmatpush2.bf16.msra.mxu0 %v6854
        %7306 = vmatprep.subr.bf16.mxu0 0
        %7307 = vmatpush2.bf16.msra.mxu0 %v6853
        %7308 = vmatprep.subr.bf16.mxu0 0
        %7309 = vmatpush2.bf16.msra.mxu0 %v6852
        %7310 = vmatprep.mubr.bf16.mxu0 %v4257
        %7311 = vmatmul.mubr.bf16.gmra.mxu0 %v4240
        %v7312 = vpop.f32.mrf.mxu0
        %v7313 = vadd.f32 %v7152, %v7312
        %v7314 = vpop.f32.mrf.mxu0
        %v7315 = vpop.f32.mrf.mxu0
        %v7316 = vadd.f32 %v7155, %v7315
        %v7317 = vpop.f32.mrf.mxu0
        %7318 = vmatprep.mubr.bf16.mxu0 %v4386
        %7319 = vmatmul.mubr.bf16.gmra.mxu0 %v4369
        %v7320 = vpop.f32.mrf.mxu0
        %v7321 = vadd.f32 %v7160, %v7320
        %v7322 = vpop.f32.mrf.mxu0
        %v7323 = vpop.f32.mrf.mxu0
        %v7324 = vadd.f32 %v7163, %v7323
        %v7325 = vpop.f32.mrf.mxu0
        %7326 = vmatprep.mubr.bf16.mxu0 %v4515
        %7327 = vmatmul.mubr.bf16.gmra.mxu0 %v4498
        %v7328 = vpop.f32.mrf.mxu0
        %v7329 = vadd.f32 %v7168, %v7328
        %v7330 = vpop.f32.mrf.mxu0
        %v7331 = vpop.f32.mrf.mxu0
        %v7332 = vadd.f32 %v7171, %v7331
        %v7333 = vpop.f32.mrf.mxu0
        %7334 = vmatprep.mubr.bf16.mxu0 %v4644
        %7335 = vmatmul.mubr.bf16.gmra.mxu0 %v4627
        %v7336 = vpop.f32.mrf.mxu0
        %v7337 = vadd.f32 %v7176, %v7336
        %v7338 = vpop.f32.mrf.mxu0
        %v7339 = vpop.f32.mrf.mxu0
        %v7340 = vadd.f32 %v7179, %v7339
        %v7341 = vpop.f32.mrf.mxu0
        %7342 = vmatprep.mubr.bf16.mxu0 %v4773
        %7343 = vmatmul.mubr.bf16.gmra.mxu0 %v4756
        %v7344 = vpop.f32.mrf.mxu0
        %v7345 = vadd.f32 %v7184, %v7344
        %v7346 = vpop.f32.mrf.mxu0
        %v7347 = vpop.f32.mrf.mxu0
        %v7348 = vadd.f32 %v7187, %v7347
        %v7349 = vpop.f32.mrf.mxu0
        %7350 = vmatprep.mubr.bf16.mxu0 %v4902
        %7351 = vmatmul.mubr.bf16.gmra.mxu0 %v4885
        %v7352 = vpop.f32.mrf.mxu0
        %v7353 = vadd.f32 %v7192, %v7352
        %v7354 = vpop.f32.mrf.mxu0
        %v7355 = vpop.f32.mrf.mxu0
        %v7356 = vadd.f32 %v7195, %v7355
        %v7357 = vpop.f32.mrf.mxu0
        %7358 = vmatprep.mubr.bf16.mxu0 %v5031
        %7359 = vmatmul.mubr.bf16.gmra.mxu0 %v5014
        %v7360 = vpop.f32.mrf.mxu0
        %v7361 = vadd.f32 %v7200, %v7360
        %v7362 = vpop.f32.mrf.mxu0
        %v7363 = vpop.f32.mrf.mxu0
        %v7364 = vadd.f32 %v7203, %v7363
        %v7365 = vpop.f32.mrf.mxu0
        %7366 = vmatprep.mubr.bf16.mxu0 %v5160
        %7367 = vmatmul.mubr.bf16.gmra.mxu0 %v5143
        %v7368 = vpop.f32.mrf.mxu0
        %v7369 = vadd.f32 %v7208, %v7368
        %v7370 = vpop.f32.mrf.mxu0
        %v7371 = vpop.f32.mrf.mxu0
        %v7372 = vadd.f32 %v7211, %v7371
        %v7373 = vpop.f32.mrf.mxu0
        %7374 = vmatprep.mubr.bf16.mxu0 %v5289
        %7375 = vmatmul.mubr.bf16.gmra.mxu0 %v5272
        %v7376 = vpop.f32.mrf.mxu0
        %v7377 = vadd.f32 %v7216, %v7376
        %v7378 = vpop.f32.mrf.mxu0
        %v7379 = vpop.f32.mrf.mxu0
        %v7380 = vadd.f32 %v7219, %v7379
        %v7381 = vpop.f32.mrf.mxu0
        %7382 = vmatprep.mubr.bf16.mxu0 %v5418
        %7383 = vmatmul.mubr.bf16.gmra.mxu0 %v5401
        %v7384 = vpop.f32.mrf.mxu0
        %v7385 = vadd.f32 %v7224, %v7384
        %v7386 = vpop.f32.mrf.mxu0
        %v7387 = vpop.f32.mrf.mxu0
        %v7388 = vadd.f32 %v7227, %v7387
        %v7389 = vpop.f32.mrf.mxu0
        %7390 = vmatprep.mubr.bf16.mxu0 %v5547
        %7391 = vmatmul.mubr.bf16.gmra.mxu0 %v5530
        %v7392 = vpop.f32.mrf.mxu0
        %v7393 = vadd.f32 %v7232, %v7392
        %v7394 = vpop.f32.mrf.mxu0
        %v7395 = vpop.f32.mrf.mxu0
        %v7396 = vadd.f32 %v7235, %v7395
        %v7397 = vpop.f32.mrf.mxu0
        %7398 = vmatprep.mubr.bf16.mxu0 %v5676
        %7399 = vmatmul.mubr.bf16.gmra.mxu0 %v5659
        %v7400 = vpop.f32.mrf.mxu0
        %v7401 = vadd.f32 %v7240, %v7400
        %v7402 = vpop.f32.mrf.mxu0
        %v7403 = vpop.f32.mrf.mxu0
        %v7404 = vadd.f32 %v7243, %v7403
        %v7405 = vpop.f32.mrf.mxu0
        %7406 = vmatprep.mubr.bf16.mxu0 %v5805
        %7407 = vmatmul.mubr.bf16.gmra.mxu0 %v5788
        %v7408 = vpop.f32.mrf.mxu0
        %v7409 = vadd.f32 %v7248, %v7408
        %v7410 = vpop.f32.mrf.mxu0
        %v7411 = vpop.f32.mrf.mxu0
        %v7412 = vadd.f32 %v7251, %v7411
        %v7413 = vpop.f32.mrf.mxu0
        %7414 = vmatprep.mubr.bf16.mxu0 %v5934
        %7415 = vmatmul.mubr.bf16.gmra.mxu0 %v5917
        %v7416 = vpop.f32.mrf.mxu0
        %v7417 = vadd.f32 %v7256, %v7416
        %v7418 = vpop.f32.mrf.mxu0
        %v7419 = vpop.f32.mrf.mxu0
        %v7420 = vadd.f32 %v7259, %v7419
        %v7421 = vpop.f32.mrf.mxu0
        %7422 = vmatprep.mubr.bf16.mxu0 %v6063
        %7423 = vmatmul.mubr.bf16.gmra.mxu0 %v6046
        %v7424 = vpop.f32.mrf.mxu0
        %v7425 = vadd.f32 %v7264, %v7424
        %v7426 = vpop.f32.mrf.mxu0
        %v7427 = vpop.f32.mrf.mxu0
        %v7428 = vadd.f32 %v7267, %v7427
        %v7429 = vpop.f32.mrf.mxu0
        %7430 = vmatprep.mubr.bf16.mxu0 %v6192
        %7431 = vmatmul.mubr.bf16.gmra.mxu0 %v6175
        %v7432 = vpop.f32.mrf.mxu0
        %v7433 = vadd.f32 %v7272, %v7432
        %v7434 = vpop.f32.mrf.mxu0
        %v7435 = vpop.f32.mrf.mxu0
        %v7436 = vadd.f32 %v7275, %v7435
        %v7437 = vpop.f32.mrf.mxu0
        %7438 = vdwg.mxu0
        %7439 = vmatprep.subr.bf16.mxu0 0
        %7440 = vmatpush1.bf16.msra.mxu0 %v6867
        %7441 = vmatprep.subr.bf16.mxu0 0
        %7442 = vmatpush1.bf16.msra.mxu0 %v6866
        %7443 = vmatprep.subr.bf16.mxu0 0
        %7444 = vmatpush1.bf16.msra.mxu0 %v6865
        %7445 = vmatprep.subr.bf16.mxu0 0
        %7446 = vmatpush1.bf16.msra.mxu0 %v6864
        %7447 = vmatprep.subr.bf16.mxu0 0
        %7448 = vmatpush1.bf16.msra.mxu0 %v6863
        %7449 = vmatprep.subr.bf16.mxu0 0
        %7450 = vmatpush1.bf16.msra.mxu0 %v6862
        %7451 = vmatprep.subr.bf16.mxu0 0
        %7452 = vmatpush1.bf16.msra.mxu0 %v6861
        %7453 = vmatprep.subr.bf16.mxu0 0
        %7454 = vmatpush1.bf16.msra.mxu0 %v6860
        %7455 = vmatprep.subr.bf16.mxu0 0
        %7456 = vmatpush2.bf16.msra.mxu0 %v6875
        %7457 = vmatprep.subr.bf16.mxu0 0
        %7458 = vmatpush2.bf16.msra.mxu0 %v6874
        %7459 = vmatprep.subr.bf16.mxu0 0
        %7460 = vmatpush2.bf16.msra.mxu0 %v6873
        %7461 = vmatprep.subr.bf16.mxu0 0
        %7462 = vmatpush2.bf16.msra.mxu0 %v6872
        %7463 = vmatprep.subr.bf16.mxu0 0
        %7464 = vmatpush2.bf16.msra.mxu0 %v6871
        %7465 = vmatprep.subr.bf16.mxu0 0
        %7466 = vmatpush2.bf16.msra.mxu0 %v6870
        %7467 = vmatprep.subr.bf16.mxu0 0
        %7468 = vmatpush2.bf16.msra.mxu0 %v6869
        %7469 = vmatprep.subr.bf16.mxu0 0
        %7470 = vmatpush2.bf16.msra.mxu0 %v6868
        %7471 = vmatprep.mubr.bf16.mxu0 %v4283
        %7472 = vmatmul.mubr.bf16.gmra.mxu0 %v4274
        %v7473 = vpop.f32.mrf.mxu0
        %v7474 = vadd.f32 %v7313, %v7473
        %v7475 = vpop.f32.mrf.mxu0
        %v7476 = vpop.f32.mrf.mxu0
        %v7477 = vadd.f32 %v7316, %v7476
        %v7478 = vpop.f32.mrf.mxu0
        %7479 = vmatprep.mubr.bf16.mxu0 %v4412
        %7480 = vmatmul.mubr.bf16.gmra.mxu0 %v4403
        %v7481 = vpop.f32.mrf.mxu0
        %v7482 = vadd.f32 %v7321, %v7481
        %v7483 = vpop.f32.mrf.mxu0
        %v7484 = vpop.f32.mrf.mxu0
        %v7485 = vadd.f32 %v7324, %v7484
        %v7486 = vpop.f32.mrf.mxu0
        %7487 = vmatprep.mubr.bf16.mxu0 %v4541
        %7488 = vmatmul.mubr.bf16.gmra.mxu0 %v4532
        %v7489 = vpop.f32.mrf.mxu0
        %v7490 = vadd.f32 %v7329, %v7489
        %v7491 = vpop.f32.mrf.mxu0
        %v7492 = vpop.f32.mrf.mxu0
        %v7493 = vadd.f32 %v7332, %v7492
        %v7494 = vpop.f32.mrf.mxu0
        %7495 = vmatprep.mubr.bf16.mxu0 %v4670
        %7496 = vmatmul.mubr.bf16.gmra.mxu0 %v4661
        %v7497 = vpop.f32.mrf.mxu0
        %v7498 = vadd.f32 %v7337, %v7497
        %v7499 = vpop.f32.mrf.mxu0
        %v7500 = vpop.f32.mrf.mxu0
        %v7501 = vadd.f32 %v7340, %v7500
        %v7502 = vpop.f32.mrf.mxu0
        %7503 = vmatprep.mubr.bf16.mxu0 %v4799
        %7504 = vmatmul.mubr.bf16.gmra.mxu0 %v4790
        %v7505 = vpop.f32.mrf.mxu0
        %v7506 = vadd.f32 %v7345, %v7505
        %v7507 = vpop.f32.mrf.mxu0
        %v7508 = vpop.f32.mrf.mxu0
        %v7509 = vadd.f32 %v7348, %v7508
        %v7510 = vpop.f32.mrf.mxu0
        %7511 = vmatprep.mubr.bf16.mxu0 %v4928
        %7512 = vmatmul.mubr.bf16.gmra.mxu0 %v4919
        %v7513 = vpop.f32.mrf.mxu0
        %v7514 = vadd.f32 %v7353, %v7513
        %v7515 = vpop.f32.mrf.mxu0
        %v7516 = vpop.f32.mrf.mxu0
        %v7517 = vadd.f32 %v7356, %v7516
        %v7518 = vpop.f32.mrf.mxu0
        %7519 = vmatprep.mubr.bf16.mxu0 %v5057
        %7520 = vmatmul.mubr.bf16.gmra.mxu0 %v5048
        %v7521 = vpop.f32.mrf.mxu0
        %v7522 = vadd.f32 %v7361, %v7521
        %v7523 = vpop.f32.mrf.mxu0
        %v7524 = vpop.f32.mrf.mxu0
        %v7525 = vadd.f32 %v7364, %v7524
        %v7526 = vpop.f32.mrf.mxu0
        %7527 = vmatprep.mubr.bf16.mxu0 %v5186
        %7528 = vmatmul.mubr.bf16.gmra.mxu0 %v5177
        %v7529 = vpop.f32.mrf.mxu0
        %v7530 = vadd.f32 %v7369, %v7529
        %v7531 = vpop.f32.mrf.mxu0
        %v7532 = vpop.f32.mrf.mxu0
        %v7533 = vadd.f32 %v7372, %v7532
        %v7534 = vpop.f32.mrf.mxu0
        %7535 = vmatprep.mubr.bf16.mxu0 %v5315
        %7536 = vmatmul.mubr.bf16.gmra.mxu0 %v5306
        %v7537 = vpop.f32.mrf.mxu0
        %v7538 = vadd.f32 %v7377, %v7537
        %v7539 = vpop.f32.mrf.mxu0
        %v7540 = vpop.f32.mrf.mxu0
        %v7541 = vadd.f32 %v7380, %v7540
        %v7542 = vpop.f32.mrf.mxu0
        %7543 = vmatprep.mubr.bf16.mxu0 %v5444
        %7544 = vmatmul.mubr.bf16.gmra.mxu0 %v5435
        %v7545 = vpop.f32.mrf.mxu0
        %v7546 = vadd.f32 %v7385, %v7545
        %v7547 = vpop.f32.mrf.mxu0
        %v7548 = vpop.f32.mrf.mxu0
        %v7549 = vadd.f32 %v7388, %v7548
        %v7550 = vpop.f32.mrf.mxu0
        %7551 = vmatprep.mubr.bf16.mxu0 %v5573
        %7552 = vmatmul.mubr.bf16.gmra.mxu0 %v5564
        %v7553 = vpop.f32.mrf.mxu0
        %v7554 = vadd.f32 %v7393, %v7553
        %v7555 = vpop.f32.mrf.mxu0
        %v7556 = vpop.f32.mrf.mxu0
        %v7557 = vadd.f32 %v7396, %v7556
        %v7558 = vpop.f32.mrf.mxu0
        %7559 = vmatprep.mubr.bf16.mxu0 %v5702
        %7560 = vmatmul.mubr.bf16.gmra.mxu0 %v5693
        %v7561 = vpop.f32.mrf.mxu0
        %v7562 = vadd.f32 %v7401, %v7561
        %v7563 = vpop.f32.mrf.mxu0
        %v7564 = vpop.f32.mrf.mxu0
        %v7565 = vadd.f32 %v7404, %v7564
        %v7566 = vpop.f32.mrf.mxu0
        %7567 = vmatprep.mubr.bf16.mxu0 %v5831
        %7568 = vmatmul.mubr.bf16.gmra.mxu0 %v5822
        %v7569 = vpop.f32.mrf.mxu0
        %v7570 = vadd.f32 %v7409, %v7569
        %v7571 = vpop.f32.mrf.mxu0
        %v7572 = vpop.f32.mrf.mxu0
        %v7573 = vadd.f32 %v7412, %v7572
        %v7574 = vpop.f32.mrf.mxu0
        %7575 = vmatprep.mubr.bf16.mxu0 %v5960
        %7576 = vmatmul.mubr.bf16.gmra.mxu0 %v5951
        %v7577 = vpop.f32.mrf.mxu0
        %v7578 = vadd.f32 %v7417, %v7577
        %v7579 = vpop.f32.mrf.mxu0
        %v7580 = vpop.f32.mrf.mxu0
        %v7581 = vadd.f32 %v7420, %v7580
        %v7582 = vpop.f32.mrf.mxu0
        %7583 = vmatprep.mubr.bf16.mxu0 %v6089
        %7584 = vmatmul.mubr.bf16.gmra.mxu0 %v6080
        %v7585 = vpop.f32.mrf.mxu0
        %v7586 = vadd.f32 %v7425, %v7585
        %v7587 = vpop.f32.mrf.mxu0
        %v7588 = vpop.f32.mrf.mxu0
        %v7589 = vadd.f32 %v7428, %v7588
        %v7590 = vpop.f32.mrf.mxu0
        %7591 = vmatprep.mubr.bf16.mxu0 %v6218
        %7592 = vmatmul.mubr.bf16.gmra.mxu0 %v6209
        %v7593 = vpop.f32.mrf.mxu0
        %v7594 = vadd.f32 %v7433, %v7593
        %v7595 = vpop.f32.mrf.mxu0
        %v7596 = vpop.f32.mrf.mxu0
        %v7597 = vadd.f32 %v7436, %v7596
        %v7598 = vpop.f32.mrf.mxu0
        %7599 = vdwg.mxu0
        %7600 = vmatprep.subr.bf16.mxu0 0
        %7601 = vmatpush1.bf16.msra.mxu0 %v6883
        %7602 = vmatprep.subr.bf16.mxu0 0
        %7603 = vmatpush1.bf16.msra.mxu0 %v6882
        %7604 = vmatprep.subr.bf16.mxu0 0
        %7605 = vmatpush1.bf16.msra.mxu0 %v6881
        %7606 = vmatprep.subr.bf16.mxu0 0
        %7607 = vmatpush1.bf16.msra.mxu0 %v6880
        %7608 = vmatprep.subr.bf16.mxu0 0
        %7609 = vmatpush1.bf16.msra.mxu0 %v6879
        %7610 = vmatprep.subr.bf16.mxu0 0
        %7611 = vmatpush1.bf16.msra.mxu0 %v6878
        %7612 = vmatprep.subr.bf16.mxu0 0
        %7613 = vmatpush1.bf16.msra.mxu0 %v6877
        %7614 = vmatprep.subr.bf16.mxu0 0
        %7615 = vmatpush1.bf16.msra.mxu0 %v6876
        %7616 = vmatprep.subr.bf16.mxu0 0
        %7617 = vmatpush2.bf16.msra.mxu0 0
        %7618 = vmatprep.subr.bf16.mxu0 0
        %7619 = vmatpush2.bf16.msra.mxu0 0
        %7620 = vmatprep.subr.bf16.mxu0 0
        %7621 = vmatpush2.bf16.msra.mxu0 0
        %7622 = vmatprep.subr.bf16.mxu0 0
        %7623 = vmatpush2.bf16.msra.mxu0 0
        %7624 = vmatprep.subr.bf16.mxu0 0
        %7625 = vmatpush2.bf16.msra.mxu0 0
        %7626 = vmatprep.subr.bf16.mxu0 0
        %7627 = vmatpush2.bf16.msra.mxu0 0
        %7628 = vmatprep.subr.bf16.mxu0 0
        %7629 = vmatpush2.bf16.msra.mxu0 0
        %7630 = vmatprep.subr.bf16.mxu0 0
        %7631 = vmatpush2.bf16.msra.mxu0 0
        %7632 = vmatprep.mubr.bf16.mxu0 0
        %7633 = vmatmul.mubr.bf16.gmra.mxu0 %v4300
        %v7634 = vpop.f32.mrf.mxu0
        %v7635 = vadd.f32 %v7474, %v7634
        %v7636 = vpop.f32.mrf.mxu0
        %v7637 = vpop.f32.mrf.mxu0
        %v7638 = vadd.f32 %v7477, %v7637
        %v7639 = vpop.f32.mrf.mxu0
        %7640 = vmatprep.mubr.bf16.mxu0 0
        %7641 = vmatmul.mubr.bf16.gmra.mxu0 %v4429
        %v7642 = vpop.f32.mrf.mxu0
        %v7643 = vadd.f32 %v7482, %v7642
        %v7644 = vpop.f32.mrf.mxu0
        %v7645 = vpop.f32.mrf.mxu0
        %v7646 = vadd.f32 %v7485, %v7645
        %v7647 = vpop.f32.mrf.mxu0
        %7648 = vmatprep.mubr.bf16.mxu0 0
        %7649 = vmatmul.mubr.bf16.gmra.mxu0 %v4558
        %v7650 = vpop.f32.mrf.mxu0
        %v7651 = vadd.f32 %v7490, %v7650
        %v7652 = vpop.f32.mrf.mxu0
        %v7653 = vpop.f32.mrf.mxu0
        %v7654 = vadd.f32 %v7493, %v7653
        %v7655 = vpop.f32.mrf.mxu0
        %7656 = vmatprep.mubr.bf16.mxu0 0
        %7657 = vmatmul.mubr.bf16.gmra.mxu0 %v4687
        %v7658 = vpop.f32.mrf.mxu0
        %v7659 = vadd.f32 %v7498, %v7658
        %v7660 = vpop.f32.mrf.mxu0
        %v7661 = vpop.f32.mrf.mxu0
        %v7662 = vadd.f32 %v7501, %v7661
        %v7663 = vpop.f32.mrf.mxu0
        %7664 = vmatprep.mubr.bf16.mxu0 0
        %7665 = vmatmul.mubr.bf16.gmra.mxu0 %v4816
        %v7666 = vpop.f32.mrf.mxu0
        %v7667 = vadd.f32 %v7506, %v7666
        %v7668 = vpop.f32.mrf.mxu0
        %v7669 = vpop.f32.mrf.mxu0
        %v7670 = vadd.f32 %v7509, %v7669
        %v7671 = vpop.f32.mrf.mxu0
        %7672 = vmatprep.mubr.bf16.mxu0 0
        %7673 = vmatmul.mubr.bf16.gmra.mxu0 %v4945
        %v7674 = vpop.f32.mrf.mxu0
        %v7675 = vadd.f32 %v7514, %v7674
        %v7676 = vpop.f32.mrf.mxu0
        %v7677 = vpop.f32.mrf.mxu0
        %v7678 = vadd.f32 %v7517, %v7677
        %v7679 = vpop.f32.mrf.mxu0
        %7680 = vmatprep.mubr.bf16.mxu0 0
        %7681 = vmatmul.mubr.bf16.gmra.mxu0 %v5074
        %v7682 = vpop.f32.mrf.mxu0
        %v7683 = vadd.f32 %v7522, %v7682
        %v7684 = vpop.f32.mrf.mxu0
        %v7685 = vpop.f32.mrf.mxu0
        %v7686 = vadd.f32 %v7525, %v7685
        %v7687 = vpop.f32.mrf.mxu0
        %7688 = vmatprep.mubr.bf16.mxu0 0
        %7689 = vmatmul.mubr.bf16.gmra.mxu0 %v5203
        %v7690 = vpop.f32.mrf.mxu0
        %v7691 = vadd.f32 %v7530, %v7690
        %v7692 = vpop.f32.mrf.mxu0
        %v7693 = vpop.f32.mrf.mxu0
        %v7694 = vadd.f32 %v7533, %v7693
        %v7695 = vpop.f32.mrf.mxu0
        %7696 = vmatprep.mubr.bf16.mxu0 0
        %7697 = vmatmul.mubr.bf16.gmra.mxu0 %v5332
        %v7698 = vpop.f32.mrf.mxu0
        %v7699 = vadd.f32 %v7538, %v7698
        %v7700 = vpop.f32.mrf.mxu0
        %v7701 = vpop.f32.mrf.mxu0
        %v7702 = vadd.f32 %v7541, %v7701
        %v7703 = vpop.f32.mrf.mxu0
        %7704 = vmatprep.mubr.bf16.mxu0 0
        %7705 = vmatmul.mubr.bf16.gmra.mxu0 %v5461
        %v7706 = vpop.f32.mrf.mxu0
        %v7707 = vadd.f32 %v7546, %v7706
        %v7708 = vpop.f32.mrf.mxu0
        %v7709 = vpop.f32.mrf.mxu0
        %v7710 = vadd.f32 %v7549, %v7709
        %v7711 = vpop.f32.mrf.mxu0
        %7712 = vmatprep.mubr.bf16.mxu0 0
        %7713 = vmatmul.mubr.bf16.gmra.mxu0 %v5590
        %v7714 = vpop.f32.mrf.mxu0
        %v7715 = vadd.f32 %v7554, %v7714
        %v7716 = vpop.f32.mrf.mxu0
        %v7717 = vpop.f32.mrf.mxu0
        %v7718 = vadd.f32 %v7557, %v7717
        %v7719 = vpop.f32.mrf.mxu0
        %7720 = vmatprep.mubr.bf16.mxu0 0
        %7721 = vmatmul.mubr.bf16.gmra.mxu0 %v5719
        %v7722 = vpop.f32.mrf.mxu0
        %v7723 = vadd.f32 %v7562, %v7722
        %v7724 = vpop.f32.mrf.mxu0
        %v7725 = vpop.f32.mrf.mxu0
        %v7726 = vadd.f32 %v7565, %v7725
        %v7727 = vpop.f32.mrf.mxu0
        %7728 = vmatprep.mubr.bf16.mxu0 0
        %7729 = vmatmul.mubr.bf16.gmra.mxu0 %v5848
        %v7730 = vpop.f32.mrf.mxu0
        %v7731 = vadd.f32 %v7570, %v7730
        %v7732 = vpop.f32.mrf.mxu0
        %v7733 = vpop.f32.mrf.mxu0
        %v7734 = vadd.f32 %v7573, %v7733
        %v7735 = vpop.f32.mrf.mxu0
        %7736 = vmatprep.mubr.bf16.mxu0 0
        %7737 = vmatmul.mubr.bf16.gmra.mxu0 %v5977
        %v7738 = vpop.f32.mrf.mxu0
        %v7739 = vadd.f32 %v7578, %v7738
        %v7740 = vpop.f32.mrf.mxu0
        %v7741 = vpop.f32.mrf.mxu0
        %v7742 = vadd.f32 %v7581, %v7741
        %v7743 = vpop.f32.mrf.mxu0
        %7744 = vmatprep.mubr.bf16.mxu0 0
        %7745 = vmatmul.mubr.bf16.gmra.mxu0 %v6106
        %v7746 = vpop.f32.mrf.mxu0
        %v7747 = vadd.f32 %v7586, %v7746
        %v7748 = vpop.f32.mrf.mxu0
        %v7749 = vpop.f32.mrf.mxu0
        %v7750 = vadd.f32 %v7589, %v7749
        %v7751 = vpop.f32.mrf.mxu0
        %7752 = vmatprep.mubr.bf16.mxu0 0
        %7753 = vmatmul.mubr.bf16.gmra.mxu0 %v6235
        %v7754 = vpop.f32.mrf.mxu0
        %v7755 = vadd.f32 %v7594, %v7754
        %v7756 = vpop.f32.mrf.mxu0
        %v7757 = vpop.f32.mrf.mxu0
        %v7758 = vadd.f32 %v7597, %v7757
        %v7759 = vpop.f32.mrf.mxu0
        %7760 = vdwg.mxu0
        %v7761 = vld [vmem:[%s5] sm:$0x1]
        %v7763 = vlaneseq
        %v7764 = vshrl.u32 %v7763, 7
        %v7765 = vsub.s32 0, %v7764
        %v7766 = vrot.slane %v7761, %v7765
        %v7768 = vmul.f32 %v7635, %v7766
        %v7769 = vmul.f32 %v7638, %v7766
        %v7770 = vmul.f32 %v7643, %v7766
        %v7771 = vmul.f32 %v7646, %v7766
        %v7772 = vmul.f32 %v7651, %v7766
        %v7773 = vmul.f32 %v7654, %v7766
        %v7774 = vmul.f32 %v7659, %v7766
        %v7775 = vmul.f32 %v7662, %v7766
        %v7776 = vmul.f32 %v7667, %v7766
        %v7777 = vmul.f32 %v7670, %v7766
        %v7778 = vmul.f32 %v7675, %v7766
        %v7779 = vmul.f32 %v7678, %v7766
        %v7780 = vmul.f32 %v7683, %v7766
        %v7781 = vmul.f32 %v7686, %v7766
        %v7782 = vmul.f32 %v7691, %v7766
        %v7783 = vmul.f32 %v7694, %v7766
        %v7784 = vmul.f32 %v7699, %v7766
        %v7785 = vmul.f32 %v7702, %v7766
        %v7786 = vmul.f32 %v7707, %v7766
        %v7787 = vmul.f32 %v7710, %v7766
        %v7788 = vmul.f32 %v7715, %v7766
        %v7789 = vmul.f32 %v7718, %v7766
        %v7790 = vmul.f32 %v7723, %v7766
        %v7791 = vmul.f32 %v7726, %v7766
        %v7792 = vmul.f32 %v7731, %v7766
        %v7793 = vmul.f32 %v7734, %v7766
        %v7794 = vmul.f32 %v7739, %v7766
        %v7795 = vmul.f32 %v7742, %v7766
        %v7796 = vmul.f32 %v7747, %v7766
        %v7797 = vmul.f32 %v7750, %v7766
        %v7798 = vmul.f32 %v7755, %v7766
        %v7799 = vmul.f32 %v7758, %v7766
        %v7800 = vld [vmem:[%s6] sm:$0x1]
        %v7802 = vlaneseq
        %v7803 = vshrl.u32 %v7802, 7
        %v7804 = vsub.s32 0, %v7803
        %v7805 = vrot.slane %v7800, %v7804
        %v7807 = vadd.f32 %v7768, %v7805
        %v7808 = vadd.f32 %v7769, %v7805
        %v7809 = vadd.f32 %v7770, %v7805
        %v7810 = vadd.f32 %v7771, %v7805
        %v7811 = vadd.f32 %v7772, %v7805
        %v7812 = vadd.f32 %v7773, %v7805
        %v7813 = vadd.f32 %v7774, %v7805
        %v7814 = vadd.f32 %v7775, %v7805
        %v7815 = vadd.f32 %v7776, %v7805
        %v7816 = vadd.f32 %v7777, %v7805
        %v7817 = vadd.f32 %v7778, %v7805
        %v7818 = vadd.f32 %v7779, %v7805
        %v7819 = vadd.f32 %v7780, %v7805
        %v7820 = vadd.f32 %v7781, %v7805
        %v7821 = vadd.f32 %v7782, %v7805
        %v7822 = vadd.f32 %v7783, %v7805
        %v7823 = vadd.f32 %v7784, %v7805
        %v7824 = vadd.f32 %v7785, %v7805
        %v7825 = vadd.f32 %v7786, %v7805
        %v7826 = vadd.f32 %v7787, %v7805
        %v7827 = vadd.f32 %v7788, %v7805
        %v7828 = vadd.f32 %v7789, %v7805
        %v7829 = vadd.f32 %v7790, %v7805
        %v7830 = vadd.f32 %v7791, %v7805
        %v7831 = vadd.f32 %v7792, %v7805
        %v7832 = vadd.f32 %v7793, %v7805
        %v7833 = vadd.f32 %v7794, %v7805
        %v7834 = vadd.f32 %v7795, %v7805
        %v7835 = vadd.f32 %v7796, %v7805
        %v7836 = vadd.f32 %v7797, %v7805
        %v7837 = vadd.f32 %v7798, %v7805
        %v7838 = vadd.f32 %v7799, %v7805
        %v7839 = vmax.f32 %v7807, 0.0
        %v7840 = vmax.f32 %v7808, 0.0
        %v7841 = vmax.f32 %v7809, 0.0
        %v7842 = vmax.f32 %v7810, 0.0
        %v7843 = vmax.f32 %v7811, 0.0
        %v7844 = vmax.f32 %v7812, 0.0
        %v7845 = vmax.f32 %v7813, 0.0
        %v7846 = vmax.f32 %v7814, 0.0
        %v7847 = vmax.f32 %v7815, 0.0
        %v7848 = vmax.f32 %v7816, 0.0
        %v7849 = vmax.f32 %v7817, 0.0
        %v7850 = vmax.f32 %v7818, 0.0
        %v7851 = vmax.f32 %v7819, 0.0
        %v7852 = vmax.f32 %v7820, 0.0
        %v7853 = vmax.f32 %v7821, 0.0
        %v7854 = vmax.f32 %v7822, 0.0
        %v7855 = vmax.f32 %v7823, 0.0
        %v7856 = vmax.f32 %v7824, 0.0
        %v7857 = vmax.f32 %v7825, 0.0
        %v7858 = vmax.f32 %v7826, 0.0
        %v7859 = vmax.f32 %v7827, 0.0
        %v7860 = vmax.f32 %v7828, 0.0
        %v7861 = vmax.f32 %v7829, 0.0
        %v7862 = vmax.f32 %v7830, 0.0
        %v7863 = vmax.f32 %v7831, 0.0
        %v7864 = vmax.f32 %v7832, 0.0
        %v7865 = vmax.f32 %v7833, 0.0
        %v7866 = vmax.f32 %v7834, 0.0
        %v7867 = vmax.f32 %v7835, 0.0
        %v7868 = vmax.f32 %v7836, 0.0
        %v7869 = vmax.f32 %v7837, 0.0
        %v7870 = vmax.f32 %v7838, 0.0
        %v7871 = vpack.c.bf16 %v7840, %v7839
        %v7872 = vpack.c.bf16 %v7842, %v7841
        %v7873 = vpack.c.bf16 %v7844, %v7843
        %v7874 = vpack.c.bf16 %v7846, %v7845
        %v7875 = vpack.c.bf16 %v7848, %v7847
        %v7876 = vpack.c.bf16 %v7850, %v7849
        %v7877 = vpack.c.bf16 %v7852, %v7851
        %v7878 = vpack.c.bf16 %v7854, %v7853
        %v7879 = vpack.c.bf16 %v7856, %v7855
        %v7880 = vpack.c.bf16 %v7858, %v7857
        %v7881 = vpack.c.bf16 %v7860, %v7859
        %v7882 = vpack.c.bf16 %v7862, %v7861
        %v7883 = vpack.c.bf16 %v7864, %v7863
        %v7884 = vpack.c.bf16 %v7866, %v7865
        %v7885 = vpack.c.bf16 %v7868, %v7867
        %v7886 = vpack.c.bf16 %v7870, %v7869
        %v7903 = vunpack.c.l.b16 %v7871
        %v7904 = vunpack.c.h.b16 %v7871
        %v7905 = vunpack.c.l.b16 %v7872
        %v7906 = vunpack.c.h.b16 %v7872
        %v7907 = vunpack.c.l.b16 %v7873
        %v7908 = vunpack.c.h.b16 %v7873
        %v7909 = vunpack.c.l.b16 %v7874
        %v7910 = vunpack.c.h.b16 %v7874
        %v7911 = vunpack.c.l.b16 %v7875
        %v7912 = vunpack.c.h.b16 %v7875
        %v7913 = vunpack.c.l.b16 %v7876
        %v7914 = vunpack.c.h.b16 %v7876
        %v7915 = vunpack.c.l.b16 %v7877
        %v7916 = vunpack.c.h.b16 %v7877
        %v7917 = vunpack.c.l.b16 %v7878
        %v7918 = vunpack.c.h.b16 %v7878
        %v7919 = vunpack.c.l.b16 %v7879
        %v7920 = vunpack.c.h.b16 %v7879
        %v7921 = vunpack.c.l.b16 %v7880
        %v7922 = vunpack.c.h.b16 %v7880
        %v7923 = vunpack.c.l.b16 %v7881
        %v7924 = vunpack.c.h.b16 %v7881
        %v7925 = vunpack.c.l.b16 %v7882
        %v7926 = vunpack.c.h.b16 %v7882
        %v7927 = vunpack.c.l.b16 %v7883
        %v7928 = vunpack.c.h.b16 %v7883
        %v7929 = vunpack.c.l.b16 %v7884
        %v7930 = vunpack.c.h.b16 %v7884
        %v7931 = vunpack.c.l.b16 %v7885
        %v7932 = vunpack.c.h.b16 %v7885
        %v7933 = vunpack.c.l.b16 %v7886
        %v7934 = vunpack.c.h.b16 %v7886
        %v7935 = vpack.c.b16 %v7903, %v7903
        %v7936 = vpack.c.b16 %v7904, %v7904
        %v7937 = vpack.c.b16 %v7905, %v7905
        %v7938 = vpack.c.b16 %v7906, %v7906
        %v7939 = vpack.c.b16 %v7907, %v7907
        %v7940 = vpack.c.b16 %v7908, %v7908
        %v7941 = vpack.c.b16 %v7909, %v7909
        %v7942 = vpack.c.b16 %v7910, %v7910
        %v7943 = vpack.c.b16 %v7911, %v7911
        %v7944 = vpack.c.b16 %v7912, %v7912
        %v7945 = vpack.c.b16 %v7913, %v7913
        %v7946 = vpack.c.b16 %v7914, %v7914
        %v7947 = vpack.c.b16 %v7915, %v7915
        %v7948 = vpack.c.b16 %v7916, %v7916
        %v7949 = vpack.c.b16 %v7917, %v7917
        %v7950 = vpack.c.b16 %v7918, %v7918
        %v7951 = vpack.c.b16 %v7919, %v7919
        %v7952 = vpack.c.b16 %v7920, %v7920
        %v7953 = vpack.c.b16 %v7921, %v7921
        %v7954 = vpack.c.b16 %v7922, %v7922
        %v7955 = vpack.c.b16 %v7923, %v7923
        %v7956 = vpack.c.b16 %v7924, %v7924
        %v7957 = vpack.c.b16 %v7925, %v7925
        %v7958 = vpack.c.b16 %v7926, %v7926
        %v7959 = vpack.c.b16 %v7927, %v7927
        %v7960 = vpack.c.b16 %v7928, %v7928
        %v7961 = vpack.c.b16 %v7929, %v7929
        %v7962 = vpack.c.b16 %v7930, %v7930
        %v7963 = vpack.c.b16 %v7931, %v7931
        %v7964 = vpack.c.b16 %v7932, %v7932
        %v7965 = vpack.c.b16 %v7933, %v7933
        %v7966 = vpack.c.b16 %v7934, %v7934
        %7999 = vst [vmem:[%s286] sm:$0xf] %v7935
        %8000 = vst [vmem:[%s286 + $0x4] sm:$0xf] %v7936
        %8001 = vst [vmem:[%s286 + $0x8] sm:$0xf] %v7937
        %8002 = vst [vmem:[%s286 + $0xc] sm:$0xf] %v7938
        %8003 = vst [vmem:[%s286 + $0x10] sm:$0xf] %v7939
        %8004 = vst [vmem:[%s286 + $0x14] sm:$0xf] %v7940
        %8005 = vst [vmem:[%s286 + $0x18] sm:$0xf] %v7941
        %8006 = vst [vmem:[%s286 + $0x1c] sm:$0xf] %v7942
        %8007 = vst [vmem:[%s286 + $0x20] sm:$0xf] %v7943
        %8008 = vst [vmem:[%s286 + $0x24] sm:$0xf] %v7944
        %8009 = vst [vmem:[%s286 + $0x28] sm:$0xf] %v7945
        %8010 = vst [vmem:[%s286 + $0x2c] sm:$0xf] %v7946
        %8011 = vst [vmem:[%s286 + $0x30] sm:$0xf] %v7947
        %8012 = vst [vmem:[%s286 + $0x34] sm:$0xf] %v7948
        %8013 = vst [vmem:[%s286 + $0x38] sm:$0xf] %v7949
        %8014 = vst [vmem:[%s286 + $0x3c] sm:$0xf] %v7950
        %8015 = vst [vmem:[%s286 + $0x40] sm:$0xf] %v7951
        %8016 = vst [vmem:[%s286 + $0x44] sm:$0xf] %v7952
        %8017 = vst [vmem:[%s286 + $0x48] sm:$0xf] %v7953
        %8018 = vst [vmem:[%s286 + $0x4c] sm:$0xf] %v7954
        %8019 = vst [vmem:[%s286 + $0x50] sm:$0xf] %v7955
        %8020 = vst [vmem:[%s286 + $0x54] sm:$0xf] %v7956
        %8021 = vst [vmem:[%s286 + $0x58] sm:$0xf] %v7957
        %8022 = vst [vmem:[%s286 + $0x5c] sm:$0xf] %v7958
        %8023 = vst [vmem:[%s286 + $0x60] sm:$0xf] %v7959
        %8024 = vst [vmem:[%s286 + $0x64] sm:$0xf] %v7960
        %8025 = vst [vmem:[%s286 + $0x68] sm:$0xf] %v7961
        %8026 = vst [vmem:[%s286 + $0x6c] sm:$0xf] %v7962
        %8027 = vst [vmem:[%s286 + $0x70] sm:$0xf] %v7963
        %8028 = vst [vmem:[%s286 + $0x74] sm:$0xf] %v7964
        %8029 = vst [vmem:[%s286 + $0x78] sm:$0xf] %v7965
        %8030 = vst [vmem:[%s286 + $0x7c] sm:$0xf] %v7966
        %s8031 = sand.u32 %s182, 1
        %s8032 = scalar_lea.sflag [#allocation5], %s8031
        %s8033 = sand.u32 %s182, 1
        %s8034 = smul.addr %s8033, 128
        %s8035 = scalar_lea.vmem [#allocation6], %s8034
        // Predicated region
        $region53: #{tpu_custom_call.1} parent=47 // pred_check
          %p8036 = pneg %p192
        $region54: #{tpu_custom_call.1} parent=47 // pred_check_branch
          %8038 = sbr.rel (%p8036) target = $region56
        $region55: #{tpu_custom_call.1} parent=47 // pred_region
          %s8040 = ssub.s32 2048, 2048
          %8041 = vsyncadd %s8032, %s8040
          %s8042 = smul.addr %s22, 32
          %s8043 = smul.addr %s8042, 64
          %s8044 = scalar_lea.hbm %s7, %s8043
          %s8045 = sshll.u32 %s8035, 4
          %s8046 = int_to_ptr.vmem [resolvable:$true] %s8045
          %8051 = dma.vmem_to_hbm [thread:$0]  %s8046, 2048, %s8044, %s8032, 64, 64, 4
        $region56: #{tpu_custom_call.1} parent=47 // pred_fallthru
          _
      $region48: #{tpu_custom_call.1} parent=5 // pred_fallthru
        _
      %p8052 = scmp.le.s32.totalorder 2, %s17
      // Predicated region
      $region57: #{tpu_custom_call.1} parent=5 // pred_check
        %p8053 = pneg %p8052
      $region58: #{tpu_custom_call.1} parent=5 // pred_check_branch
        %8055 = sbr.rel (%p8053) target = $region60
      $region59: #{tpu_custom_call.1} parent=5 // pred_region
        %s8056 = ssub.s32 %s17, 2
        // Predicated region
        $region61: #{tpu_custom_call.1} parent=59 // pred_check
          %p8057 = pneg %p198
        $region62: #{tpu_custom_call.1} parent=59 // pred_check_branch
          %8059 = sbr.rel (%p8057) target = $region64
        $region63: #{tpu_custom_call.1} parent=59 // pred_region
          %s8060 = sand.u32 %s183, 1
          %s8061 = scalar_lea.sflag [#allocation5], %s8060
          %s8062 = sand.u32 %s183, 1
          %s8063 = smul.addr %s8062, 128
          %s8064 = scalar_lea.vmem [#allocation6], %s8063
          %8065 = dma.done %s8061, 2048
        $region64: #{tpu_custom_call.1} parent=59 // pred_fallthru
          _
      $region60: #{tpu_custom_call.1} parent=5 // pred_fallthru
        _
    $region6: #{tpu_custom_call.1} parent=1 // loop_footer
      %s21 = sadd.s32 1, %s17
    $region7: #{tpu_custom_call.1} parent=1 // loop_footer_branch
      %16 = sbr.rel target = $region3
    $region8: #{tpu_custom_call.1} parent=1 // loop_exit
      _
    %8066 = vsyncpa [#allocation4], 1
    %s8067 = scalar_lea.sflag [#allocation4], 1
    %8068 = vsyncpa %s8067, 1
    %8069 = vsyncpa [#allocation5], 1
    %s8070 = scalar_lea.sflag [#allocation5], 1
    %8071 = vsyncpa %s8070, 1

</llo_original>
